<compile_context>
chip_gen: v7x
topology: tpu7x:2x2x1
jax: 0.10.0
libtpu: 0.0.40
codegen_flags: <defaults>
</compile_context>

<pallas_src>
import jax
import jax.numpy as jnp
from jax.experimental import pallas as pl
from jax.experimental.pallas import tpu as pltpu

MNIST_DIM = 784               # 28*28
HIDDEN_DIM = MNIST_DIM // 8   # 98
OUTPUT_DIM = 10               # number of MNIST classes
HIDDEN_PAD = 128              # lane-aligned hidden width
OUT_PAD = 16                  # small padded output width (== full-dim block)
NEG_BIG = -1e30               # bias for padded output classes -> softmax prob 0


def _round_up(n, m):
    return (n + m - 1) // m * m


def _has_two_tensorcores():
    """True only for chips with 2 TensorCores per chip (v7x); v5e/v6e have 1."""
    try:
        kind = jax.devices()[0].device_kind.lower()
    except Exception:
        return False
    return "v7" in kind or "7x" in kind


def mlp_kernel(x_ref, w1_ref, b1_ref, w2_ref, b2_ref, o_ref):
    """Fused: Linear -> ReLU -> (dropout=identity) -> Linear -> Softmax."""
    # Cast to bf16 in VMEM (no extra HBM pass); MXU accumulates in f32.
    x = x_ref[...].astype(jnp.bfloat16)                  # (tb, 784)
    h = jnp.dot(x, w1_ref[...], preferred_element_type=jnp.float32)
    h = jnp.maximum(h + b1_ref[...], 0.0)                # (tb, 128) f32
    # TODO(synk): nn.Dropout(p=0.5) is identity in eval mode; training-mode
    # stochastic dropout (pltpu.prng_random_bits mask) not implemented here.
    # Second GEMM in bf16 (f32 accumulation); f32 bias add keeps the -1e30
    # padding bias exact so padded classes get exactly zero probability.
    logits = jnp.dot(h.astype(jnp.bfloat16), w2_ref[...],
                     preferred_element_type=jnp.float32)
    logits = logits + b2_ref[...]                        # (tb, 16) f32
    # numerically-stable softmax over last dim; reciprocal on the EUP slot
    m = jnp.max(logits, axis=-1, keepdims=True)
    e = jnp.exp(logits - m)
    denom = jnp.sum(e, axis=-1, keepdims=True)
    o_ref[...] = e * pl.reciprocal(denom, approx=True)


def pad_params(w1, b1, w2, b2):
    """Pad hidden 98->128 and output 10->16, numerically exact.

    Zero W1 columns / b1 entries give relu(0)=0, zero W2 rows contribute
    nothing, and padded output classes get a -1e30 bias -> softmax prob 0.
    """
    D, H = w1.shape
    O = w2.shape[1]
    w1p = jnp.zeros((D, HIDDEN_PAD), jnp.float32).at[:, :H].set(w1)
    w1p = w1p.astype(jnp.bfloat16)                       # MXU-native, f32 accum
    b1p = jnp.zeros((1, HIDDEN_PAD), jnp.float32).at[:, :H].set(b1.reshape(1, H))
    w2p = jnp.zeros((HIDDEN_PAD, OUT_PAD), jnp.float32).at[:H, :O].set(w2)
    w2p = w2p.astype(jnp.bfloat16)                       # bf16 2nd GEMM, f32 accum
    b2p = jnp.full((1, OUT_PAD), NEG_BIG, jnp.float32).at[:, :O].set(
        b2.reshape(1, O))
    return w1p, b1p, w2p, b2p


def classifier_forward(x, w1p, b1p, w2p, b2p, *, tb=512):
    """x: (B, 784) float (any float dtype). Returns softmax probs (B, 10) f32."""
    B, D = x.shape
    assert D == MNIST_DIM

    # Batch tile: multiple of 8 (f32 sublane), capped at 2048 so the
    # double-buffered X tile stays well inside every generation's scoped VMEM.
    tb = min(_round_up(max(tb, 8), 8), 2048)
    if B <= tb:
        # One tile covers the whole batch (block dim == full dim is always
        # legal).  Split it into two even steps only when the chip has two
        # TensorCores (v7x); on single-TC v5e/v6e the split is pure overhead.
        tb = B
        if _has_two_tensorcores() and B >= 16 and B % 16 == 0:
            tb = B // 2
    grid_len = pl.cdiv(B, tb)   # partial last block is fine: garbage rows are
                                # row-confined and their writes are discarded.

    out = pl.pallas_call(
        mlp_kernel,
        out_shape=jax.ShapeDtypeStruct((B, OUT_PAD), jnp.float32),
        grid_spec=pltpu.PrefetchScalarGridSpec(
            num_scalar_prefetch=0,
            grid=(grid_len,),
            in_specs=[
                pl.BlockSpec((tb, D), lambda i: (i, 0)),                 # x tile
                pl.BlockSpec((D, HIDDEN_PAD), lambda i: (0, 0)),         # W1 resident
                pl.BlockSpec((1, HIDDEN_PAD), lambda i: (0, 0)),         # b1
                pl.BlockSpec((HIDDEN_PAD, OUT_PAD), lambda i: (0, 0)),   # W2 resident
                pl.BlockSpec((1, OUT_PAD), lambda i: (0, 0)),            # b2
            ],
            out_specs=pl.BlockSpec((tb, OUT_PAD), lambda i: (i, 0)),
        ),
        compiler_params=pltpu.CompilerParams(
            dimension_semantics=("parallel",),
            vmem_limit_bytes=32 * 1024 * 1024,
        ),
    )(x, w1p, b1p, w2p, b2p)

    return out[:, :OUTPUT_DIM]


def init_params(key):
    """Deterministic init mimicking torch.nn.Linear's uniform(-1/sqrt(fan_in))."""
    k1, k2, k3, k4 = jax.random.split(key, 4)
    bound1 = 1.0 / jnp.sqrt(float(MNIST_DIM))
    bound2 = 1.0 / jnp.sqrt(float(HIDDEN_DIM))
    # stored as (in, out): equivalent to torch weight (out, in) transposed
    w1 = jax.random.uniform(k1, (MNIST_DIM, HIDDEN_DIM), jnp.float32,
                            minval=-bound1, maxval=bound1)
    b1 = jax.random.uniform(k2, (1, HIDDEN_DIM), jnp.float32,
                            minval=-bound1, maxval=bound1)
    w2 = jax.random.uniform(k3, (HIDDEN_DIM, OUTPUT_DIM), jnp.float32,
                            minval=-bound2, maxval=bound2)
    b2 = jax.random.uniform(k4, (1, OUTPUT_DIM), jnp.float32,
                            minval=-bound2, maxval=bound2)
    return w1, b1, w2, b2


if __name__ == "__main__":
    key = jax.random.PRNGKey(0)
    kx, kp = jax.random.split(key)

    B = 512
    x = jax.random.uniform(kx, (B, MNIST_DIM), jnp.float32)  # MNIST pixels in [0,1)
    w1, b1, w2, b2 = init_params(kp)
    w1p, b1p, w2p, b2p = pad_params(w1, b1, w2, b2)

    out = jax.block_until_ready(classifier_forward(x, w1p, b1p, w2p, b2p))

    # sanity: shape (B, 10), softmax rows sum to ~1 (approx reciprocal in-kernel)
    assert out.shape == (B, OUTPUT_DIM)
    assert jnp.allclose(jnp.sum(out, axis=-1), 1.0, atol=1e-2)

    # cross-check against plain-f32 JAX reference (bf16 GEMMs -> loose tolerance)
    ref_h = jnp.maximum(x @ w1 + b1, 0.0)
    ref = jax.nn.softmax(ref_h @ w2 + b2, axis=-1)
    assert jnp.allclose(out, ref, atol=2e-2), float(jnp.max(jnp.abs(out - ref)))

    # small batch: single full-extent block, no wrapper-side padding
    out_small = jax.block_until_ready(
        classifier_forward(x[:100], w1p, b1p, w2p, b2p))
    assert out_small.shape == (100, OUTPUT_DIM)
    assert jnp.allclose(out_small, ref[:100], atol=2e-2)

    # multi-step grid with a ragged tail (partial last block, writes discarded)
    out_tail = jax.block_until_ready(
        classifier_forward(x[:300], w1p, b1p, w2p, b2p, tb=256))
    assert out_tail.shape == (300, OUTPUT_DIM)
    assert jnp.allclose(out_tail, ref[:300], atol=2e-2)

    print("KERNEL_OK")
</pallas_src>

<mosaic_0001>
module attributes {stable_mosaic.version = 11 : i64} {
  func.func @mlp_kernel(%arg0: i32, %arg1: memref<512x784xf32, #tpu.memory_space<vmem>>, %arg2: memref<784x128xbf16, #tpu.memory_space<vmem>>, %arg3: memref<1x128xf32, #tpu.memory_space<vmem>>, %arg4: memref<128x16xbf16, #tpu.memory_space<vmem>>, %arg5: memref<1x16xf32, #tpu.memory_space<vmem>>, %arg6: memref<512x16xf32, #tpu.memory_space<vmem>>) attributes {dimension_semantics = [#tpu.dimension_semantics<parallel>], iteration_bounds = array<i64: 1>, scalar_prefetch = 0 : i64, scratch_operands = 0 : i64, tpu.core_type = #tpu.core_type<tc>, window_params = [{transform_indices = @transform_0, window_bounds = array<i64: 512, 784>}, {pipeline_mode = #tpu.pipeline_mode<synchronous>, transform_indices = @transform_1, window_bounds = array<i64: 784, 128>}, {pipeline_mode = #tpu.pipeline_mode<synchronous>, transform_indices = @transform_2, window_bounds = array<i64: 1, 128>}, {pipeline_mode = #tpu.pipeline_mode<synchronous>, transform_indices = @transform_3, window_bounds = array<i64: 128, 16>}, {pipeline_mode = #tpu.pipeline_mode<synchronous>, transform_indices = @transform_4, window_bounds = array<i64: 1, 16>}, {transform_indices = @transform_5, window_bounds = array<i64: 512, 16>}]} {
    %c0 = arith.constant 0 : index
    %c0_0 = arith.constant 0 : index
    %0 = vector.load %arg1[%c0, %c0_0] : memref<512x784xf32, #tpu.memory_space<vmem>>, vector<512x784xf32>
    %1 = arith.truncf %0 : vector<512x784xf32> to vector<512x784xbf16>
    %c0_1 = arith.constant 0 : index
    %c0_2 = arith.constant 0 : index
    %2 = vector.load %arg2[%c0_1, %c0_2] : memref<784x128xbf16, #tpu.memory_space<vmem>>, vector<784x128xbf16>
    %cst = arith.constant dense<0.000000e+00> : vector<512x128xf32>
    %3 = tpu.matmul %1, %2, %cst {dimension_numbers = #tpu.dot_dimension_numbers<[1], [0], [0], [1], [0, 0, 1, 1], [], []>} : vector<512x784xbf16>, vector<784x128xbf16>, vector<512x128xf32> -> vector<512x128xf32>
    %c0_3 = arith.constant 0 : index
    %c0_4 = arith.constant 0 : index
    %4 = vector.load %arg3[%c0_3, %c0_4] : memref<1x128xf32, #tpu.memory_space<vmem>>, vector<1x128xf32>
    %5 = vector.broadcast %4 : vector<1x128xf32> to vector<512x128xf32>
    %6 = arith.addf %3, %5 : vector<512x128xf32>
    %cst_5 = arith.constant 0.000000e+00 : f32
    %7 = vector.broadcast %cst_5 : f32 to vector<512x128xf32>
    %8 = arith.maximumf %6, %7 : vector<512x128xf32>
    %9 = arith.truncf %8 : vector<512x128xf32> to vector<512x128xbf16>
    %c0_6 = arith.constant 0 : index
    %c0_7 = arith.constant 0 : index
    %10 = vector.load %arg4[%c0_6, %c0_7] : memref<128x16xbf16, #tpu.memory_space<vmem>>, vector<128x16xbf16>
    %cst_8 = arith.constant dense<0.000000e+00> : vector<512x16xf32>
    %11 = tpu.matmul %9, %10, %cst_8 {dimension_numbers = #tpu.dot_dimension_numbers<[1], [0], [0], [1], [0, 0, 1, 1], [], []>} : vector<512x128xbf16>, vector<128x16xbf16>, vector<512x16xf32> -> vector<512x16xf32>
    %c0_9 = arith.constant 0 : index
    %c0_10 = arith.constant 0 : index
    %12 = vector.load %arg5[%c0_9, %c0_10] : memref<1x16xf32, #tpu.memory_space<vmem>>, vector<1x16xf32>
    %13 = vector.broadcast %12 : vector<1x16xf32> to vector<512x16xf32>
    %14 = arith.addf %11, %13 : vector<512x16xf32>
    %cst_11 = arith.constant dense<0xFF800000> : vector<512xf32>
    %15 = vector.multi_reduction <maximumf>, %14, %cst_11 [1] : vector<512x16xf32> to vector<512xf32>
    %16 = vector.shape_cast %15 : vector<512xf32> to vector<512x1xf32>
    %17 = vector.broadcast %16 : vector<512x1xf32> to vector<512x16xf32>
    %18 = arith.subf %14, %17 : vector<512x16xf32>
    %19 = math.exp %18 : vector<512x16xf32>
    %cst_12 = arith.constant dense<0.000000e+00> : vector<512xf32>
    %20 = vector.multi_reduction <add>, %19, %cst_12 [1] : vector<512x16xf32> to vector<512xf32>
    %21 = vector.shape_cast %20 : vector<512xf32> to vector<512x1xf32>
    %22 = tpu.reciprocal %21 {approx = true} : vector<512x1xf32> -> vector<512x1xf32>
    %23 = vector.broadcast %22 : vector<512x1xf32> to vector<512x16xf32>
    %24 = arith.mulf %19, %23 : vector<512x16xf32>
    %c0_13 = arith.constant 0 : index
    %c0_14 = arith.constant 0 : index
    %25 = vector.load %arg6[%c0_13, %c0_14] : memref<512x16xf32, #tpu.memory_space<vmem>>, vector<512x16xf32>
    tpu.vector_store %arg6[%c0_13, %c0_14], %24 {strides = array<i32>} : memref<512x16xf32, #tpu.memory_space<vmem>>, vector<512x16xf32>,
    return
  }
  func.func @transform_0(%arg0: i32) -> (i32, i32) {
    %c0_i32 = arith.constant 0 : i32
    %c0_i32_0 = arith.constant 0 : i32
    return %arg0, %c0_i32 : i32, i32
  }
  func.func @transform_1(%arg0: i32) -> (i32, i32) {
    %c0_i32 = arith.constant 0 : i32
    %c0_i32_0 = arith.constant 0 : i32
    %c0_i32_1 = arith.constant 0 : i32
    return %c0_i32, %c0_i32_0 : i32, i32
  }
  func.func @transform_2(%arg0: i32) -> (i32, i32) {
    %c0_i32 = arith.constant 0 : i32
    %c0_i32_0 = arith.constant 0 : i32
    %c0_i32_1 = arith.constant 0 : i32
    return %c0_i32, %c0_i32_0 : i32, i32
  }
  func.func @transform_3(%arg0: i32) -> (i32, i32) {
    %c0_i32 = arith.constant 0 : i32
    %c0_i32_0 = arith.constant 0 : i32
    %c0_i32_1 = arith.constant 0 : i32
    return %c0_i32, %c0_i32_0 : i32, i32
  }
  func.func @transform_4(%arg0: i32) -> (i32, i32) {
    %c0_i32 = arith.constant 0 : i32
    %c0_i32_0 = arith.constant 0 : i32
    %c0_i32_1 = arith.constant 0 : i32
    return %c0_i32, %c0_i32_0 : i32, i32
  }
  func.func @transform_5(%arg0: i32) -> (i32, i32) {
    %c0_i32 = arith.constant 0 : i32
    %c0_i32_0 = arith.constant 0 : i32
    return %arg0, %c0_i32 : i32, i32
  }
}

</mosaic_0001>

<llo_original>
// kernel: tpu_custom_call.1
$region0: #{tpu_custom_call.1}
  #allocation0 [shape = 'u32[]', space=smem, size = 0x4, offset = 0x4, fixed_abs, tag = 'smem constant byte address 0x4 - core index']
  #allocation1 [shape = 'u32[144,128]{1,0:T(1,128)}', space=vmem, size = 0x12000, scoped, tag = 'internal scratch']
  %s0 = inlined_call_operand.vmem [shape: f32[512,784], index: 0, kind: input, shape index: {}]
  %s1 = inlined_call_operand.vmem [shape: bf16[784,128], index: 1, kind: input, shape index: {}]
  %s2 = inlined_call_operand.vmem [shape: f32[1,128], index: 2, kind: input, shape index: {}]
  %s3 = inlined_call_operand.vmem [shape: bf16[128,16], index: 3, kind: input, shape index: {}]
  %s4 = inlined_call_operand.vmem [shape: f32[1,16], index: 4, kind: input, shape index: {}]
  %s5 = inlined_call_operand.vmem [shape: f32[512,16], index: 5, kind: output, shape index: {}]
  %s6 = sld [smem:[#allocation0]]
  $region30: #{tpu_custom_call.1} parent=0
    _
  %s8 = ssub.s32 1, %s6
  %s9 = scalar_select 0, %s8, %s6
  // Predicated region
  $region2: #{tpu_custom_call.1} parent=0 // pred_check
    _
  $region3: #{tpu_custom_call.1} parent=0 // pred_check_branch
    %11 = sbr.rel (0) target = $region5
  $region4: #{tpu_custom_call.1} parent=0 // pred_region
    _
  $region5: #{tpu_custom_call.1} parent=0 // pred_fallthru
    _
  // Predicated region
  $region6: #{tpu_custom_call.1} parent=0 // pred_check
    _
  $region7: #{tpu_custom_call.1} parent=0 // pred_check_branch
    %13 = sbr.rel (0) target = $region9
  $region8: #{tpu_custom_call.1} parent=0 // pred_region
    _
  $region9: #{tpu_custom_call.1} parent=0 // pred_fallthru
    _
  // Predicated region
  $region10: #{tpu_custom_call.1} parent=0 // pred_check
    _
  $region11: #{tpu_custom_call.1} parent=0 // pred_check_branch
    %15 = sbr.rel (0) target = $region13
  $region12: #{tpu_custom_call.1} parent=0 // pred_region
    _
  $region13: #{tpu_custom_call.1} parent=0 // pred_fallthru
    _
  // Predicated region
  $region14: #{tpu_custom_call.1} parent=0 // pred_check
    _
  $region15: #{tpu_custom_call.1} parent=0 // pred_check_branch
    %17 = sbr.rel (0) target = $region17
  $region16: #{tpu_custom_call.1} parent=0 // pred_region
    _
  $region17: #{tpu_custom_call.1} parent=0 // pred_fallthru
    _
  // Predicated region
  $region18: #{tpu_custom_call.1} parent=0 // pred_check
    _
  $region19: #{tpu_custom_call.1} parent=0 // pred_check_branch
    %19 = sbr.rel (0) target = $region21
  $region20: #{tpu_custom_call.1} parent=0 // pred_region
    _
  $region21: #{tpu_custom_call.1} parent=0 // pred_fallthru
    _
  %v21 = vld [vmem:[%s0] sm:$0xff]
  %v22 = vld [vmem:[%s0 + $0x8] sm:$0xff]
  %v23 = vld [vmem:[%s0 + $0x10] sm:$0xff]
  %v24 = vld [vmem:[%s0 + $0x18] sm:$0xff]
  %v25 = vld [vmem:[%s0 + $0x20] sm:$0xff]
  %v26 = vld [vmem:[%s0 + $0x28] sm:$0xff]
  %v27 = vld [vmem:[%s0 + $0x30] sm:$0xff]
  %v28 = vld [vmem:[%s0 + $0x38] sm:$0xff]
  %v29 = vld [vmem:[%s0 + $0x40] sm:$0xff]
  %v30 = vld [vmem:[%s0 + $0x48] sm:$0xff]
  %v31 = vld [vmem:[%s0 + $0x50] sm:$0xff]
  %v32 = vld [vmem:[%s0 + $0x58] sm:$0xff]
  %v33 = vld [vmem:[%s0 + $0x60] sm:$0xff]
  %v34 = vld [vmem:[%s0 + $0x68] sm:$0xff]
  %v35 = vld [vmem:[%s0 + $0x70] sm:$0xff]
  %v36 = vld [vmem:[%s0 + $0x78] sm:$0xff]
  %v37 = vld [vmem:[%s0 + $0x80] sm:$0xff]
  %v38 = vld [vmem:[%s0 + $0x88] sm:$0xff]
  %v39 = vld [vmem:[%s0 + $0x90] sm:$0xff]
  %v40 = vld [vmem:[%s0 + $0x98] sm:$0xff]
  %v41 = vld [vmem:[%s0 + $0xa0] sm:$0xff]
  %v42 = vld [vmem:[%s0 + $0xa8] sm:$0xff]
  %v43 = vld [vmem:[%s0 + $0xb0] sm:$0xff]
  %v44 = vld [vmem:[%s0 + $0xb8] sm:$0xff]
  %v45 = vld [vmem:[%s0 + $0xc0] sm:$0xff]
  %v46 = vld [vmem:[%s0 + $0xc8] sm:$0xff]
  %v47 = vld [vmem:[%s0 + $0xd0] sm:$0xff]
  %v48 = vld [vmem:[%s0 + $0xd8] sm:$0xff]
  %v49 = vld [vmem:[%s0 + $0xe0] sm:$0xff]
  %v50 = vld [vmem:[%s0 + $0xe8] sm:$0xff]
  %v51 = vld [vmem:[%s0 + $0xf0] sm:$0xff]
  %v52 = vld [vmem:[%s0 + $0xf8] sm:$0xff]
  %v53 = vld [vmem:[%s0 + $0x100] sm:$0xff]
  %v54 = vld [vmem:[%s0 + $0x108] sm:$0xff]
  %v55 = vld [vmem:[%s0 + $0x110] sm:$0xff]
  %v56 = vld [vmem:[%s0 + $0x118] sm:$0xff]
  %v57 = vld [vmem:[%s0 + $0x120] sm:$0xff]
  %v58 = vld [vmem:[%s0 + $0x128] sm:$0xff]
  %v59 = vld [vmem:[%s0 + $0x130] sm:$0xff]
  %v60 = vld [vmem:[%s0 + $0x138] sm:$0xff]
  %v61 = vld [vmem:[%s0 + $0x140] sm:$0xff]
  %v62 = vld [vmem:[%s0 + $0x148] sm:$0xff]
  %v63 = vld [vmem:[%s0 + $0x150] sm:$0xff]
  %v64 = vld [vmem:[%s0 + $0x158] sm:$0xff]
  %v65 = vld [vmem:[%s0 + $0x160] sm:$0xff]
  %v66 = vld [vmem:[%s0 + $0x168] sm:$0xff]
  %v67 = vld [vmem:[%s0 + $0x170] sm:$0xff]
  %v68 = vld [vmem:[%s0 + $0x178] sm:$0xff]
  %v69 = vld [vmem:[%s0 + $0x180] sm:$0xff]
  %v70 = vld [vmem:[%s0 + $0x188] sm:$0xff]
  %v71 = vld [vmem:[%s0 + $0x190] sm:$0xff]
  %v72 = vld [vmem:[%s0 + $0x198] sm:$0xff]
  %v73 = vld [vmem:[%s0 + $0x1a0] sm:$0xff]
  %v74 = vld [vmem:[%s0 + $0x1a8] sm:$0xff]
  %v75 = vld [vmem:[%s0 + $0x1b0] sm:$0xff]
  %v76 = vld [vmem:[%s0 + $0x1b8] sm:$0xff]
  %v77 = vld [vmem:[%s0 + $0x1c0] sm:$0xff]
  %v78 = vld [vmem:[%s0 + $0x1c8] sm:$0xff]
  %v79 = vld [vmem:[%s0 + $0x1d0] sm:$0xff]
  %v80 = vld [vmem:[%s0 + $0x1d8] sm:$0xff]
  %v81 = vld [vmem:[%s0 + $0x1e0] sm:$0xff]
  %v82 = vld [vmem:[%s0 + $0x1e8] sm:$0xff]
  %v83 = vld [vmem:[%s0 + $0x1f0] sm:$0xff]
  %v84 = vld [vmem:[%s0 + $0x1f8] sm:$0xff]
  %v85 = vld [vmem:[%s0 + $0x200] sm:$0xff]
  %v86 = vld [vmem:[%s0 + $0x208] sm:$0xff]
  %v87 = vld [vmem:[%s0 + $0x210] sm:$0xff]
  %v88 = vld [vmem:[%s0 + $0x218] sm:$0xff]
  %v89 = vld [vmem:[%s0 + $0x220] sm:$0xff]
  %v90 = vld [vmem:[%s0 + $0x228] sm:$0xff]
  %v91 = vld [vmem:[%s0 + $0x230] sm:$0xff]
  %v92 = vld [vmem:[%s0 + $0x238] sm:$0xff]
  %v93 = vld [vmem:[%s0 + $0x240] sm:$0xff]
  %v94 = vld [vmem:[%s0 + $0x248] sm:$0xff]
  %v95 = vld [vmem:[%s0 + $0x250] sm:$0xff]
  %v96 = vld [vmem:[%s0 + $0x258] sm:$0xff]
  %v97 = vld [vmem:[%s0 + $0x260] sm:$0xff]
  %v98 = vld [vmem:[%s0 + $0x268] sm:$0xff]
  %v99 = vld [vmem:[%s0 + $0x270] sm:$0xff]
  %v100 = vld [vmem:[%s0 + $0x278] sm:$0xff]
  %v101 = vld [vmem:[%s0 + $0x280] sm:$0xff]
  %v102 = vld [vmem:[%s0 + $0x288] sm:$0xff]
  %v103 = vld [vmem:[%s0 + $0x290] sm:$0xff]
  %v104 = vld [vmem:[%s0 + $0x298] sm:$0xff]
  %v105 = vld [vmem:[%s0 + $0x2a0] sm:$0xff]
  %v106 = vld [vmem:[%s0 + $0x2a8] sm:$0xff]
  %v107 = vld [vmem:[%s0 + $0x2b0] sm:$0xff]
  %v108 = vld [vmem:[%s0 + $0x2b8] sm:$0xff]
  %v109 = vld [vmem:[%s0 + $0x2c0] sm:$0xff]
  %v110 = vld [vmem:[%s0 + $0x2c8] sm:$0xff]
  %v111 = vld [vmem:[%s0 + $0x2d0] sm:$0xff]
  %v112 = vld [vmem:[%s0 + $0x2d8] sm:$0xff]
  %v113 = vld [vmem:[%s0 + $0x2e0] sm:$0xff]
  %v114 = vld [vmem:[%s0 + $0x2e8] sm:$0xff]
  %v115 = vld [vmem:[%s0 + $0x2f0] sm:$0xff]
  %v116 = vld [vmem:[%s0 + $0x2f8] sm:$0xff]
  %v117 = vld [vmem:[%s0 + $0x300] sm:$0xff]
  %v118 = vld [vmem:[%s0 + $0x308] sm:$0xff]
  %v119 = vld [vmem:[%s0 + $0x310] sm:$0xff]
  %v120 = vld [vmem:[%s0 + $0x318] sm:$0xff]
  %v121 = vld [vmem:[%s0 + $0x320] sm:$0xff]
  %v122 = vld [vmem:[%s0 + $0x328] sm:$0xff]
  %v123 = vld [vmem:[%s0 + $0x330] sm:$0xff]
  %v124 = vld [vmem:[%s0 + $0x338] sm:$0xff]
  %v125 = vld [vmem:[%s0 + $0x340] sm:$0xff]
  %v126 = vld [vmem:[%s0 + $0x348] sm:$0xff]
  %v127 = vld [vmem:[%s0 + $0x350] sm:$0xff]
  %v128 = vld [vmem:[%s0 + $0x358] sm:$0xff]
  %v129 = vld [vmem:[%s0 + $0x360] sm:$0xff]
  %v130 = vld [vmem:[%s0 + $0x368] sm:$0xff]
  %v131 = vld [vmem:[%s0 + $0x370] sm:$0xff]
  %v132 = vld [vmem:[%s0 + $0x378] sm:$0xff]
  %v133 = vld [vmem:[%s0 + $0x380] sm:$0xff]
  %v134 = vld [vmem:[%s0 + $0x388] sm:$0xff]
  %v135 = vld [vmem:[%s0 + $0x390] sm:$0xff]
  %v136 = vld [vmem:[%s0 + $0x398] sm:$0xff]
  %v137 = vld [vmem:[%s0 + $0x3a0] sm:$0xff]
  %v138 = vld [vmem:[%s0 + $0x3a8] sm:$0xff]
  %v139 = vld [vmem:[%s0 + $0x3b0] sm:$0xff]
  %v140 = vld [vmem:[%s0 + $0x3b8] sm:$0xff]
  %v141 = vld [vmem:[%s0 + $0x3c0] sm:$0xff]
  %v142 = vld [vmem:[%s0 + $0x3c8] sm:$0xff]
  %v143 = vld [vmem:[%s0 + $0x3d0] sm:$0xff]
  %v144 = vld [vmem:[%s0 + $0x3d8] sm:$0xff]
  %v145 = vld [vmem:[%s0 + $0x3e0] sm:$0xff]
  %v146 = vld [vmem:[%s0 + $0x3e8] sm:$0xff]
  %v147 = vld [vmem:[%s0 + $0x3f0] sm:$0xff]
  %v148 = vld [vmem:[%s0 + $0x3f8] sm:$0xff]
  %v149 = vld [vmem:[%s0 + $0x400] sm:$0xff]
  %v150 = vld [vmem:[%s0 + $0x408] sm:$0xff]
  %v151 = vld [vmem:[%s0 + $0x410] sm:$0xff]
  %v152 = vld [vmem:[%s0 + $0x418] sm:$0xff]
  %v153 = vld [vmem:[%s0 + $0x420] sm:$0xff]
  %v154 = vld [vmem:[%s0 + $0x428] sm:$0xff]
  %v155 = vld [vmem:[%s0 + $0x430] sm:$0xff]
  %v156 = vld [vmem:[%s0 + $0x438] sm:$0xff]
  %v157 = vld [vmem:[%s0 + $0x440] sm:$0xff]
  %v158 = vld [vmem:[%s0 + $0x448] sm:$0xff]
  %v159 = vld [vmem:[%s0 + $0x450] sm:$0xff]
  %v160 = vld [vmem:[%s0 + $0x458] sm:$0xff]
  %v161 = vld [vmem:[%s0 + $0x460] sm:$0xff]
  %v162 = vld [vmem:[%s0 + $0x468] sm:$0xff]
  %v163 = vld [vmem:[%s0 + $0x470] sm:$0xff]
  %v164 = vld [vmem:[%s0 + $0x478] sm:$0xff]
  %v165 = vld [vmem:[%s0 + $0x480] sm:$0xff]
  %v166 = vld [vmem:[%s0 + $0x488] sm:$0xff]
  %v167 = vld [vmem:[%s0 + $0x490] sm:$0xff]
  %v168 = vld [vmem:[%s0 + $0x498] sm:$0xff]
  %v169 = vld [vmem:[%s0 + $0x4a0] sm:$0xff]
  %v170 = vld [vmem:[%s0 + $0x4a8] sm:$0xff]
  %v171 = vld [vmem:[%s0 + $0x4b0] sm:$0xff]
  %v172 = vld [vmem:[%s0 + $0x4b8] sm:$0xff]
  %v173 = vld [vmem:[%s0 + $0x4c0] sm:$0xff]
  %v174 = vld [vmem:[%s0 + $0x4c8] sm:$0xff]
  %v175 = vld [vmem:[%s0 + $0x4d0] sm:$0xff]
  %v176 = vld [vmem:[%s0 + $0x4d8] sm:$0xff]
  %v177 = vld [vmem:[%s0 + $0x4e0] sm:$0xff]
  %v178 = vld [vmem:[%s0 + $0x4e8] sm:$0xff]
  %v179 = vld [vmem:[%s0 + $0x4f0] sm:$0xff]
  %v180 = vld [vmem:[%s0 + $0x4f8] sm:$0xff]
  %v181 = vld [vmem:[%s0 + $0x500] sm:$0xff]
  %v182 = vld [vmem:[%s0 + $0x508] sm:$0xff]
  %v183 = vld [vmem:[%s0 + $0x510] sm:$0xff]
  %v184 = vld [vmem:[%s0 + $0x518] sm:$0xff]
  %v185 = vld [vmem:[%s0 + $0x520] sm:$0xff]
  %v186 = vld [vmem:[%s0 + $0x528] sm:$0xff]
  %v187 = vld [vmem:[%s0 + $0x530] sm:$0xff]
  %v188 = vld [vmem:[%s0 + $0x538] sm:$0xff]
  %v189 = vld [vmem:[%s0 + $0x540] sm:$0xff]
  %v190 = vld [vmem:[%s0 + $0x548] sm:$0xff]
  %v191 = vld [vmem:[%s0 + $0x550] sm:$0xff]
  %v192 = vld [vmem:[%s0 + $0x558] sm:$0xff]
  %v193 = vld [vmem:[%s0 + $0x560] sm:$0xff]
  %v194 = vld [vmem:[%s0 + $0x568] sm:$0xff]
  %v195 = vld [vmem:[%s0 + $0x570] sm:$0xff]
  %v196 = vld [vmem:[%s0 + $0x578] sm:$0xff]
  %v197 = vld [vmem:[%s0 + $0x580] sm:$0xff]
  %v198 = vld [vmem:[%s0 + $0x588] sm:$0xff]
  %v199 = vld [vmem:[%s0 + $0x590] sm:$0xff]
  %v200 = vld [vmem:[%s0 + $0x598] sm:$0xff]
  %v201 = vld [vmem:[%s0 + $0x5a0] sm:$0xff]
  %v202 = vld [vmem:[%s0 + $0x5a8] sm:$0xff]
  %v203 = vld [vmem:[%s0 + $0x5b0] sm:$0xff]
  %v204 = vld [vmem:[%s0 + $0x5b8] sm:$0xff]
  %v205 = vld [vmem:[%s0 + $0x5c0] sm:$0xff]
  %v206 = vld [vmem:[%s0 + $0x5c8] sm:$0xff]
  %v207 = vld [vmem:[%s0 + $0x5d0] sm:$0xff]
  %v208 = vld [vmem:[%s0 + $0x5d8] sm:$0xff]
  %v209 = vld [vmem:[%s0 + $0x5e0] sm:$0xff]
  %v210 = vld [vmem:[%s0 + $0x5e8] sm:$0xff]
  %v211 = vld [vmem:[%s0 + $0x5f0] sm:$0xff]
  %v212 = vld [vmem:[%s0 + $0x5f8] sm:$0xff]
  %v213 = vld [vmem:[%s0 + $0x600] sm:$0xff]
  %v214 = vld [vmem:[%s0 + $0x608] sm:$0xff]
  %v215 = vld [vmem:[%s0 + $0x610] sm:$0xff]
  %v216 = vld [vmem:[%s0 + $0x618] sm:$0xff]
  %v217 = vld [vmem:[%s0 + $0x620] sm:$0xff]
  %v218 = vld [vmem:[%s0 + $0x628] sm:$0xff]
  %v219 = vld [vmem:[%s0 + $0x630] sm:$0xff]
  %v220 = vld [vmem:[%s0 + $0x638] sm:$0xff]
  %v221 = vld [vmem:[%s0 + $0x640] sm:$0xff]
  %v222 = vld [vmem:[%s0 + $0x648] sm:$0xff]
  %v223 = vld [vmem:[%s0 + $0x650] sm:$0xff]
  %v224 = vld [vmem:[%s0 + $0x658] sm:$0xff]
  %v225 = vld [vmem:[%s0 + $0x660] sm:$0xff]
  %v226 = vld [vmem:[%s0 + $0x668] sm:$0xff]
  %v227 = vld [vmem:[%s0 + $0x670] sm:$0xff]
  %v228 = vld [vmem:[%s0 + $0x678] sm:$0xff]
  %v229 = vld [vmem:[%s0 + $0x680] sm:$0xff]
  %v230 = vld [vmem:[%s0 + $0x688] sm:$0xff]
  %v231 = vld [vmem:[%s0 + $0x690] sm:$0xff]
  %v232 = vld [vmem:[%s0 + $0x698] sm:$0xff]
  %v233 = vld [vmem:[%s0 + $0x6a0] sm:$0xff]
  %v234 = vld [vmem:[%s0 + $0x6a8] sm:$0xff]
  %v235 = vld [vmem:[%s0 + $0x6b0] sm:$0xff]
  %v236 = vld [vmem:[%s0 + $0x6b8] sm:$0xff]
  %v237 = vld [vmem:[%s0 + $0x6c0] sm:$0xff]
  %v238 = vld [vmem:[%s0 + $0x6c8] sm:$0xff]
  %v239 = vld [vmem:[%s0 + $0x6d0] sm:$0xff]
  %v240 = vld [vmem:[%s0 + $0x6d8] sm:$0xff]
  %v241 = vld [vmem:[%s0 + $0x6e0] sm:$0xff]
  %v242 = vld [vmem:[%s0 + $0x6e8] sm:$0xff]
  %v243 = vld [vmem:[%s0 + $0x6f0] sm:$0xff]
  %v244 = vld [vmem:[%s0 + $0x6f8] sm:$0xff]
  %v245 = vld [vmem:[%s0 + $0x700] sm:$0xff]
  %v246 = vld [vmem:[%s0 + $0x708] sm:$0xff]
  %v247 = vld [vmem:[%s0 + $0x710] sm:$0xff]
  %v248 = vld [vmem:[%s0 + $0x718] sm:$0xff]
  %v249 = vld [vmem:[%s0 + $0x720] sm:$0xff]
  %v250 = vld [vmem:[%s0 + $0x728] sm:$0xff]
  %v251 = vld [vmem:[%s0 + $0x730] sm:$0xff]
  %v252 = vld [vmem:[%s0 + $0x738] sm:$0xff]
  %v253 = vld [vmem:[%s0 + $0x740] sm:$0xff]
  %v254 = vld [vmem:[%s0 + $0x748] sm:$0xff]
  %v255 = vld [vmem:[%s0 + $0x750] sm:$0xff]
  %v256 = vld [vmem:[%s0 + $0x758] sm:$0xff]
  %v257 = vld [vmem:[%s0 + $0x760] sm:$0xff]
  %v258 = vld [vmem:[%s0 + $0x768] sm:$0xff]
  %v259 = vld [vmem:[%s0 + $0x770] sm:$0xff]
  %v260 = vld [vmem:[%s0 + $0x778] sm:$0xff]
  %v261 = vld [vmem:[%s0 + $0x780] sm:$0xff]
  %v262 = vld [vmem:[%s0 + $0x788] sm:$0xff]
  %v263 = vld [vmem:[%s0 + $0x790] sm:$0xff]
  %v264 = vld [vmem:[%s0 + $0x798] sm:$0xff]
  %v265 = vld [vmem:[%s0 + $0x7a0] sm:$0xff]
  %v266 = vld [vmem:[%s0 + $0x7a8] sm:$0xff]
  %v267 = vld [vmem:[%s0 + $0x7b0] sm:$0xff]
  %v268 = vld [vmem:[%s0 + $0x7b8] sm:$0xff]
  %v269 = vld [vmem:[%s0 + $0x7c0] sm:$0xff]
  %v270 = vld [vmem:[%s0 + $0x7c8] sm:$0xff]
  %v271 = vld [vmem:[%s0 + $0x7d0] sm:$0xff]
  %v272 = vld [vmem:[%s0 + $0x7d8] sm:$0xff]
  %v273 = vld [vmem:[%s0 + $0x7e0] sm:$0xff]
  %v274 = vld [vmem:[%s0 + $0x7e8] sm:$0xff]
  %v275 = vld [vmem:[%s0 + $0x7f0] sm:$0xff]
  %v276 = vld [vmem:[%s0 + $0x7f8] sm:$0xff]
  %v277 = vld [vmem:[%s0 + $0x800] sm:$0xff]
  %v278 = vld [vmem:[%s0 + $0x808] sm:$0xff]
  %v279 = vld [vmem:[%s0 + $0x810] sm:$0xff]
  %v280 = vld [vmem:[%s0 + $0x818] sm:$0xff]
  %v281 = vld [vmem:[%s0 + $0x820] sm:$0xff]
  %v282 = vld [vmem:[%s0 + $0x828] sm:$0xff]
  %v283 = vld [vmem:[%s0 + $0x830] sm:$0xff]
  %v284 = vld [vmem:[%s0 + $0x838] sm:$0xff]
  %v285 = vld [vmem:[%s0 + $0x840] sm:$0xff]
  %v286 = vld [vmem:[%s0 + $0x848] sm:$0xff]
  %v287 = vld [vmem:[%s0 + $0x850] sm:$0xff]
  %v288 = vld [vmem:[%s0 + $0x858] sm:$0xff]
  %v289 = vld [vmem:[%s0 + $0x860] sm:$0xff]
  %v290 = vld [vmem:[%s0 + $0x868] sm:$0xff]
  %v291 = vld [vmem:[%s0 + $0x870] sm:$0xff]
  %v292 = vld [vmem:[%s0 + $0x878] sm:$0xff]
  %v293 = vld [vmem:[%s0 + $0x880] sm:$0xff]
  %v294 = vld [vmem:[%s0 + $0x888] sm:$0xff]
  %v295 = vld [vmem:[%s0 + $0x890] sm:$0xff]
  %v296 = vld [vmem:[%s0 + $0x898] sm:$0xff]
  %v297 = vld [vmem:[%s0 + $0x8a0] sm:$0xff]
  %v298 = vld [vmem:[%s0 + $0x8a8] sm:$0xff]
  %v299 = vld [vmem:[%s0 + $0x8b0] sm:$0xff]
  %v300 = vld [vmem:[%s0 + $0x8b8] sm:$0xff]
  %v301 = vld [vmem:[%s0 + $0x8c0] sm:$0xff]
  %v302 = vld [vmem:[%s0 + $0x8c8] sm:$0xff]
  %v303 = vld [vmem:[%s0 + $0x8d0] sm:$0xff]
  %v304 = vld [vmem:[%s0 + $0x8d8] sm:$0xff]
  %v305 = vld [vmem:[%s0 + $0x8e0] sm:$0xff]
  %v306 = vld [vmem:[%s0 + $0x8e8] sm:$0xff]
  %v307 = vld [vmem:[%s0 + $0x8f0] sm:$0xff]
  %v308 = vld [vmem:[%s0 + $0x8f8] sm:$0xff]
  %v309 = vld [vmem:[%s0 + $0x900] sm:$0xff]
  %v310 = vld [vmem:[%s0 + $0x908] sm:$0xff]
  %v311 = vld [vmem:[%s0 + $0x910] sm:$0xff]
  %v312 = vld [vmem:[%s0 + $0x918] sm:$0xff]
  %v313 = vld [vmem:[%s0 + $0x920] sm:$0xff]
  %v314 = vld [vmem:[%s0 + $0x928] sm:$0xff]
  %v315 = vld [vmem:[%s0 + $0x930] sm:$0xff]
  %v316 = vld [vmem:[%s0 + $0x938] sm:$0xff]
  %v317 = vld [vmem:[%s0 + $0x940] sm:$0xff]
  %v318 = vld [vmem:[%s0 + $0x948] sm:$0xff]
  %v319 = vld [vmem:[%s0 + $0x950] sm:$0xff]
  %v320 = vld [vmem:[%s0 + $0x958] sm:$0xff]
  %v321 = vld [vmem:[%s0 + $0x960] sm:$0xff]
  %v322 = vld [vmem:[%s0 + $0x968] sm:$0xff]
  %v323 = vld [vmem:[%s0 + $0x970] sm:$0xff]
  %v324 = vld [vmem:[%s0 + $0x978] sm:$0xff]
  %v325 = vld [vmem:[%s0 + $0x980] sm:$0xff]
  %v326 = vld [vmem:[%s0 + $0x988] sm:$0xff]
  %v327 = vld [vmem:[%s0 + $0x990] sm:$0xff]
  %v328 = vld [vmem:[%s0 + $0x998] sm:$0xff]
  %v329 = vld [vmem:[%s0 + $0x9a0] sm:$0xff]
  %v330 = vld [vmem:[%s0 + $0x9a8] sm:$0xff]
  %v331 = vld [vmem:[%s0 + $0x9b0] sm:$0xff]
  %v332 = vld [vmem:[%s0 + $0x9b8] sm:$0xff]
  %v333 = vld [vmem:[%s0 + $0x9c0] sm:$0xff]
  %v334 = vld [vmem:[%s0 + $0x9c8] sm:$0xff]
  %v335 = vld [vmem:[%s0 + $0x9d0] sm:$0xff]
  %v336 = vld [vmem:[%s0 + $0x9d8] sm:$0xff]
  %v337 = vld [vmem:[%s0 + $0x9e0] sm:$0xff]
  %v338 = vld [vmem:[%s0 + $0x9e8] sm:$0xff]
  %v339 = vld [vmem:[%s0 + $0x9f0] sm:$0xff]
  %v340 = vld [vmem:[%s0 + $0x9f8] sm:$0xff]
  %v341 = vld [vmem:[%s0 + $0xa00] sm:$0xff]
  %v342 = vld [vmem:[%s0 + $0xa08] sm:$0xff]
  %v343 = vld [vmem:[%s0 + $0xa10] sm:$0xff]
  %v344 = vld [vmem:[%s0 + $0xa18] sm:$0xff]
  %v345 = vld [vmem:[%s0 + $0xa20] sm:$0xff]
  %v346 = vld [vmem:[%s0 + $0xa28] sm:$0xff]
  %v347 = vld [vmem:[%s0 + $0xa30] sm:$0xff]
  %v348 = vld [vmem:[%s0 + $0xa38] sm:$0xff]
  %v349 = vld [vmem:[%s0 + $0xa40] sm:$0xff]
  %v350 = vld [vmem:[%s0 + $0xa48] sm:$0xff]
  %v351 = vld [vmem:[%s0 + $0xa50] sm:$0xff]
  %v352 = vld [vmem:[%s0 + $0xa58] sm:$0xff]
  %v353 = vld [vmem:[%s0 + $0xa60] sm:$0xff]
  %v354 = vld [vmem:[%s0 + $0xa68] sm:$0xff]
  %v355 = vld [vmem:[%s0 + $0xa70] sm:$0xff]
  %v356 = vld [vmem:[%s0 + $0xa78] sm:$0xff]
  %v357 = vld [vmem:[%s0 + $0xa80] sm:$0xff]
  %v358 = vld [vmem:[%s0 + $0xa88] sm:$0xff]
  %v359 = vld [vmem:[%s0 + $0xa90] sm:$0xff]
  %v360 = vld [vmem:[%s0 + $0xa98] sm:$0xff]
  %v361 = vld [vmem:[%s0 + $0xaa0] sm:$0xff]
  %v362 = vld [vmem:[%s0 + $0xaa8] sm:$0xff]
  %v363 = vld [vmem:[%s0 + $0xab0] sm:$0xff]
  %v364 = vld [vmem:[%s0 + $0xab8] sm:$0xff]
  %v365 = vld [vmem:[%s0 + $0xac0] sm:$0xff]
  %v366 = vld [vmem:[%s0 + $0xac8] sm:$0xff]
  %v367 = vld [vmem:[%s0 + $0xad0] sm:$0xff]
  %v368 = vld [vmem:[%s0 + $0xad8] sm:$0xff]
  %v369 = vld [vmem:[%s0 + $0xae0] sm:$0xff]
  %v370 = vld [vmem:[%s0 + $0xae8] sm:$0xff]
  %v371 = vld [vmem:[%s0 + $0xaf0] sm:$0xff]
  %v372 = vld [vmem:[%s0 + $0xaf8] sm:$0xff]
  %v373 = vld [vmem:[%s0 + $0xb00] sm:$0xff]
  %v374 = vld [vmem:[%s0 + $0xb08] sm:$0xff]
  %v375 = vld [vmem:[%s0 + $0xb10] sm:$0xff]
  %v376 = vld [vmem:[%s0 + $0xb18] sm:$0xff]
  %v377 = vld [vmem:[%s0 + $0xb20] sm:$0xff]
  %v378 = vld [vmem:[%s0 + $0xb28] sm:$0xff]
  %v379 = vld [vmem:[%s0 + $0xb30] sm:$0xff]
  %v380 = vld [vmem:[%s0 + $0xb38] sm:$0xff]
  %v381 = vld [vmem:[%s0 + $0xb40] sm:$0xff]
  %v382 = vld [vmem:[%s0 + $0xb48] sm:$0xff]
  %v383 = vld [vmem:[%s0 + $0xb50] sm:$0xff]
  %v384 = vld [vmem:[%s0 + $0xb58] sm:$0xff]
  %v385 = vld [vmem:[%s0 + $0xb60] sm:$0xff]
  %v386 = vld [vmem:[%s0 + $0xb68] sm:$0xff]
  %v387 = vld [vmem:[%s0 + $0xb70] sm:$0xff]
  %v388 = vld [vmem:[%s0 + $0xb78] sm:$0xff]
  %v389 = vld [vmem:[%s0 + $0xb80] sm:$0xff]
  %v390 = vld [vmem:[%s0 + $0xb88] sm:$0xff]
  %v391 = vld [vmem:[%s0 + $0xb90] sm:$0xff]
  %v392 = vld [vmem:[%s0 + $0xb98] sm:$0xff]
  %v393 = vld [vmem:[%s0 + $0xba0] sm:$0xff]
  %v394 = vld [vmem:[%s0 + $0xba8] sm:$0xff]
  %v395 = vld [vmem:[%s0 + $0xbb0] sm:$0xff]
  %v396 = vld [vmem:[%s0 + $0xbb8] sm:$0xff]
  %v397 = vld [vmem:[%s0 + $0xbc0] sm:$0xff]
  %v398 = vld [vmem:[%s0 + $0xbc8] sm:$0xff]
  %v399 = vld [vmem:[%s0 + $0xbd0] sm:$0xff]
  %v400 = vld [vmem:[%s0 + $0xbd8] sm:$0xff]
  %v401 = vld [vmem:[%s0 + $0xbe0] sm:$0xff]
  %v402 = vld [vmem:[%s0 + $0xbe8] sm:$0xff]
  %v403 = vld [vmem:[%s0 + $0xbf0] sm:$0xff]
  %v404 = vld [vmem:[%s0 + $0xbf8] sm:$0xff]
  %v405 = vld [vmem:[%s0 + $0xc00] sm:$0xff]
  %v406 = vld [vmem:[%s0 + $0xc08] sm:$0xff]
  %v407 = vld [vmem:[%s0 + $0xc10] sm:$0xff]
  %v408 = vld [vmem:[%s0 + $0xc18] sm:$0xff]
  %v409 = vld [vmem:[%s0 + $0xc20] sm:$0xff]
  %v410 = vld [vmem:[%s0 + $0xc28] sm:$0xff]
  %v411 = vld [vmem:[%s0 + $0xc30] sm:$0xff]
  %v412 = vld [vmem:[%s0 + $0xc38] sm:$0xff]
  %v413 = vld [vmem:[%s0 + $0xc40] sm:$0xff]
  %v414 = vld [vmem:[%s0 + $0xc48] sm:$0xff]
  %v415 = vld [vmem:[%s0 + $0xc50] sm:$0xff]
  %v416 = vld [vmem:[%s0 + $0xc58] sm:$0xff]
  %v417 = vld [vmem:[%s0 + $0xc60] sm:$0xff]
  %v418 = vld [vmem:[%s0 + $0xc68] sm:$0xff]
  %v419 = vld [vmem:[%s0 + $0xc70] sm:$0xff]
  %v420 = vld [vmem:[%s0 + $0xc78] sm:$0xff]
  %v421 = vld [vmem:[%s0 + $0xc80] sm:$0xff]
  %v422 = vld [vmem:[%s0 + $0xc88] sm:$0xff]
  %v423 = vld [vmem:[%s0 + $0xc90] sm:$0xff]
  %v424 = vld [vmem:[%s0 + $0xc98] sm:$0xff]
  %v425 = vld [vmem:[%s0 + $0xca0] sm:$0xff]
  %v426 = vld [vmem:[%s0 + $0xca8] sm:$0xff]
  %v427 = vld [vmem:[%s0 + $0xcb0] sm:$0xff]
  %v428 = vld [vmem:[%s0 + $0xcb8] sm:$0xff]
  %v429 = vld [vmem:[%s0 + $0xcc0] sm:$0xff]
  %v430 = vld [vmem:[%s0 + $0xcc8] sm:$0xff]
  %v431 = vld [vmem:[%s0 + $0xcd0] sm:$0xff]
  %v432 = vld [vmem:[%s0 + $0xcd8] sm:$0xff]
  %v433 = vld [vmem:[%s0 + $0xce0] sm:$0xff]
  %v434 = vld [vmem:[%s0 + $0xce8] sm:$0xff]
  %v435 = vld [vmem:[%s0 + $0xcf0] sm:$0xff]
  %v436 = vld [vmem:[%s0 + $0xcf8] sm:$0xff]
  %v437 = vld [vmem:[%s0 + $0xd00] sm:$0xff]
  %v438 = vld [vmem:[%s0 + $0xd08] sm:$0xff]
  %v439 = vld [vmem:[%s0 + $0xd10] sm:$0xff]
  %v440 = vld [vmem:[%s0 + $0xd18] sm:$0xff]
  %v441 = vld [vmem:[%s0 + $0xd20] sm:$0xff]
  %v442 = vld [vmem:[%s0 + $0xd28] sm:$0xff]
  %v443 = vld [vmem:[%s0 + $0xd30] sm:$0xff]
  %v444 = vld [vmem:[%s0 + $0xd38] sm:$0xff]
  %v445 = vld [vmem:[%s0 + $0xd40] sm:$0xff]
  %v446 = vld [vmem:[%s0 + $0xd48] sm:$0xff]
  %v447 = vld [vmem:[%s0 + $0xd50] sm:$0xff]
  %v448 = vld [vmem:[%s0 + $0xd58] sm:$0xff]
  %v449 = vld [vmem:[%s0 + $0xd60] sm:$0xff]
  %v450 = vld [vmem:[%s0 + $0xd68] sm:$0xff]
  %v451 = vld [vmem:[%s0 + $0xd70] sm:$0xff]
  %v452 = vld [vmem:[%s0 + $0xd78] sm:$0xff]
  %v453 = vld [vmem:[%s0 + $0xd80] sm:$0xff]
  %v454 = vld [vmem:[%s0 + $0xd88] sm:$0xff]
  %v455 = vld [vmem:[%s0 + $0xd90] sm:$0xff]
  %v456 = vld [vmem:[%s0 + $0xd98] sm:$0xff]
  %v457 = vld [vmem:[%s0 + $0xda0] sm:$0xff]
  %v458 = vld [vmem:[%s0 + $0xda8] sm:$0xff]
  %v459 = vld [vmem:[%s0 + $0xdb0] sm:$0xff]
  %v460 = vld [vmem:[%s0 + $0xdb8] sm:$0xff]
  %v461 = vld [vmem:[%s0 + $0xdc0] sm:$0xff]
  %v462 = vld [vmem:[%s0 + $0xdc8] sm:$0xff]
  %v463 = vld [vmem:[%s0 + $0xdd0] sm:$0xff]
  %v464 = vld [vmem:[%s0 + $0xdd8] sm:$0xff]
  %v465 = vld [vmem:[%s0 + $0xde0] sm:$0xff]
  %v466 = vld [vmem:[%s0 + $0xde8] sm:$0xff]
  %v467 = vld [vmem:[%s0 + $0xdf0] sm:$0xff]
  %v468 = vld [vmem:[%s0 + $0xdf8] sm:$0xff]
  %v469 = vpack.c.bf16 %v28, %v21
  %v470 = vpack.c.bf16 %v29, %v22
  %v471 = vpack.c.bf16 %v30, %v23
  %v472 = vpack.c.bf16 %v31, %v24
  %v473 = vpack.c.bf16 %v32, %v25
  %v474 = vpack.c.bf16 %v33, %v26
  %v475 = vpack.c.bf16 %v34, %v27
  %v476 = vpack.c.bf16 %v42, %v35
  %v477 = vpack.c.bf16 %v43, %v36
  %v478 = vpack.c.bf16 %v44, %v37
  %v479 = vpack.c.bf16 %v45, %v38
  %v480 = vpack.c.bf16 %v46, %v39
  %v481 = vpack.c.bf16 %v47, %v40
  %v482 = vpack.c.bf16 %v48, %v41
  %v483 = vpack.c.bf16 %v56, %v49
  %v484 = vpack.c.bf16 %v57, %v50
  %v485 = vpack.c.bf16 %v58, %v51
  %v486 = vpack.c.bf16 %v59, %v52
  %v487 = vpack.c.bf16 %v60, %v53
  %v488 = vpack.c.bf16 %v61, %v54
  %v489 = vpack.c.bf16 %v62, %v55
  %v490 = vpack.c.bf16 %v70, %v63
  %v491 = vpack.c.bf16 %v71, %v64
  %v492 = vpack.c.bf16 %v72, %v65
  %v493 = vpack.c.bf16 %v73, %v66
  %v494 = vpack.c.bf16 %v74, %v67
  %v495 = vpack.c.bf16 %v75, %v68
  %v496 = vpack.c.bf16 %v76, %v69
  %v497 = vpack.c.bf16 %v84, %v77
  %v498 = vpack.c.bf16 %v85, %v78
  %v499 = vpack.c.bf16 %v86, %v79
  %v500 = vpack.c.bf16 %v87, %v80
  %v501 = vpack.c.bf16 %v88, %v81
  %v502 = vpack.c.bf16 %v89, %v82
  %v503 = vpack.c.bf16 %v90, %v83
  %v504 = vpack.c.bf16 %v98, %v91
  %v505 = vpack.c.bf16 %v99, %v92
  %v506 = vpack.c.bf16 %v100, %v93
  %v507 = vpack.c.bf16 %v101, %v94
  %v508 = vpack.c.bf16 %v102, %v95
  %v509 = vpack.c.bf16 %v103, %v96
  %v510 = vpack.c.bf16 %v104, %v97
  %v511 = vpack.c.bf16 %v112, %v105
  %v512 = vpack.c.bf16 %v113, %v106
  %v513 = vpack.c.bf16 %v114, %v107
  %v514 = vpack.c.bf16 %v115, %v108
  %v515 = vpack.c.bf16 %v116, %v109
  %v516 = vpack.c.bf16 %v117, %v110
  %v517 = vpack.c.bf16 %v118, %v111
  %v518 = vpack.c.bf16 %v126, %v119
  %v519 = vpack.c.bf16 %v127, %v120
  %v520 = vpack.c.bf16 %v128, %v121
  %v521 = vpack.c.bf16 %v129, %v122
  %v522 = vpack.c.bf16 %v130, %v123
  %v523 = vpack.c.bf16 %v131, %v124
  %v524 = vpack.c.bf16 %v132, %v125
  %v525 = vpack.c.bf16 %v140, %v133
  %v526 = vpack.c.bf16 %v141, %v134
  %v527 = vpack.c.bf16 %v142, %v135
  %v528 = vpack.c.bf16 %v143, %v136
  %v529 = vpack.c.bf16 %v144, %v137
  %v530 = vpack.c.bf16 %v145, %v138
  %v531 = vpack.c.bf16 %v146, %v139
  %v532 = vpack.c.bf16 %v154, %v147
  %v533 = vpack.c.bf16 %v155, %v148
  %v534 = vpack.c.bf16 %v156, %v149
  %v535 = vpack.c.bf16 %v157, %v150
  %v536 = vpack.c.bf16 %v158, %v151
  %v537 = vpack.c.bf16 %v159, %v152
  %v538 = vpack.c.bf16 %v160, %v153
  %v539 = vpack.c.bf16 %v168, %v161
  %v540 = vpack.c.bf16 %v169, %v162
  %v541 = vpack.c.bf16 %v170, %v163
  %v542 = vpack.c.bf16 %v171, %v164
  %v543 = vpack.c.bf16 %v172, %v165
  %v544 = vpack.c.bf16 %v173, %v166
  %v545 = vpack.c.bf16 %v174, %v167
  %v546 = vpack.c.bf16 %v182, %v175
  %v547 = vpack.c.bf16 %v183, %v176
  %v548 = vpack.c.bf16 %v184, %v177
  %v549 = vpack.c.bf16 %v185, %v178
  %v550 = vpack.c.bf16 %v186, %v179
  %v551 = vpack.c.bf16 %v187, %v180
  %v552 = vpack.c.bf16 %v188, %v181
  %v553 = vpack.c.bf16 %v196, %v189
  %v554 = vpack.c.bf16 %v197, %v190
  %v555 = vpack.c.bf16 %v198, %v191
  %v556 = vpack.c.bf16 %v199, %v192
  %v557 = vpack.c.bf16 %v200, %v193
  %v558 = vpack.c.bf16 %v201, %v194
  %v559 = vpack.c.bf16 %v202, %v195
  %v560 = vpack.c.bf16 %v210, %v203
  %v561 = vpack.c.bf16 %v211, %v204
  %v562 = vpack.c.bf16 %v212, %v205
  %v563 = vpack.c.bf16 %v213, %v206
  %v564 = vpack.c.bf16 %v214, %v207
  %v565 = vpack.c.bf16 %v215, %v208
  %v566 = vpack.c.bf16 %v216, %v209
  %v567 = vpack.c.bf16 %v224, %v217
  %v568 = vpack.c.bf16 %v225, %v218
  %v569 = vpack.c.bf16 %v226, %v219
  %v570 = vpack.c.bf16 %v227, %v220
  %v571 = vpack.c.bf16 %v228, %v221
  %v572 = vpack.c.bf16 %v229, %v222
  %v573 = vpack.c.bf16 %v230, %v223
  %v574 = vpack.c.bf16 %v238, %v231
  %v575 = vpack.c.bf16 %v239, %v232
  %v576 = vpack.c.bf16 %v240, %v233
  %v577 = vpack.c.bf16 %v241, %v234
  %v578 = vpack.c.bf16 %v242, %v235
  %v579 = vpack.c.bf16 %v243, %v236
  %v580 = vpack.c.bf16 %v244, %v237
  %v581 = vpack.c.bf16 %v252, %v245
  %v582 = vpack.c.bf16 %v253, %v246
  %v583 = vpack.c.bf16 %v254, %v247
  %v584 = vpack.c.bf16 %v255, %v248
  %v585 = vpack.c.bf16 %v256, %v249
  %v586 = vpack.c.bf16 %v257, %v250
  %v587 = vpack.c.bf16 %v258, %v251
  %v588 = vpack.c.bf16 %v266, %v259
  %v589 = vpack.c.bf16 %v267, %v260
  %v590 = vpack.c.bf16 %v268, %v261
  %v591 = vpack.c.bf16 %v269, %v262
  %v592 = vpack.c.bf16 %v270, %v263
  %v593 = vpack.c.bf16 %v271, %v264
  %v594 = vpack.c.bf16 %v272, %v265
  %v595 = vpack.c.bf16 %v280, %v273
  %v596 = vpack.c.bf16 %v281, %v274
  %v597 = vpack.c.bf16 %v282, %v275
  %v598 = vpack.c.bf16 %v283, %v276
  %v599 = vpack.c.bf16 %v284, %v277
  %v600 = vpack.c.bf16 %v285, %v278
  %v601 = vpack.c.bf16 %v286, %v279
  %v602 = vpack.c.bf16 %v294, %v287
  %v603 = vpack.c.bf16 %v295, %v288
  %v604 = vpack.c.bf16 %v296, %v289
  %v605 = vpack.c.bf16 %v297, %v290
  %v606 = vpack.c.bf16 %v298, %v291
  %v607 = vpack.c.bf16 %v299, %v292
  %v608 = vpack.c.bf16 %v300, %v293
  %v609 = vpack.c.bf16 %v308, %v301
  %v610 = vpack.c.bf16 %v309, %v302
  %v611 = vpack.c.bf16 %v310, %v303
  %v612 = vpack.c.bf16 %v311, %v304
  %v613 = vpack.c.bf16 %v312, %v305
  %v614 = vpack.c.bf16 %v313, %v306
  %v615 = vpack.c.bf16 %v314, %v307
  %v616 = vpack.c.bf16 %v322, %v315
  %v617 = vpack.c.bf16 %v323, %v316
  %v618 = vpack.c.bf16 %v324, %v317
  %v619 = vpack.c.bf16 %v325, %v318
  %v620 = vpack.c.bf16 %v326, %v319
  %v621 = vpack.c.bf16 %v327, %v320
  %v622 = vpack.c.bf16 %v328, %v321
  %v623 = vpack.c.bf16 %v336, %v329
  %v624 = vpack.c.bf16 %v337, %v330
  %v625 = vpack.c.bf16 %v338, %v331
  %v626 = vpack.c.bf16 %v339, %v332
  %v627 = vpack.c.bf16 %v340, %v333
  %v628 = vpack.c.bf16 %v341, %v334
  %v629 = vpack.c.bf16 %v342, %v335
  %v630 = vpack.c.bf16 %v350, %v343
  %v631 = vpack.c.bf16 %v351, %v344
  %v632 = vpack.c.bf16 %v352, %v345
  %v633 = vpack.c.bf16 %v353, %v346
  %v634 = vpack.c.bf16 %v354, %v347
  %v635 = vpack.c.bf16 %v355, %v348
  %v636 = vpack.c.bf16 %v356, %v349
  %v637 = vpack.c.bf16 %v364, %v357
  %v638 = vpack.c.bf16 %v365, %v358
  %v639 = vpack.c.bf16 %v366, %v359
  %v640 = vpack.c.bf16 %v367, %v360
  %v641 = vpack.c.bf16 %v368, %v361
  %v642 = vpack.c.bf16 %v369, %v362
  %v643 = vpack.c.bf16 %v370, %v363
  %v644 = vpack.c.bf16 %v378, %v371
  %v645 = vpack.c.bf16 %v379, %v372
  %v646 = vpack.c.bf16 %v380, %v373
  %v647 = vpack.c.bf16 %v381, %v374
  %v648 = vpack.c.bf16 %v382, %v375
  %v649 = vpack.c.bf16 %v383, %v376
  %v650 = vpack.c.bf16 %v384, %v377
  %v651 = vpack.c.bf16 %v392, %v385
  %v652 = vpack.c.bf16 %v393, %v386
  %v653 = vpack.c.bf16 %v394, %v387
  %v654 = vpack.c.bf16 %v395, %v388
  %v655 = vpack.c.bf16 %v396, %v389
  %v656 = vpack.c.bf16 %v397, %v390
  %v657 = vpack.c.bf16 %v398, %v391
  %v658 = vpack.c.bf16 %v406, %v399
  %v659 = vpack.c.bf16 %v407, %v400
  %v660 = vpack.c.bf16 %v408, %v401
  %v661 = vpack.c.bf16 %v409, %v402
  %v662 = vpack.c.bf16 %v410, %v403
  %v663 = vpack.c.bf16 %v411, %v404
  %v664 = vpack.c.bf16 %v412, %v405
  %v665 = vpack.c.bf16 %v420, %v413
  %v666 = vpack.c.bf16 %v421, %v414
  %v667 = vpack.c.bf16 %v422, %v415
  %v668 = vpack.c.bf16 %v423, %v416
  %v669 = vpack.c.bf16 %v424, %v417
  %v670 = vpack.c.bf16 %v425, %v418
  %v671 = vpack.c.bf16 %v426, %v419
  %v672 = vpack.c.bf16 %v434, %v427
  %v673 = vpack.c.bf16 %v435, %v428
  %v674 = vpack.c.bf16 %v436, %v429
  %v675 = vpack.c.bf16 %v437, %v430
  %v676 = vpack.c.bf16 %v438, %v431
  %v677 = vpack.c.bf16 %v439, %v432
  %v678 = vpack.c.bf16 %v440, %v433
  %v679 = vpack.c.bf16 %v448, %v441
  %v680 = vpack.c.bf16 %v449, %v442
  %v681 = vpack.c.bf16 %v450, %v443
  %v682 = vpack.c.bf16 %v451, %v444
  %v683 = vpack.c.bf16 %v452, %v445
  %v684 = vpack.c.bf16 %v453, %v446
  %v685 = vpack.c.bf16 %v454, %v447
  %v686 = vpack.c.bf16 %v462, %v455
  %v687 = vpack.c.bf16 %v463, %v456
  %v688 = vpack.c.bf16 %v464, %v457
  %v689 = vpack.c.bf16 %v465, %v458
  %v690 = vpack.c.bf16 %v466, %v459
  %v691 = vpack.c.bf16 %v467, %v460
  %v692 = vpack.c.bf16 %v468, %v461
  %v693 = vld [vmem:[%s1] sm:$0xf]
  %v694 = vld [vmem:[%s1 + $0x4] sm:$0xf]
  %v695 = vld [vmem:[%s1 + $0x8] sm:$0xf]
  %v696 = vld [vmem:[%s1 + $0xc] sm:$0xf]
  %v697 = vld [vmem:[%s1 + $0x10] sm:$0xf]
  %v698 = vld [vmem:[%s1 + $0x14] sm:$0xf]
  %v699 = vld [vmem:[%s1 + $0x18] sm:$0xf]
  %v700 = vld [vmem:[%s1 + $0x1c] sm:$0xf]
  %v701 = vld [vmem:[%s1 + $0x20] sm:$0xf]
  %v702 = vld [vmem:[%s1 + $0x24] sm:$0xf]
  %v703 = vld [vmem:[%s1 + $0x28] sm:$0xf]
  %v704 = vld [vmem:[%s1 + $0x2c] sm:$0xf]
  %v705 = vld [vmem:[%s1 + $0x30] sm:$0xf]
  %v706 = vld [vmem:[%s1 + $0x34] sm:$0xf]
  %v707 = vld [vmem:[%s1 + $0x38] sm:$0xf]
  %v708 = vld [vmem:[%s1 + $0x3c] sm:$0xf]
  %v709 = vld [vmem:[%s1 + $0x40] sm:$0xf]
  %v710 = vld [vmem:[%s1 + $0x44] sm:$0xf]
  %v711 = vld [vmem:[%s1 + $0x48] sm:$0xf]
  %v712 = vld [vmem:[%s1 + $0x4c] sm:$0xf]
  %v713 = vld [vmem:[%s1 + $0x50] sm:$0xf]
  %v714 = vld [vmem:[%s1 + $0x54] sm:$0xf]
  %v715 = vld [vmem:[%s1 + $0x58] sm:$0xf]
  %v716 = vld [vmem:[%s1 + $0x5c] sm:$0xf]
  %v717 = vld [vmem:[%s1 + $0x60] sm:$0xf]
  %v718 = vld [vmem:[%s1 + $0x64] sm:$0xf]
  %v719 = vld [vmem:[%s1 + $0x68] sm:$0xf]
  %v720 = vld [vmem:[%s1 + $0x6c] sm:$0xf]
  %v721 = vld [vmem:[%s1 + $0x70] sm:$0xf]
  %v722 = vld [vmem:[%s1 + $0x74] sm:$0xf]
  %v723 = vld [vmem:[%s1 + $0x78] sm:$0xf]
  %v724 = vld [vmem:[%s1 + $0x7c] sm:$0xf]
  %v725 = vld [vmem:[%s1 + $0x80] sm:$0xf]
  %v726 = vld [vmem:[%s1 + $0x84] sm:$0xf]
  %v727 = vld [vmem:[%s1 + $0x88] sm:$0xf]
  %v728 = vld [vmem:[%s1 + $0x8c] sm:$0xf]
  %v729 = vld [vmem:[%s1 + $0x90] sm:$0xf]
  %v730 = vld [vmem:[%s1 + $0x94] sm:$0xf]
  %v731 = vld [vmem:[%s1 + $0x98] sm:$0xf]
  %v732 = vld [vmem:[%s1 + $0x9c] sm:$0xf]
  %v733 = vld [vmem:[%s1 + $0xa0] sm:$0xf]
  %v734 = vld [vmem:[%s1 + $0xa4] sm:$0xf]
  %v735 = vld [vmem:[%s1 + $0xa8] sm:$0xf]
  %v736 = vld [vmem:[%s1 + $0xac] sm:$0xf]
  %v737 = vld [vmem:[%s1 + $0xb0] sm:$0xf]
  %v738 = vld [vmem:[%s1 + $0xb4] sm:$0xf]
  %v739 = vld [vmem:[%s1 + $0xb8] sm:$0xf]
  %v740 = vld [vmem:[%s1 + $0xbc] sm:$0xf]
  %v741 = vld [vmem:[%s1 + $0xc0] sm:$0xf]
  %v742 = vld [vmem:[%s1 + $0xc4] sm:$0xf]
  %v743 = vld [vmem:[%s1 + $0xc8] sm:$0xf]
  %v744 = vld [vmem:[%s1 + $0xcc] sm:$0xf]
  %v745 = vld [vmem:[%s1 + $0xd0] sm:$0xf]
  %v746 = vld [vmem:[%s1 + $0xd4] sm:$0xf]
  %v747 = vld [vmem:[%s1 + $0xd8] sm:$0xf]
  %v748 = vld [vmem:[%s1 + $0xdc] sm:$0xf]
  %v749 = vld [vmem:[%s1 + $0xe0] sm:$0xf]
  %v750 = vld [vmem:[%s1 + $0xe4] sm:$0xf]
  %v751 = vld [vmem:[%s1 + $0xe8] sm:$0xf]
  %v752 = vld [vmem:[%s1 + $0xec] sm:$0xf]
  %v753 = vld [vmem:[%s1 + $0xf0] sm:$0xf]
  %v754 = vld [vmem:[%s1 + $0xf4] sm:$0xf]
  %v755 = vld [vmem:[%s1 + $0xf8] sm:$0xf]
  %v756 = vld [vmem:[%s1 + $0xfc] sm:$0xf]
  %v757 = vld [vmem:[%s1 + $0x100] sm:$0xf]
  %v758 = vld [vmem:[%s1 + $0x104] sm:$0xf]
  %v759 = vld [vmem:[%s1 + $0x108] sm:$0xf]
  %v760 = vld [vmem:[%s1 + $0x10c] sm:$0xf]
  %v761 = vld [vmem:[%s1 + $0x110] sm:$0xf]
  %v762 = vld [vmem:[%s1 + $0x114] sm:$0xf]
  %v763 = vld [vmem:[%s1 + $0x118] sm:$0xf]
  %v764 = vld [vmem:[%s1 + $0x11c] sm:$0xf]
  %v765 = vld [vmem:[%s1 + $0x120] sm:$0xf]
  %v766 = vld [vmem:[%s1 + $0x124] sm:$0xf]
  %v767 = vld [vmem:[%s1 + $0x128] sm:$0xf]
  %v768 = vld [vmem:[%s1 + $0x12c] sm:$0xf]
  %v769 = vld [vmem:[%s1 + $0x130] sm:$0xf]
  %v770 = vld [vmem:[%s1 + $0x134] sm:$0xf]
  %v771 = vld [vmem:[%s1 + $0x138] sm:$0xf]
  %v772 = vld [vmem:[%s1 + $0x13c] sm:$0xf]
  %v773 = vld [vmem:[%s1 + $0x140] sm:$0xf]
  %v774 = vld [vmem:[%s1 + $0x144] sm:$0xf]
  %v775 = vld [vmem:[%s1 + $0x148] sm:$0xf]
  %v776 = vld [vmem:[%s1 + $0x14c] sm:$0xf]
  %v777 = vld [vmem:[%s1 + $0x150] sm:$0xf]
  %v778 = vld [vmem:[%s1 + $0x154] sm:$0xf]
  %v779 = vld [vmem:[%s1 + $0x158] sm:$0xf]
  %v780 = vld [vmem:[%s1 + $0x15c] sm:$0xf]
  %v781 = vld [vmem:[%s1 + $0x160] sm:$0xf]
  %v782 = vld [vmem:[%s1 + $0x164] sm:$0xf]
  %v783 = vld [vmem:[%s1 + $0x168] sm:$0xf]
  %v784 = vld [vmem:[%s1 + $0x16c] sm:$0xf]
  %v785 = vld [vmem:[%s1 + $0x170] sm:$0xf]
  %v786 = vld [vmem:[%s1 + $0x174] sm:$0xf]
  %v787 = vld [vmem:[%s1 + $0x178] sm:$0xf]
  %v788 = vld [vmem:[%s1 + $0x17c] sm:$0xf]
  %v789 = vld [vmem:[%s1 + $0x180] sm:$0xf]
  %v790 = vld [vmem:[%s1 + $0x184] sm:$0xf]
  %v791 = vld [vmem:[%s2] sm:$0x1]
  %v793 = vlaneseq
  %v794 = vshrl.u32 %v793, 7
  %v795 = vsub.s32 0, %v794
  %v796 = vrot.slane %v791, %v795
  %v896 = vunpack.c.l.b16 %v693
  %v897 = vunpack.c.l.b16 %v694
  %v898 = vunpack.c.l.b16 %v695
  %v899 = vunpack.c.l.b16 %v696
  %v900 = vunpack.c.l.b16 %v697
  %v901 = vunpack.c.l.b16 %v698
  %v902 = vunpack.c.l.b16 %v699
  %v903 = vunpack.c.l.b16 %v700
  %v904 = vunpack.c.l.b16 %v701
  %v905 = vunpack.c.l.b16 %v702
  %v906 = vunpack.c.l.b16 %v703
  %v907 = vunpack.c.l.b16 %v704
  %v908 = vunpack.c.l.b16 %v705
  %v909 = vunpack.c.l.b16 %v706
  %v910 = vunpack.c.l.b16 %v707
  %v911 = vunpack.c.l.b16 %v708
  %v912 = vunpack.c.l.b16 %v709
  %v913 = vunpack.c.l.b16 %v710
  %v914 = vunpack.c.l.b16 %v711
  %v915 = vunpack.c.l.b16 %v712
  %v916 = vunpack.c.l.b16 %v713
  %v917 = vunpack.c.l.b16 %v714
  %v918 = vunpack.c.l.b16 %v715
  %v919 = vunpack.c.l.b16 %v716
  %v920 = vunpack.c.l.b16 %v717
  %v921 = vunpack.c.l.b16 %v718
  %v922 = vunpack.c.l.b16 %v719
  %v923 = vunpack.c.l.b16 %v720
  %v924 = vunpack.c.l.b16 %v721
  %v925 = vunpack.c.l.b16 %v722
  %v926 = vunpack.c.l.b16 %v723
  %v927 = vunpack.c.l.b16 %v724
  %v928 = vunpack.c.l.b16 %v725
  %v929 = vunpack.c.l.b16 %v726
  %v930 = vunpack.c.l.b16 %v727
  %v931 = vunpack.c.l.b16 %v728
  %v932 = vunpack.c.l.b16 %v729
  %v933 = vunpack.c.l.b16 %v730
  %v934 = vunpack.c.l.b16 %v731
  %v935 = vunpack.c.l.b16 %v732
  %v936 = vunpack.c.l.b16 %v733
  %v937 = vunpack.c.l.b16 %v734
  %v938 = vunpack.c.l.b16 %v735
  %v939 = vunpack.c.l.b16 %v736
  %v940 = vunpack.c.l.b16 %v737
  %v941 = vunpack.c.l.b16 %v738
  %v942 = vunpack.c.l.b16 %v739
  %v943 = vunpack.c.l.b16 %v740
  %v944 = vunpack.c.l.b16 %v741
  %v945 = vunpack.c.l.b16 %v742
  %v946 = vunpack.c.l.b16 %v743
  %v947 = vunpack.c.l.b16 %v744
  %v948 = vunpack.c.l.b16 %v745
  %v949 = vunpack.c.l.b16 %v746
  %v950 = vunpack.c.l.b16 %v747
  %v951 = vunpack.c.l.b16 %v748
  %v952 = vunpack.c.l.b16 %v749
  %v953 = vunpack.c.l.b16 %v750
  %v954 = vunpack.c.l.b16 %v751
  %v955 = vunpack.c.l.b16 %v752
  %v956 = vunpack.c.l.b16 %v753
  %v957 = vunpack.c.l.b16 %v754
  %v958 = vunpack.c.l.b16 %v755
  %v959 = vunpack.c.l.b16 %v756
  %v960 = vunpack.c.l.b16 %v757
  %v961 = vunpack.c.l.b16 %v758
  %v962 = vunpack.c.l.b16 %v759
  %v963 = vunpack.c.l.b16 %v760
  %v964 = vunpack.c.l.b16 %v761
  %v965 = vunpack.c.l.b16 %v762
  %v966 = vunpack.c.l.b16 %v763
  %v967 = vunpack.c.l.b16 %v764
  %v968 = vunpack.c.l.b16 %v765
  %v969 = vunpack.c.l.b16 %v766
  %v970 = vunpack.c.l.b16 %v767
  %v971 = vunpack.c.l.b16 %v768
  %v972 = vunpack.c.l.b16 %v769
  %v973 = vunpack.c.l.b16 %v770
  %v974 = vunpack.c.l.b16 %v771
  %v975 = vunpack.c.l.b16 %v772
  %v976 = vunpack.c.l.b16 %v773
  %v977 = vunpack.c.l.b16 %v774
  %v978 = vunpack.c.l.b16 %v775
  %v979 = vunpack.c.l.b16 %v776
  %v980 = vunpack.c.l.b16 %v777
  %v981 = vunpack.c.l.b16 %v778
  %v982 = vunpack.c.l.b16 %v779
  %v983 = vunpack.c.l.b16 %v780
  %v984 = vunpack.c.l.b16 %v781
  %v985 = vunpack.c.l.b16 %v782
  %v986 = vunpack.c.l.b16 %v783
  %v987 = vunpack.c.l.b16 %v784
  %v988 = vunpack.c.l.b16 %v785
  %v989 = vunpack.c.l.b16 %v786
  %v990 = vunpack.c.l.b16 %v787
  %v991 = vunpack.c.l.b16 %v788
  %v992 = vunpack.c.l.b16 %v789
  %v993 = vunpack.c.l.b16 %v790
  %v994 = vpack.c.b16 %v897, %v896
  %v995 = vpack.c.b16 %v899, %v898
  %v996 = vpack.c.b16 %v901, %v900
  %v997 = vpack.c.b16 %v903, %v902
  %v998 = vpack.c.b16 %v905, %v904
  %v999 = vpack.c.b16 %v907, %v906
  %v1000 = vpack.c.b16 %v909, %v908
  %v1001 = vpack.c.b16 %v911, %v910
  %v1002 = vpack.c.b16 %v913, %v912
  %v1003 = vpack.c.b16 %v915, %v914
  %v1004 = vpack.c.b16 %v917, %v916
  %v1005 = vpack.c.b16 %v919, %v918
  %v1006 = vpack.c.b16 %v921, %v920
  %v1007 = vpack.c.b16 %v923, %v922
  %v1008 = vpack.c.b16 %v925, %v924
  %v1009 = vpack.c.b16 %v927, %v926
  %v1010 = vpack.c.b16 %v929, %v928
  %v1011 = vpack.c.b16 %v931, %v930
  %v1012 = vpack.c.b16 %v933, %v932
  %v1013 = vpack.c.b16 %v935, %v934
  %v1014 = vpack.c.b16 %v937, %v936
  %v1015 = vpack.c.b16 %v939, %v938
  %v1016 = vpack.c.b16 %v941, %v940
  %v1017 = vpack.c.b16 %v943, %v942
  %v1018 = vpack.c.b16 %v945, %v944
  %v1019 = vpack.c.b16 %v947, %v946
  %v1020 = vpack.c.b16 %v949, %v948
  %v1021 = vpack.c.b16 %v951, %v950
  %v1022 = vpack.c.b16 %v953, %v952
  %v1023 = vpack.c.b16 %v955, %v954
  %v1024 = vpack.c.b16 %v957, %v956
  %v1025 = vpack.c.b16 %v959, %v958
  %v1026 = vpack.c.b16 %v961, %v960
  %v1027 = vpack.c.b16 %v963, %v962
  %v1028 = vpack.c.b16 %v965, %v964
  %v1029 = vpack.c.b16 %v967, %v966
  %v1030 = vpack.c.b16 %v969, %v968
  %v1031 = vpack.c.b16 %v971, %v970
  %v1032 = vpack.c.b16 %v973, %v972
  %v1033 = vpack.c.b16 %v975, %v974
  %v1034 = vpack.c.b16 %v977, %v976
  %v1035 = vpack.c.b16 %v979, %v978
  %v1036 = vpack.c.b16 %v981, %v980
  %v1037 = vpack.c.b16 %v983, %v982
  %v1038 = vpack.c.b16 %v985, %v984
  %v1039 = vpack.c.b16 %v987, %v986
  %v1040 = vpack.c.b16 %v989, %v988
  %v1041 = vpack.c.b16 %v991, %v990
  %v1042 = vpack.c.b16 %v993, %v992
  %vm1092 = vcmask 130048
  %v1094 = vsel %vm1092, %v475, 0
  %v1097 = vsel %vm1092, %v482, 0
  %v1100 = vsel %vm1092, %v489, 0
  %v1103 = vsel %vm1092, %v496, 0
  %v1106 = vsel %vm1092, %v503, 0
  %v1109 = vsel %vm1092, %v510, 0
  %v1112 = vsel %vm1092, %v517, 0
  %v1115 = vsel %vm1092, %v524, 0
  %v1118 = vsel %vm1092, %v531, 0
  %v1121 = vsel %vm1092, %v538, 0
  %v1124 = vsel %vm1092, %v545, 0
  %v1127 = vsel %vm1092, %v552, 0
  %v1130 = vsel %vm1092, %v559, 0
  %v1133 = vsel %vm1092, %v566, 0
  %v1136 = vsel %vm1092, %v573, 0
  %v1139 = vsel %vm1092, %v580, 0
  %v1142 = vsel %vm1092, %v587, 0
  %v1145 = vsel %vm1092, %v594, 0
  %v1148 = vsel %vm1092, %v601, 0
  %v1151 = vsel %vm1092, %v608, 0
  %v1154 = vsel %vm1092, %v615, 0
  %v1157 = vsel %vm1092, %v622, 0
  %v1160 = vsel %vm1092, %v629, 0
  %v1163 = vsel %vm1092, %v636, 0
  %v1166 = vsel %vm1092, %v643, 0
  %v1169 = vsel %vm1092, %v650, 0
  %v1172 = vsel %vm1092, %v657, 0
  %v1175 = vsel %vm1092, %v664, 0
  %v1178 = vsel %vm1092, %v671, 0
  %v1181 = vsel %vm1092, %v678, 0
  %v1184 = vsel %vm1092, %v685, 0
  %v1187 = vsel %vm1092, %v692, 0
  %1189 = vmatprep.subr.bf16.mxu0 0
  %1190 = vmatpush1.bf16.msra.mxu0 %v994
  %1191 = vmatprep.subr.bf16.mxu0 0
  %1192 = vmatpush1.bf16.msra.mxu0 %v995
  %1193 = vmatprep.subr.bf16.mxu0 0
  %1194 = vmatpush1.bf16.msra.mxu0 %v996
  %1195 = vmatprep.subr.bf16.mxu0 0
  %1196 = vmatpush1.bf16.msra.mxu0 %v997
  %1197 = vmatprep.subr.bf16.mxu0 0
  %1198 = vmatpush1.bf16.msra.mxu0 %v998
  %1199 = vmatprep.subr.bf16.mxu0 0
  %1200 = vmatpush1.bf16.msra.mxu0 %v999
  %1201 = vmatprep.subr.bf16.mxu0 0
  %1202 = vmatpush1.bf16.msra.mxu0 %v1000
  %1203 = vmatprep.subr.bf16.mxu0 0
  %1204 = vmatpush1.bf16.msra.mxu0 %v1001
  %1205 = vmatprep.subr.bf16.mxu0 0
  %1206 = vmatpush1.bf16.msra.mxu0 %v1002
  %1207 = vmatprep.subr.bf16.mxu0 0
  %1208 = vmatpush1.bf16.msra.mxu0 %v1003
  %1209 = vmatprep.subr.bf16.mxu0 0
  %1210 = vmatpush1.bf16.msra.mxu0 %v1004
  %1211 = vmatprep.subr.bf16.mxu0 0
  %1212 = vmatpush1.bf16.msra.mxu0 %v1005
  %1213 = vmatprep.subr.bf16.mxu0 0
  %1214 = vmatpush1.bf16.msra.mxu0 %v1006
  %1215 = vmatprep.subr.bf16.mxu0 0
  %1216 = vmatpush1.bf16.msra.mxu0 %v1007
  %1217 = vmatprep.subr.bf16.mxu0 0
  %1218 = vmatpush1.bf16.msra.mxu0 %v1008
  %1219 = vmatprep.subr.bf16.mxu0 0
  %1220 = vmatpush1.bf16.msra.mxu0 %v1009
  %1221 = vmatprep.mubr.bf16.mxu0 %v470
  %1222 = vmatmul.mubr.bf16.gmra.mrb[0].mxu0 %v469
  %v1223 = vpop.f32.mrb[0].mxu0
  %v1224 = vadd.f32 %v796, %v1223
  %v1225 = vpop.f32.mrb[0].mxu0
  %v1226 = vpop.f32.mrb[0].mxu0
  %v1227 = vadd.f32 %v796, %v1226
  %v1228 = vpop.f32.mrb[0].mxu0
  %1229 = vmatprep.mubr.bf16.mxu0 %v477
  %1230 = vmatmul.mubr.bf16.gmra.mrb[0].mxu0 %v476
  %v1231 = vpop.f32.mrb[0].mxu0
  %v1232 = vadd.f32 %v796, %v1231
  %v1233 = vpop.f32.mrb[0].mxu0
  %v1234 = vpop.f32.mrb[0].mxu0
  %v1235 = vadd.f32 %v796, %v1234
  %v1236 = vpop.f32.mrb[0].mxu0
  %1237 = vmatprep.mubr.bf16.mxu0 %v484
  %1238 = vmatmul.mubr.bf16.gmra.mrb[0].mxu0 %v483
  %v1239 = vpop.f32.mrb[0].mxu0
  %v1240 = vadd.f32 %v796, %v1239
  %v1241 = vpop.f32.mrb[0].mxu0
  %v1242 = vpop.f32.mrb[0].mxu0
  %v1243 = vadd.f32 %v796, %v1242
  %v1244 = vpop.f32.mrb[0].mxu0
  %1245 = vmatprep.mubr.bf16.mxu0 %v491
  %1246 = vmatmul.mubr.bf16.gmra.mrb[0].mxu0 %v490
  %v1247 = vpop.f32.mrb[0].mxu0
  %v1248 = vadd.f32 %v796, %v1247
  %v1249 = vpop.f32.mrb[0].mxu0
  %v1250 = vpop.f32.mrb[0].mxu0
  %v1251 = vadd.f32 %v796, %v1250
  %v1252 = vpop.f32.mrb[0].mxu0
  %1253 = vmatprep.mubr.bf16.mxu0 %v498
  %1254 = vmatmul.mubr.bf16.gmra.mrb[0].mxu0 %v497
  %v1255 = vpop.f32.mrb[0].mxu0
  %v1256 = vadd.f32 %v796, %v1255
  %v1257 = vpop.f32.mrb[0].mxu0
  %v1258 = vpop.f32.mrb[0].mxu0
  %v1259 = vadd.f32 %v796, %v1258
  %v1260 = vpop.f32.mrb[0].mxu0
  %1261 = vmatprep.mubr.bf16.mxu0 %v505
  %1262 = vmatmul.mubr.bf16.gmra.mrb[0].mxu0 %v504
  %v1263 = vpop.f32.mrb[0].mxu0
  %v1264 = vadd.f32 %v796, %v1263
  %v1265 = vpop.f32.mrb[0].mxu0
  %v1266 = vpop.f32.mrb[0].mxu0
  %v1267 = vadd.f32 %v796, %v1266
  %v1268 = vpop.f32.mrb[0].mxu0
  %1269 = vmatprep.mubr.bf16.mxu0 %v512
  %1270 = vmatmul.mubr.bf16.gmra.mrb[0].mxu0 %v511
  %v1271 = vpop.f32.mrb[0].mxu0
  %v1272 = vadd.f32 %v796, %v1271
  %v1273 = vpop.f32.mrb[0].mxu0
  %v1274 = vpop.f32.mrb[0].mxu0
  %v1275 = vadd.f32 %v796, %v1274
  %v1276 = vpop.f32.mrb[0].mxu0
  %1277 = vmatprep.mubr.bf16.mxu0 %v519
  %1278 = vmatmul.mubr.bf16.gmra.mrb[0].mxu0 %v518
  %v1279 = vpop.f32.mrb[0].mxu0
  %v1280 = vadd.f32 %v796, %v1279
  %v1281 = vpop.f32.mrb[0].mxu0
  %v1282 = vpop.f32.mrb[0].mxu0
  %v1283 = vadd.f32 %v796, %v1282
  %v1284 = vpop.f32.mrb[0].mxu0
  %1285 = vmatprep.mubr.bf16.mxu0 %v526
  %1286 = vmatmul.mubr.bf16.gmra.mrb[0].mxu0 %v525
  %v1287 = vpop.f32.mrb[0].mxu0
  %v1288 = vadd.f32 %v796, %v1287
  %v1289 = vpop.f32.mrb[0].mxu0
  %v1290 = vpop.f32.mrb[0].mxu0
  %v1291 = vadd.f32 %v796, %v1290
  %v1292 = vpop.f32.mrb[0].mxu0
  %1293 = vmatprep.mubr.bf16.mxu0 %v533
  %1294 = vmatmul.mubr.bf16.gmra.mrb[0].mxu0 %v532
  %v1295 = vpop.f32.mrb[0].mxu0
  %v1296 = vadd.f32 %v796, %v1295
  %v1297 = vpop.f32.mrb[0].mxu0
  %v1298 = vpop.f32.mrb[0].mxu0
  %v1299 = vadd.f32 %v796, %v1298
  %v1300 = vpop.f32.mrb[0].mxu0
  %1301 = vmatprep.mubr.bf16.mxu0 %v540
  %1302 = vmatmul.mubr.bf16.gmra.mrb[0].mxu0 %v539
  %v1303 = vpop.f32.mrb[0].mxu0
  %v1304 = vadd.f32 %v796, %v1303
  %v1305 = vpop.f32.mrb[0].mxu0
  %v1306 = vpop.f32.mrb[0].mxu0
  %v1307 = vadd.f32 %v796, %v1306
  %v1308 = vpop.f32.mrb[0].mxu0
  %1309 = vmatprep.mubr.bf16.mxu0 %v547
  %1310 = vmatmul.mubr.bf16.gmra.mrb[0].mxu0 %v546
  %v1311 = vpop.f32.mrb[0].mxu0
  %v1312 = vadd.f32 %v796, %v1311
  %v1313 = vpop.f32.mrb[0].mxu0
  %v1314 = vpop.f32.mrb[0].mxu0
  %v1315 = vadd.f32 %v796, %v1314
  %v1316 = vpop.f32.mrb[0].mxu0
  %1317 = vmatprep.mubr.bf16.mxu0 %v554
  %1318 = vmatmul.mubr.bf16.gmra.mrb[0].mxu0 %v553
  %v1319 = vpop.f32.mrb[0].mxu0
  %v1320 = vadd.f32 %v796, %v1319
  %v1321 = vpop.f32.mrb[0].mxu0
  %v1322 = vpop.f32.mrb[0].mxu0
  %v1323 = vadd.f32 %v796, %v1322
  %v1324 = vpop.f32.mrb[0].mxu0
  %1325 = vmatprep.mubr.bf16.mxu0 %v561
  %1326 = vmatmul.mubr.bf16.gmra.mrb[0].mxu0 %v560
  %v1327 = vpop.f32.mrb[0].mxu0
  %v1328 = vadd.f32 %v796, %v1327
  %v1329 = vpop.f32.mrb[0].mxu0
  %v1330 = vpop.f32.mrb[0].mxu0
  %v1331 = vadd.f32 %v796, %v1330
  %v1332 = vpop.f32.mrb[0].mxu0
  %1333 = vmatprep.mubr.bf16.mxu0 %v568
  %1334 = vmatmul.mubr.bf16.gmra.mrb[0].mxu0 %v567
  %v1335 = vpop.f32.mrb[0].mxu0
  %v1336 = vadd.f32 %v796, %v1335
  %v1337 = vpop.f32.mrb[0].mxu0
  %v1338 = vpop.f32.mrb[0].mxu0
  %v1339 = vadd.f32 %v796, %v1338
  %v1340 = vpop.f32.mrb[0].mxu0
  %1341 = vmatprep.mubr.bf16.mxu0 %v575
  %1342 = vmatmul.mubr.bf16.gmra.mrb[0].mxu0 %v574
  %v1343 = vpop.f32.mrb[0].mxu0
  %v1344 = vadd.f32 %v796, %v1343
  %v1345 = vpop.f32.mrb[0].mxu0
  %v1346 = vpop.f32.mrb[0].mxu0
  %v1347 = vadd.f32 %v796, %v1346
  %v1348 = vpop.f32.mrb[0].mxu0
  %1349 = vmatprep.mubr.bf16.mxu0 %v582
  %1350 = vmatmul.mubr.bf16.gmra.mrb[0].mxu0 %v581
  %v1351 = vpop.f32.mrb[0].mxu0
  %v1352 = vadd.f32 %v796, %v1351
  %v1353 = vpop.f32.mrb[0].mxu0
  %v1354 = vpop.f32.mrb[0].mxu0
  %v1355 = vadd.f32 %v796, %v1354
  %v1356 = vpop.f32.mrb[0].mxu0
  %1357 = vmatprep.mubr.bf16.mxu0 %v589
  %1358 = vmatmul.mubr.bf16.gmra.mrb[0].mxu0 %v588
  %v1359 = vpop.f32.mrb[0].mxu0
  %v1360 = vadd.f32 %v796, %v1359
  %v1361 = vpop.f32.mrb[0].mxu0
  %v1362 = vpop.f32.mrb[0].mxu0
  %v1363 = vadd.f32 %v796, %v1362
  %v1364 = vpop.f32.mrb[0].mxu0
  %1365 = vmatprep.mubr.bf16.mxu0 %v596
  %1366 = vmatmul.mubr.bf16.gmra.mrb[0].mxu0 %v595
  %v1367 = vpop.f32.mrb[0].mxu0
  %v1368 = vadd.f32 %v796, %v1367
  %v1369 = vpop.f32.mrb[0].mxu0
  %v1370 = vpop.f32.mrb[0].mxu0
  %v1371 = vadd.f32 %v796, %v1370
  %v1372 = vpop.f32.mrb[0].mxu0
  %1373 = vmatprep.mubr.bf16.mxu0 %v603
  %1374 = vmatmul.mubr.bf16.gmra.mrb[0].mxu0 %v602
  %v1375 = vpop.f32.mrb[0].mxu0
  %v1376 = vadd.f32 %v796, %v1375
  %v1377 = vpop.f32.mrb[0].mxu0
  %v1378 = vpop.f32.mrb[0].mxu0
  %v1379 = vadd.f32 %v796, %v1378
  %v1380 = vpop.f32.mrb[0].mxu0
  %1381 = vmatprep.mubr.bf16.mxu0 %v610
  %1382 = vmatmul.mubr.bf16.gmra.mrb[0].mxu0 %v609
  %v1383 = vpop.f32.mrb[0].mxu0
  %v1384 = vadd.f32 %v796, %v1383
  %v1385 = vpop.f32.mrb[0].mxu0
  %v1386 = vpop.f32.mrb[0].mxu0
  %v1387 = vadd.f32 %v796, %v1386
  %v1388 = vpop.f32.mrb[0].mxu0
  %1389 = vmatprep.mubr.bf16.mxu0 %v617
  %1390 = vmatmul.mubr.bf16.gmra.mrb[0].mxu0 %v616
  %v1391 = vpop.f32.mrb[0].mxu0
  %v1392 = vadd.f32 %v796, %v1391
  %v1393 = vpop.f32.mrb[0].mxu0
  %v1394 = vpop.f32.mrb[0].mxu0
  %v1395 = vadd.f32 %v796, %v1394
  %v1396 = vpop.f32.mrb[0].mxu0
  %1397 = vmatprep.mubr.bf16.mxu0 %v624
  %1398 = vmatmul.mubr.bf16.gmra.mrb[0].mxu0 %v623
  %v1399 = vpop.f32.mrb[0].mxu0
  %v1400 = vadd.f32 %v796, %v1399
  %v1401 = vpop.f32.mrb[0].mxu0
  %v1402 = vpop.f32.mrb[0].mxu0
  %v1403 = vadd.f32 %v796, %v1402
  %v1404 = vpop.f32.mrb[0].mxu0
  %1405 = vmatprep.mubr.bf16.mxu0 %v631
  %1406 = vmatmul.mubr.bf16.gmra.mrb[0].mxu0 %v630
  %v1407 = vpop.f32.mrb[0].mxu0
  %v1408 = vadd.f32 %v796, %v1407
  %v1409 = vpop.f32.mrb[0].mxu0
  %v1410 = vpop.f32.mrb[0].mxu0
  %v1411 = vadd.f32 %v796, %v1410
  %v1412 = vpop.f32.mrb[0].mxu0
  %1413 = vmatprep.mubr.bf16.mxu0 %v638
  %1414 = vmatmul.mubr.bf16.gmra.mrb[0].mxu0 %v637
  %v1415 = vpop.f32.mrb[0].mxu0
  %v1416 = vadd.f32 %v796, %v1415
  %v1417 = vpop.f32.mrb[0].mxu0
  %v1418 = vpop.f32.mrb[0].mxu0
  %v1419 = vadd.f32 %v796, %v1418
  %v1420 = vpop.f32.mrb[0].mxu0
  %1421 = vmatprep.mubr.bf16.mxu0 %v645
  %1422 = vmatmul.mubr.bf16.gmra.mrb[0].mxu0 %v644
  %v1423 = vpop.f32.mrb[0].mxu0
  %v1424 = vadd.f32 %v796, %v1423
  %v1425 = vpop.f32.mrb[0].mxu0
  %v1426 = vpop.f32.mrb[0].mxu0
  %v1427 = vadd.f32 %v796, %v1426
  %v1428 = vpop.f32.mrb[0].mxu0
  %1429 = vmatprep.mubr.bf16.mxu0 %v652
  %1430 = vmatmul.mubr.bf16.gmra.mrb[0].mxu0 %v651
  %v1431 = vpop.f32.mrb[0].mxu0
  %v1432 = vadd.f32 %v796, %v1431
  %v1433 = vpop.f32.mrb[0].mxu0
  %v1434 = vpop.f32.mrb[0].mxu0
  %v1435 = vadd.f32 %v796, %v1434
  %v1436 = vpop.f32.mrb[0].mxu0
  %1437 = vmatprep.mubr.bf16.mxu0 %v659
  %1438 = vmatmul.mubr.bf16.gmra.mrb[0].mxu0 %v658
  %v1439 = vpop.f32.mrb[0].mxu0
  %v1440 = vadd.f32 %v796, %v1439
  %v1441 = vpop.f32.mrb[0].mxu0
  %v1442 = vpop.f32.mrb[0].mxu0
  %v1443 = vadd.f32 %v796, %v1442
  %v1444 = vpop.f32.mrb[0].mxu0
  %1445 = vmatprep.mubr.bf16.mxu0 %v666
  %1446 = vmatmul.mubr.bf16.gmra.mrb[0].mxu0 %v665
  %v1447 = vpop.f32.mrb[0].mxu0
  %v1448 = vadd.f32 %v796, %v1447
  %v1449 = vpop.f32.mrb[0].mxu0
  %v1450 = vpop.f32.mrb[0].mxu0
  %v1451 = vadd.f32 %v796, %v1450
  %v1452 = vpop.f32.mrb[0].mxu0
  %1453 = vmatprep.mubr.bf16.mxu0 %v673
  %1454 = vmatmul.mubr.bf16.gmra.mrb[0].mxu0 %v672
  %v1455 = vpop.f32.mrb[0].mxu0
  %v1456 = vadd.f32 %v796, %v1455
  %v1457 = vpop.f32.mrb[0].mxu0
  %v1458 = vpop.f32.mrb[0].mxu0
  %v1459 = vadd.f32 %v796, %v1458
  %v1460 = vpop.f32.mrb[0].mxu0
  %1461 = vmatprep.mubr.bf16.mxu0 %v680
  %1462 = vmatmul.mubr.bf16.gmra.mrb[0].mxu0 %v679
  %v1463 = vpop.f32.mrb[0].mxu0
  %v1464 = vadd.f32 %v796, %v1463
  %v1465 = vpop.f32.mrb[0].mxu0
  %v1466 = vpop.f32.mrb[0].mxu0
  %v1467 = vadd.f32 %v796, %v1466
  %v1468 = vpop.f32.mrb[0].mxu0
  %1469 = vmatprep.mubr.bf16.mxu0 %v687
  %1470 = vmatmul.mubr.bf16.gmra.mrb[0].mxu0 %v686
  %v1471 = vpop.f32.mrb[0].mxu0
  %v1472 = vadd.f32 %v796, %v1471
  %v1473 = vpop.f32.mrb[0].mxu0
  %v1474 = vpop.f32.mrb[0].mxu0
  %v1475 = vadd.f32 %v796, %v1474
  %v1476 = vpop.f32.mrb[0].mxu0
  %1477 = vdwg.mxu0
  %1478 = vmatprep.subr.bf16.mxu0 0
  %1479 = vmatpush1.bf16.msra.mxu0 %v1010
  %1480 = vmatprep.subr.bf16.mxu0 0
  %1481 = vmatpush1.bf16.msra.mxu0 %v1011
  %1482 = vmatprep.subr.bf16.mxu0 0
  %1483 = vmatpush1.bf16.msra.mxu0 %v1012
  %1484 = vmatprep.subr.bf16.mxu0 0
  %1485 = vmatpush1.bf16.msra.mxu0 %v1013
  %1486 = vmatprep.subr.bf16.mxu0 0
  %1487 = vmatpush1.bf16.msra.mxu0 %v1014
  %1488 = vmatprep.subr.bf16.mxu0 0
  %1489 = vmatpush1.bf16.msra.mxu0 %v1015
  %1490 = vmatprep.subr.bf16.mxu0 0
  %1491 = vmatpush1.bf16.msra.mxu0 %v1016
  %1492 = vmatprep.subr.bf16.mxu0 0
  %1493 = vmatpush1.bf16.msra.mxu0 %v1017
  %1494 = vmatprep.subr.bf16.mxu0 0
  %1495 = vmatpush1.bf16.msra.mxu0 %v1018
  %1496 = vmatprep.subr.bf16.mxu0 0
  %1497 = vmatpush1.bf16.msra.mxu0 %v1019
  %1498 = vmatprep.subr.bf16.mxu0 0
  %1499 = vmatpush1.bf16.msra.mxu0 %v1020
  %1500 = vmatprep.subr.bf16.mxu0 0
  %1501 = vmatpush1.bf16.msra.mxu0 %v1021
  %1502 = vmatprep.subr.bf16.mxu0 0
  %1503 = vmatpush1.bf16.msra.mxu0 %v1022
  %1504 = vmatprep.subr.bf16.mxu0 0
  %1505 = vmatpush1.bf16.msra.mxu0 %v1023
  %1506 = vmatprep.subr.bf16.mxu0 0
  %1507 = vmatpush1.bf16.msra.mxu0 %v1024
  %1508 = vmatprep.subr.bf16.mxu0 0
  %1509 = vmatpush1.bf16.msra.mxu0 %v1025
  %1510 = vmatprep.mubr.bf16.mxu0 %v472
  %1511 = vmatmul.mubr.bf16.gmra.mrb[0].mxu0 %v471
  %v1512 = vpop.f32.mrb[0].mxu0
  %v1513 = vadd.f32 %v1224, %v1512
  %v1514 = vpop.f32.mrb[0].mxu0
  %v1515 = vpop.f32.mrb[0].mxu0
  %v1516 = vadd.f32 %v1227, %v1515
  %v1517 = vpop.f32.mrb[0].mxu0
  %1518 = vmatprep.mubr.bf16.mxu0 %v479
  %1519 = vmatmul.mubr.bf16.gmra.mrb[0].mxu0 %v478
  %v1520 = vpop.f32.mrb[0].mxu0
  %v1521 = vadd.f32 %v1232, %v1520
  %v1522 = vpop.f32.mrb[0].mxu0
  %v1523 = vpop.f32.mrb[0].mxu0
  %v1524 = vadd.f32 %v1235, %v1523
  %v1525 = vpop.f32.mrb[0].mxu0
  %1526 = vmatprep.mubr.bf16.mxu0 %v486
  %1527 = vmatmul.mubr.bf16.gmra.mrb[0].mxu0 %v485
  %v1528 = vpop.f32.mrb[0].mxu0
  %v1529 = vadd.f32 %v1240, %v1528
  %v1530 = vpop.f32.mrb[0].mxu0
  %v1531 = vpop.f32.mrb[0].mxu0
  %v1532 = vadd.f32 %v1243, %v1531
  %v1533 = vpop.f32.mrb[0].mxu0
  %1534 = vmatprep.mubr.bf16.mxu0 %v493
  %1535 = vmatmul.mubr.bf16.gmra.mrb[0].mxu0 %v492
  %v1536 = vpop.f32.mrb[0].mxu0
  %v1537 = vadd.f32 %v1248, %v1536
  %v1538 = vpop.f32.mrb[0].mxu0
  %v1539 = vpop.f32.mrb[0].mxu0
  %v1540 = vadd.f32 %v1251, %v1539
  %v1541 = vpop.f32.mrb[0].mxu0
  %1542 = vmatprep.mubr.bf16.mxu0 %v500
  %1543 = vmatmul.mubr.bf16.gmra.mrb[0].mxu0 %v499
  %v1544 = vpop.f32.mrb[0].mxu0
  %v1545 = vadd.f32 %v1256, %v1544
  %v1546 = vpop.f32.mrb[0].mxu0
  %v1547 = vpop.f32.mrb[0].mxu0
  %v1548 = vadd.f32 %v1259, %v1547
  %v1549 = vpop.f32.mrb[0].mxu0
  %1550 = vmatprep.mubr.bf16.mxu0 %v507
  %1551 = vmatmul.mubr.bf16.gmra.mrb[0].mxu0 %v506
  %v1552 = vpop.f32.mrb[0].mxu0
  %v1553 = vadd.f32 %v1264, %v1552
  %v1554 = vpop.f32.mrb[0].mxu0
  %v1555 = vpop.f32.mrb[0].mxu0
  %v1556 = vadd.f32 %v1267, %v1555
  %v1557 = vpop.f32.mrb[0].mxu0
  %1558 = vmatprep.mubr.bf16.mxu0 %v514
  %1559 = vmatmul.mubr.bf16.gmra.mrb[0].mxu0 %v513
  %v1560 = vpop.f32.mrb[0].mxu0
  %v1561 = vadd.f32 %v1272, %v1560
  %v1562 = vpop.f32.mrb[0].mxu0
  %v1563 = vpop.f32.mrb[0].mxu0
  %v1564 = vadd.f32 %v1275, %v1563
  %v1565 = vpop.f32.mrb[0].mxu0
  %1566 = vmatprep.mubr.bf16.mxu0 %v521
  %1567 = vmatmul.mubr.bf16.gmra.mrb[0].mxu0 %v520
  %v1568 = vpop.f32.mrb[0].mxu0
  %v1569 = vadd.f32 %v1280, %v1568
  %v1570 = vpop.f32.mrb[0].mxu0
  %v1571 = vpop.f32.mrb[0].mxu0
  %v1572 = vadd.f32 %v1283, %v1571
  %v1573 = vpop.f32.mrb[0].mxu0
  %1574 = vmatprep.mubr.bf16.mxu0 %v528
  %1575 = vmatmul.mubr.bf16.gmra.mrb[0].mxu0 %v527
  %v1576 = vpop.f32.mrb[0].mxu0
  %v1577 = vadd.f32 %v1288, %v1576
  %v1578 = vpop.f32.mrb[0].mxu0
  %v1579 = vpop.f32.mrb[0].mxu0
  %v1580 = vadd.f32 %v1291, %v1579
  %v1581 = vpop.f32.mrb[0].mxu0
  %1582 = vmatprep.mubr.bf16.mxu0 %v535
  %1583 = vmatmul.mubr.bf16.gmra.mrb[0].mxu0 %v534
  %v1584 = vpop.f32.mrb[0].mxu0
  %v1585 = vadd.f32 %v1296, %v1584
  %v1586 = vpop.f32.mrb[0].mxu0
  %v1587 = vpop.f32.mrb[0].mxu0
  %v1588 = vadd.f32 %v1299, %v1587
  %v1589 = vpop.f32.mrb[0].mxu0
  %1590 = vmatprep.mubr.bf16.mxu0 %v542
  %1591 = vmatmul.mubr.bf16.gmra.mrb[0].mxu0 %v541
  %v1592 = vpop.f32.mrb[0].mxu0
  %v1593 = vadd.f32 %v1304, %v1592
  %v1594 = vpop.f32.mrb[0].mxu0
  %v1595 = vpop.f32.mrb[0].mxu0
  %v1596 = vadd.f32 %v1307, %v1595
  %v1597 = vpop.f32.mrb[0].mxu0
  %1598 = vmatprep.mubr.bf16.mxu0 %v549
  %1599 = vmatmul.mubr.bf16.gmra.mrb[0].mxu0 %v548
  %v1600 = vpop.f32.mrb[0].mxu0
  %v1601 = vadd.f32 %v1312, %v1600
  %v1602 = vpop.f32.mrb[0].mxu0
  %v1603 = vpop.f32.mrb[0].mxu0
  %v1604 = vadd.f32 %v1315, %v1603
  %v1605 = vpop.f32.mrb[0].mxu0
  %1606 = vmatprep.mubr.bf16.mxu0 %v556
  %1607 = vmatmul.mubr.bf16.gmra.mrb[0].mxu0 %v555
  %v1608 = vpop.f32.mrb[0].mxu0
  %v1609 = vadd.f32 %v1320, %v1608
  %v1610 = vpop.f32.mrb[0].mxu0
  %v1611 = vpop.f32.mrb[0].mxu0
  %v1612 = vadd.f32 %v1323, %v1611
  %v1613 = vpop.f32.mrb[0].mxu0
  %1614 = vmatprep.mubr.bf16.mxu0 %v563
  %1615 = vmatmul.mubr.bf16.gmra.mrb[0].mxu0 %v562
  %v1616 = vpop.f32.mrb[0].mxu0
  %v1617 = vadd.f32 %v1328, %v1616
  %v1618 = vpop.f32.mrb[0].mxu0
  %v1619 = vpop.f32.mrb[0].mxu0
  %v1620 = vadd.f32 %v1331, %v1619
  %v1621 = vpop.f32.mrb[0].mxu0
  %1622 = vmatprep.mubr.bf16.mxu0 %v570
  %1623 = vmatmul.mubr.bf16.gmra.mrb[0].mxu0 %v569
  %v1624 = vpop.f32.mrb[0].mxu0
  %v1625 = vadd.f32 %v1336, %v1624
  %v1626 = vpop.f32.mrb[0].mxu0
  %v1627 = vpop.f32.mrb[0].mxu0
  %v1628 = vadd.f32 %v1339, %v1627
  %v1629 = vpop.f32.mrb[0].mxu0
  %1630 = vmatprep.mubr.bf16.mxu0 %v577
  %1631 = vmatmul.mubr.bf16.gmra.mrb[0].mxu0 %v576
  %v1632 = vpop.f32.mrb[0].mxu0
  %v1633 = vadd.f32 %v1344, %v1632
  %v1634 = vpop.f32.mrb[0].mxu0
  %v1635 = vpop.f32.mrb[0].mxu0
  %v1636 = vadd.f32 %v1347, %v1635
  %v1637 = vpop.f32.mrb[0].mxu0
  %1638 = vmatprep.mubr.bf16.mxu0 %v584
  %1639 = vmatmul.mubr.bf16.gmra.mrb[0].mxu0 %v583
  %v1640 = vpop.f32.mrb[0].mxu0
  %v1641 = vadd.f32 %v1352, %v1640
  %v1642 = vpop.f32.mrb[0].mxu0
  %v1643 = vpop.f32.mrb[0].mxu0
  %v1644 = vadd.f32 %v1355, %v1643
  %v1645 = vpop.f32.mrb[0].mxu0
  %1646 = vmatprep.mubr.bf16.mxu0 %v591
  %1647 = vmatmul.mubr.bf16.gmra.mrb[0].mxu0 %v590
  %v1648 = vpop.f32.mrb[0].mxu0
  %v1649 = vadd.f32 %v1360, %v1648
  %v1650 = vpop.f32.mrb[0].mxu0
  %v1651 = vpop.f32.mrb[0].mxu0
  %v1652 = vadd.f32 %v1363, %v1651
  %v1653 = vpop.f32.mrb[0].mxu0
  %1654 = vmatprep.mubr.bf16.mxu0 %v598
  %1655 = vmatmul.mubr.bf16.gmra.mrb[0].mxu0 %v597
  %v1656 = vpop.f32.mrb[0].mxu0
  %v1657 = vadd.f32 %v1368, %v1656
  %v1658 = vpop.f32.mrb[0].mxu0
  %v1659 = vpop.f32.mrb[0].mxu0
  %v1660 = vadd.f32 %v1371, %v1659
  %v1661 = vpop.f32.mrb[0].mxu0
  %1662 = vmatprep.mubr.bf16.mxu0 %v605
  %1663 = vmatmul.mubr.bf16.gmra.mrb[0].mxu0 %v604
  %v1664 = vpop.f32.mrb[0].mxu0
  %v1665 = vadd.f32 %v1376, %v1664
  %v1666 = vpop.f32.mrb[0].mxu0
  %v1667 = vpop.f32.mrb[0].mxu0
  %v1668 = vadd.f32 %v1379, %v1667
  %v1669 = vpop.f32.mrb[0].mxu0
  %1670 = vmatprep.mubr.bf16.mxu0 %v612
  %1671 = vmatmul.mubr.bf16.gmra.mrb[0].mxu0 %v611
  %v1672 = vpop.f32.mrb[0].mxu0
  %v1673 = vadd.f32 %v1384, %v1672
  %v1674 = vpop.f32.mrb[0].mxu0
  %v1675 = vpop.f32.mrb[0].mxu0
  %v1676 = vadd.f32 %v1387, %v1675
  %v1677 = vpop.f32.mrb[0].mxu0
  %1678 = vmatprep.mubr.bf16.mxu0 %v619
  %1679 = vmatmul.mubr.bf16.gmra.mrb[0].mxu0 %v618
  %v1680 = vpop.f32.mrb[0].mxu0
  %v1681 = vadd.f32 %v1392, %v1680
  %v1682 = vpop.f32.mrb[0].mxu0
  %v1683 = vpop.f32.mrb[0].mxu0
  %v1684 = vadd.f32 %v1395, %v1683
  %v1685 = vpop.f32.mrb[0].mxu0
  %1686 = vmatprep.mubr.bf16.mxu0 %v626
  %1687 = vmatmul.mubr.bf16.gmra.mrb[0].mxu0 %v625
  %v1688 = vpop.f32.mrb[0].mxu0
  %v1689 = vadd.f32 %v1400, %v1688
  %v1690 = vpop.f32.mrb[0].mxu0
  %v1691 = vpop.f32.mrb[0].mxu0
  %v1692 = vadd.f32 %v1403, %v1691
  %v1693 = vpop.f32.mrb[0].mxu0
  %1694 = vmatprep.mubr.bf16.mxu0 %v633
  %1695 = vmatmul.mubr.bf16.gmra.mrb[0].mxu0 %v632
  %v1696 = vpop.f32.mrb[0].mxu0
  %v1697 = vadd.f32 %v1408, %v1696
  %v1698 = vpop.f32.mrb[0].mxu0
  %v1699 = vpop.f32.mrb[0].mxu0
  %v1700 = vadd.f32 %v1411, %v1699
  %v1701 = vpop.f32.mrb[0].mxu0
  %1702 = vmatprep.mubr.bf16.mxu0 %v640
  %1703 = vmatmul.mubr.bf16.gmra.mrb[0].mxu0 %v639
  %v1704 = vpop.f32.mrb[0].mxu0
  %v1705 = vadd.f32 %v1416, %v1704
  %v1706 = vpop.f32.mrb[0].mxu0
  %v1707 = vpop.f32.mrb[0].mxu0
  %v1708 = vadd.f32 %v1419, %v1707
  %v1709 = vpop.f32.mrb[0].mxu0
  %1710 = vmatprep.mubr.bf16.mxu0 %v647
  %1711 = vmatmul.mubr.bf16.gmra.mrb[0].mxu0 %v646
  %v1712 = vpop.f32.mrb[0].mxu0
  %v1713 = vadd.f32 %v1424, %v1712
  %v1714 = vpop.f32.mrb[0].mxu0
  %v1715 = vpop.f32.mrb[0].mxu0
  %v1716 = vadd.f32 %v1427, %v1715
  %v1717 = vpop.f32.mrb[0].mxu0
  %1718 = vmatprep.mubr.bf16.mxu0 %v654
  %1719 = vmatmul.mubr.bf16.gmra.mrb[0].mxu0 %v653
  %v1720 = vpop.f32.mrb[0].mxu0
  %v1721 = vadd.f32 %v1432, %v1720
  %v1722 = vpop.f32.mrb[0].mxu0
  %v1723 = vpop.f32.mrb[0].mxu0
  %v1724 = vadd.f32 %v1435, %v1723
  %v1725 = vpop.f32.mrb[0].mxu0
  %1726 = vmatprep.mubr.bf16.mxu0 %v661
  %1727 = vmatmul.mubr.bf16.gmra.mrb[0].mxu0 %v660
  %v1728 = vpop.f32.mrb[0].mxu0
  %v1729 = vadd.f32 %v1440, %v1728
  %v1730 = vpop.f32.mrb[0].mxu0
  %v1731 = vpop.f32.mrb[0].mxu0
  %v1732 = vadd.f32 %v1443, %v1731
  %v1733 = vpop.f32.mrb[0].mxu0
  %1734 = vmatprep.mubr.bf16.mxu0 %v668
  %1735 = vmatmul.mubr.bf16.gmra.mrb[0].mxu0 %v667
  %v1736 = vpop.f32.mrb[0].mxu0
  %v1737 = vadd.f32 %v1448, %v1736
  %v1738 = vpop.f32.mrb[0].mxu0
  %v1739 = vpop.f32.mrb[0].mxu0
  %v1740 = vadd.f32 %v1451, %v1739
  %v1741 = vpop.f32.mrb[0].mxu0
  %1742 = vmatprep.mubr.bf16.mxu0 %v675
  %1743 = vmatmul.mubr.bf16.gmra.mrb[0].mxu0 %v674
  %v1744 = vpop.f32.mrb[0].mxu0
  %v1745 = vadd.f32 %v1456, %v1744
  %v1746 = vpop.f32.mrb[0].mxu0
  %v1747 = vpop.f32.mrb[0].mxu0
  %v1748 = vadd.f32 %v1459, %v1747
  %v1749 = vpop.f32.mrb[0].mxu0
  %1750 = vmatprep.mubr.bf16.mxu0 %v682
  %1751 = vmatmul.mubr.bf16.gmra.mrb[0].mxu0 %v681
  %v1752 = vpop.f32.mrb[0].mxu0
  %v1753 = vadd.f32 %v1464, %v1752
  %v1754 = vpop.f32.mrb[0].mxu0
  %v1755 = vpop.f32.mrb[0].mxu0
  %v1756 = vadd.f32 %v1467, %v1755
  %v1757 = vpop.f32.mrb[0].mxu0
  %1758 = vmatprep.mubr.bf16.mxu0 %v689
  %1759 = vmatmul.mubr.bf16.gmra.mrb[0].mxu0 %v688
  %v1760 = vpop.f32.mrb[0].mxu0
  %v1761 = vadd.f32 %v1472, %v1760
  %v1762 = vpop.f32.mrb[0].mxu0
  %v1763 = vpop.f32.mrb[0].mxu0
  %v1764 = vadd.f32 %v1475, %v1763
  %v1765 = vpop.f32.mrb[0].mxu0
  %1766 = vdwg.mxu0
  %1767 = vmatprep.subr.bf16.mxu0 0
  %1768 = vmatpush1.bf16.msra.mxu0 %v1026
  %1769 = vmatprep.subr.bf16.mxu0 0
  %1770 = vmatpush1.bf16.msra.mxu0 %v1027
  %1771 = vmatprep.subr.bf16.mxu0 0
  %1772 = vmatpush1.bf16.msra.mxu0 %v1028
  %1773 = vmatprep.subr.bf16.mxu0 0
  %1774 = vmatpush1.bf16.msra.mxu0 %v1029
  %1775 = vmatprep.subr.bf16.mxu0 0
  %1776 = vmatpush1.bf16.msra.mxu0 %v1030
  %1777 = vmatprep.subr.bf16.mxu0 0
  %1778 = vmatpush1.bf16.msra.mxu0 %v1031
  %1779 = vmatprep.subr.bf16.mxu0 0
  %1780 = vmatpush1.bf16.msra.mxu0 %v1032
  %1781 = vmatprep.subr.bf16.mxu0 0
  %1782 = vmatpush1.bf16.msra.mxu0 %v1033
  %1783 = vmatprep.subr.bf16.mxu0 0
  %1784 = vmatpush1.bf16.msra.mxu0 %v1034
  %1785 = vmatprep.subr.bf16.mxu0 0
  %1786 = vmatpush1.bf16.msra.mxu0 %v1035
  %1787 = vmatprep.subr.bf16.mxu0 0
  %1788 = vmatpush1.bf16.msra.mxu0 %v1036
  %1789 = vmatprep.subr.bf16.mxu0 0
  %1790 = vmatpush1.bf16.msra.mxu0 %v1037
  %1791 = vmatprep.subr.bf16.mxu0 0
  %1792 = vmatpush1.bf16.msra.mxu0 %v1038
  %1793 = vmatprep.subr.bf16.mxu0 0
  %1794 = vmatpush1.bf16.msra.mxu0 %v1039
  %1795 = vmatprep.subr.bf16.mxu0 0
  %1796 = vmatpush1.bf16.msra.mxu0 %v1040
  %1797 = vmatprep.subr.bf16.mxu0 0
  %1798 = vmatpush1.bf16.msra.mxu0 %v1041
  %1799 = vmatprep.mubr.bf16.mxu0 %v474
  %1800 = vmatmul.mubr.bf16.gmra.mrb[0].mxu0 %v473
  %v1801 = vpop.f32.mrb[0].mxu0
  %v1802 = vadd.f32 %v1513, %v1801
  %v1803 = vpop.f32.mrb[0].mxu0
  %v1804 = vpop.f32.mrb[0].mxu0
  %v1805 = vadd.f32 %v1516, %v1804
  %v1806 = vpop.f32.mrb[0].mxu0
  %1807 = vmatprep.mubr.bf16.mxu0 %v481
  %1808 = vmatmul.mubr.bf16.gmra.mrb[0].mxu0 %v480
  %v1809 = vpop.f32.mrb[0].mxu0
  %v1810 = vadd.f32 %v1521, %v1809
  %v1811 = vpop.f32.mrb[0].mxu0
  %v1812 = vpop.f32.mrb[0].mxu0
  %v1813 = vadd.f32 %v1524, %v1812
  %v1814 = vpop.f32.mrb[0].mxu0
  %1815 = vmatprep.mubr.bf16.mxu0 %v488
  %1816 = vmatmul.mubr.bf16.gmra.mrb[0].mxu0 %v487
  %v1817 = vpop.f32.mrb[0].mxu0
  %v1818 = vadd.f32 %v1529, %v1817
  %v1819 = vpop.f32.mrb[0].mxu0
  %v1820 = vpop.f32.mrb[0].mxu0
  %v1821 = vadd.f32 %v1532, %v1820
  %v1822 = vpop.f32.mrb[0].mxu0
  %1823 = vmatprep.mubr.bf16.mxu0 %v495
  %1824 = vmatmul.mubr.bf16.gmra.mrb[0].mxu0 %v494
  %v1825 = vpop.f32.mrb[0].mxu0
  %v1826 = vadd.f32 %v1537, %v1825
  %v1827 = vpop.f32.mrb[0].mxu0
  %v1828 = vpop.f32.mrb[0].mxu0
  %v1829 = vadd.f32 %v1540, %v1828
  %v1830 = vpop.f32.mrb[0].mxu0
  %1831 = vmatprep.mubr.bf16.mxu0 %v502
  %1832 = vmatmul.mubr.bf16.gmra.mrb[0].mxu0 %v501
  %v1833 = vpop.f32.mrb[0].mxu0
  %v1834 = vadd.f32 %v1545, %v1833
  %v1835 = vpop.f32.mrb[0].mxu0
  %v1836 = vpop.f32.mrb[0].mxu0
  %v1837 = vadd.f32 %v1548, %v1836
  %v1838 = vpop.f32.mrb[0].mxu0
  %1839 = vmatprep.mubr.bf16.mxu0 %v509
  %1840 = vmatmul.mubr.bf16.gmra.mrb[0].mxu0 %v508
  %v1841 = vpop.f32.mrb[0].mxu0
  %v1842 = vadd.f32 %v1553, %v1841
  %v1843 = vpop.f32.mrb[0].mxu0
  %v1844 = vpop.f32.mrb[0].mxu0
  %v1845 = vadd.f32 %v1556, %v1844
  %v1846 = vpop.f32.mrb[0].mxu0
  %1847 = vmatprep.mubr.bf16.mxu0 %v516
  %1848 = vmatmul.mubr.bf16.gmra.mrb[0].mxu0 %v515
  %v1849 = vpop.f32.mrb[0].mxu0
  %v1850 = vadd.f32 %v1561, %v1849
  %v1851 = vpop.f32.mrb[0].mxu0
  %v1852 = vpop.f32.mrb[0].mxu0
  %v1853 = vadd.f32 %v1564, %v1852
  %v1854 = vpop.f32.mrb[0].mxu0
  %1855 = vmatprep.mubr.bf16.mxu0 %v523
  %1856 = vmatmul.mubr.bf16.gmra.mrb[0].mxu0 %v522
  %v1857 = vpop.f32.mrb[0].mxu0
  %v1858 = vadd.f32 %v1569, %v1857
  %v1859 = vpop.f32.mrb[0].mxu0
  %v1860 = vpop.f32.mrb[0].mxu0
  %v1861 = vadd.f32 %v1572, %v1860
  %v1862 = vpop.f32.mrb[0].mxu0
  %1863 = vmatprep.mubr.bf16.mxu0 %v530
  %1864 = vmatmul.mubr.bf16.gmra.mrb[0].mxu0 %v529
  %v1865 = vpop.f32.mrb[0].mxu0
  %v1866 = vadd.f32 %v1577, %v1865
  %v1867 = vpop.f32.mrb[0].mxu0
  %v1868 = vpop.f32.mrb[0].mxu0
  %v1869 = vadd.f32 %v1580, %v1868
  %v1870 = vpop.f32.mrb[0].mxu0
  %1871 = vmatprep.mubr.bf16.mxu0 %v537
  %1872 = vmatmul.mubr.bf16.gmra.mrb[0].mxu0 %v536
  %v1873 = vpop.f32.mrb[0].mxu0
  %v1874 = vadd.f32 %v1585, %v1873
  %v1875 = vpop.f32.mrb[0].mxu0
  %v1876 = vpop.f32.mrb[0].mxu0
  %v1877 = vadd.f32 %v1588, %v1876
  %v1878 = vpop.f32.mrb[0].mxu0
  %1879 = vmatprep.mubr.bf16.mxu0 %v544
  %1880 = vmatmul.mubr.bf16.gmra.mrb[0].mxu0 %v543
  %v1881 = vpop.f32.mrb[0].mxu0
  %v1882 = vadd.f32 %v1593, %v1881
  %v1883 = vpop.f32.mrb[0].mxu0
  %v1884 = vpop.f32.mrb[0].mxu0
  %v1885 = vadd.f32 %v1596, %v1884
  %v1886 = vpop.f32.mrb[0].mxu0
  %1887 = vmatprep.mubr.bf16.mxu0 %v551
  %1888 = vmatmul.mubr.bf16.gmra.mrb[0].mxu0 %v550
  %v1889 = vpop.f32.mrb[0].mxu0
  %v1890 = vadd.f32 %v1601, %v1889
  %v1891 = vpop.f32.mrb[0].mxu0
  %v1892 = vpop.f32.mrb[0].mxu0
  %v1893 = vadd.f32 %v1604, %v1892
  %v1894 = vpop.f32.mrb[0].mxu0
  %1895 = vmatprep.mubr.bf16.mxu0 %v558
  %1896 = vmatmul.mubr.bf16.gmra.mrb[0].mxu0 %v557
  %v1897 = vpop.f32.mrb[0].mxu0
  %v1898 = vadd.f32 %v1609, %v1897
  %v1899 = vpop.f32.mrb[0].mxu0
  %v1900 = vpop.f32.mrb[0].mxu0
  %v1901 = vadd.f32 %v1612, %v1900
  %v1902 = vpop.f32.mrb[0].mxu0
  %1903 = vmatprep.mubr.bf16.mxu0 %v565
  %1904 = vmatmul.mubr.bf16.gmra.mrb[0].mxu0 %v564
  %v1905 = vpop.f32.mrb[0].mxu0
  %v1906 = vadd.f32 %v1617, %v1905
  %v1907 = vpop.f32.mrb[0].mxu0
  %v1908 = vpop.f32.mrb[0].mxu0
  %v1909 = vadd.f32 %v1620, %v1908
  %v1910 = vpop.f32.mrb[0].mxu0
  %1911 = vmatprep.mubr.bf16.mxu0 %v572
  %1912 = vmatmul.mubr.bf16.gmra.mrb[0].mxu0 %v571
  %v1913 = vpop.f32.mrb[0].mxu0
  %v1914 = vadd.f32 %v1625, %v1913
  %v1915 = vpop.f32.mrb[0].mxu0
  %v1916 = vpop.f32.mrb[0].mxu0
  %v1917 = vadd.f32 %v1628, %v1916
  %v1918 = vpop.f32.mrb[0].mxu0
  %1919 = vmatprep.mubr.bf16.mxu0 %v579
  %1920 = vmatmul.mubr.bf16.gmra.mrb[0].mxu0 %v578
  %v1921 = vpop.f32.mrb[0].mxu0
  %v1922 = vadd.f32 %v1633, %v1921
  %v1923 = vpop.f32.mrb[0].mxu0
  %v1924 = vpop.f32.mrb[0].mxu0
  %v1925 = vadd.f32 %v1636, %v1924
  %v1926 = vpop.f32.mrb[0].mxu0
  %1927 = vmatprep.mubr.bf16.mxu0 %v586
  %1928 = vmatmul.mubr.bf16.gmra.mrb[0].mxu0 %v585
  %v1929 = vpop.f32.mrb[0].mxu0
  %v1930 = vadd.f32 %v1641, %v1929
  %v1931 = vpop.f32.mrb[0].mxu0
  %v1932 = vpop.f32.mrb[0].mxu0
  %v1933 = vadd.f32 %v1644, %v1932
  %v1934 = vpop.f32.mrb[0].mxu0
  %1935 = vmatprep.mubr.bf16.mxu0 %v593
  %1936 = vmatmul.mubr.bf16.gmra.mrb[0].mxu0 %v592
  %v1937 = vpop.f32.mrb[0].mxu0
  %v1938 = vadd.f32 %v1649, %v1937
  %v1939 = vpop.f32.mrb[0].mxu0
  %v1940 = vpop.f32.mrb[0].mxu0
  %v1941 = vadd.f32 %v1652, %v1940
  %v1942 = vpop.f32.mrb[0].mxu0
  %1943 = vmatprep.mubr.bf16.mxu0 %v600
  %1944 = vmatmul.mubr.bf16.gmra.mrb[0].mxu0 %v599
  %v1945 = vpop.f32.mrb[0].mxu0
  %v1946 = vadd.f32 %v1657, %v1945
  %v1947 = vpop.f32.mrb[0].mxu0
  %v1948 = vpop.f32.mrb[0].mxu0
  %v1949 = vadd.f32 %v1660, %v1948
  %v1950 = vpop.f32.mrb[0].mxu0
  %1951 = vmatprep.mubr.bf16.mxu0 %v607
  %1952 = vmatmul.mubr.bf16.gmra.mrb[0].mxu0 %v606
  %v1953 = vpop.f32.mrb[0].mxu0
  %v1954 = vadd.f32 %v1665, %v1953
  %v1955 = vpop.f32.mrb[0].mxu0
  %v1956 = vpop.f32.mrb[0].mxu0
  %v1957 = vadd.f32 %v1668, %v1956
  %v1958 = vpop.f32.mrb[0].mxu0
  %1959 = vmatprep.mubr.bf16.mxu0 %v614
  %1960 = vmatmul.mubr.bf16.gmra.mrb[0].mxu0 %v613
  %v1961 = vpop.f32.mrb[0].mxu0
  %v1962 = vadd.f32 %v1673, %v1961
  %v1963 = vpop.f32.mrb[0].mxu0
  %v1964 = vpop.f32.mrb[0].mxu0
  %v1965 = vadd.f32 %v1676, %v1964
  %v1966 = vpop.f32.mrb[0].mxu0
  %1967 = vmatprep.mubr.bf16.mxu0 %v621
  %1968 = vmatmul.mubr.bf16.gmra.mrb[0].mxu0 %v620
  %v1969 = vpop.f32.mrb[0].mxu0
  %v1970 = vadd.f32 %v1681, %v1969
  %v1971 = vpop.f32.mrb[0].mxu0
  %v1972 = vpop.f32.mrb[0].mxu0
  %v1973 = vadd.f32 %v1684, %v1972
  %v1974 = vpop.f32.mrb[0].mxu0
  %1975 = vmatprep.mubr.bf16.mxu0 %v628
  %1976 = vmatmul.mubr.bf16.gmra.mrb[0].mxu0 %v627
  %v1977 = vpop.f32.mrb[0].mxu0
  %v1978 = vadd.f32 %v1689, %v1977
  %v1979 = vpop.f32.mrb[0].mxu0
  %v1980 = vpop.f32.mrb[0].mxu0
  %v1981 = vadd.f32 %v1692, %v1980
  %v1982 = vpop.f32.mrb[0].mxu0
  %1983 = vmatprep.mubr.bf16.mxu0 %v635
  %1984 = vmatmul.mubr.bf16.gmra.mrb[0].mxu0 %v634
  %v1985 = vpop.f32.mrb[0].mxu0
  %v1986 = vadd.f32 %v1697, %v1985
  %v1987 = vpop.f32.mrb[0].mxu0
  %v1988 = vpop.f32.mrb[0].mxu0
  %v1989 = vadd.f32 %v1700, %v1988
  %v1990 = vpop.f32.mrb[0].mxu0
  %1991 = vmatprep.mubr.bf16.mxu0 %v642
  %1992 = vmatmul.mubr.bf16.gmra.mrb[0].mxu0 %v641
  %v1993 = vpop.f32.mrb[0].mxu0
  %v1994 = vadd.f32 %v1705, %v1993
  %v1995 = vpop.f32.mrb[0].mxu0
  %v1996 = vpop.f32.mrb[0].mxu0
  %v1997 = vadd.f32 %v1708, %v1996
  %v1998 = vpop.f32.mrb[0].mxu0
  %1999 = vmatprep.mubr.bf16.mxu0 %v649
  %2000 = vmatmul.mubr.bf16.gmra.mrb[0].mxu0 %v648
  %v2001 = vpop.f32.mrb[0].mxu0
  %v2002 = vadd.f32 %v1713, %v2001
  %v2003 = vpop.f32.mrb[0].mxu0
  %v2004 = vpop.f32.mrb[0].mxu0
  %v2005 = vadd.f32 %v1716, %v2004
  %v2006 = vpop.f32.mrb[0].mxu0
  %2007 = vmatprep.mubr.bf16.mxu0 %v656
  %2008 = vmatmul.mubr.bf16.gmra.mrb[0].mxu0 %v655
  %v2009 = vpop.f32.mrb[0].mxu0
  %v2010 = vadd.f32 %v1721, %v2009
  %v2011 = vpop.f32.mrb[0].mxu0
  %v2012 = vpop.f32.mrb[0].mxu0
  %v2013 = vadd.f32 %v1724, %v2012
  %v2014 = vpop.f32.mrb[0].mxu0
  %2015 = vmatprep.mubr.bf16.mxu0 %v663
  %2016 = vmatmul.mubr.bf16.gmra.mrb[0].mxu0 %v662
  %v2017 = vpop.f32.mrb[0].mxu0
  %v2018 = vadd.f32 %v1729, %v2017
  %v2019 = vpop.f32.mrb[0].mxu0
  %v2020 = vpop.f32.mrb[0].mxu0
  %v2021 = vadd.f32 %v1732, %v2020
  %v2022 = vpop.f32.mrb[0].mxu0
  %2023 = vmatprep.mubr.bf16.mxu0 %v670
  %2024 = vmatmul.mubr.bf16.gmra.mrb[0].mxu0 %v669
  %v2025 = vpop.f32.mrb[0].mxu0
  %v2026 = vadd.f32 %v1737, %v2025
  %v2027 = vpop.f32.mrb[0].mxu0
  %v2028 = vpop.f32.mrb[0].mxu0
  %v2029 = vadd.f32 %v1740, %v2028
  %v2030 = vpop.f32.mrb[0].mxu0
  %2031 = vmatprep.mubr.bf16.mxu0 %v677
  %2032 = vmatmul.mubr.bf16.gmra.mrb[0].mxu0 %v676
  %v2033 = vpop.f32.mrb[0].mxu0
  %v2034 = vadd.f32 %v1745, %v2033
  %v2035 = vpop.f32.mrb[0].mxu0
  %v2036 = vpop.f32.mrb[0].mxu0
  %v2037 = vadd.f32 %v1748, %v2036
  %v2038 = vpop.f32.mrb[0].mxu0
  %2039 = vmatprep.mubr.bf16.mxu0 %v684
  %2040 = vmatmul.mubr.bf16.gmra.mrb[0].mxu0 %v683
  %v2041 = vpop.f32.mrb[0].mxu0
  %v2042 = vadd.f32 %v1753, %v2041
  %v2043 = vpop.f32.mrb[0].mxu0
  %v2044 = vpop.f32.mrb[0].mxu0
  %v2045 = vadd.f32 %v1756, %v2044
  %v2046 = vpop.f32.mrb[0].mxu0
  %2047 = vmatprep.mubr.bf16.mxu0 %v691
  %2048 = vmatmul.mubr.bf16.gmra.mrb[0].mxu0 %v690
  %v2049 = vpop.f32.mrb[0].mxu0
  %v2050 = vadd.f32 %v1761, %v2049
  %v2051 = vpop.f32.mrb[0].mxu0
  %v2052 = vpop.f32.mrb[0].mxu0
  %v2053 = vadd.f32 %v1764, %v2052
  %v2054 = vpop.f32.mrb[0].mxu0
  %2055 = vdwg.mxu0
  %2056 = vmatprep.subr.bf16.mxu0 0
  %2057 = vmatpush1.bf16.msra.mxu0 %v1042
  %2058 = vmatprep.subr.bf16.mxu0 0
  %2059 = vmatpush1.bf16.msra.mxu0 0
  %2060 = vmatprep.subr.bf16.mxu0 0
  %2061 = vmatpush1.bf16.msra.mxu0 0
  %2062 = vmatprep.subr.bf16.mxu0 0
  %2063 = vmatpush1.bf16.msra.mxu0 0
  %2064 = vmatprep.subr.bf16.mxu0 0
  %2065 = vmatpush1.bf16.msra.mxu0 0
  %2066 = vmatprep.subr.bf16.mxu0 0
  %2067 = vmatpush1.bf16.msra.mxu0 0
  %2068 = vmatprep.subr.bf16.mxu0 0
  %2069 = vmatpush1.bf16.msra.mxu0 0
  %2070 = vmatprep.subr.bf16.mxu0 0
  %2071 = vmatpush1.bf16.msra.mxu0 0
  %2072 = vmatprep.subr.bf16.mxu0 0
  %2073 = vmatpush1.bf16.msra.mxu0 0
  %2074 = vmatprep.subr.bf16.mxu0 0
  %2075 = vmatpush1.bf16.msra.mxu0 0
  %2076 = vmatprep.subr.bf16.mxu0 0
  %2077 = vmatpush1.bf16.msra.mxu0 0
  %2078 = vmatprep.subr.bf16.mxu0 0
  %2079 = vmatpush1.bf16.msra.mxu0 0
  %2080 = vmatprep.subr.bf16.mxu0 0
  %2081 = vmatpush1.bf16.msra.mxu0 0
  %2082 = vmatprep.subr.bf16.mxu0 0
  %2083 = vmatpush1.bf16.msra.mxu0 0
  %2084 = vmatprep.subr.bf16.mxu0 0
  %2085 = vmatpush1.bf16.msra.mxu0 0
  %2086 = vmatprep.subr.bf16.mxu0 0
  %2087 = vmatpush1.bf16.msra.mxu0 0
  %2088 = vmatprep.mubr.bf16.mxu0 0
  %2089 = vmatmul.mubr.bf16.gmra.mrb[0].mxu0 %v1094
  %v2090 = vpop.f32.mrb[0].mxu0
  %v2091 = vadd.f32 %v1802, %v2090
  %v2092 = vpop.f32.mrb[0].mxu0
  %v2093 = vpop.f32.mrb[0].mxu0
  %v2094 = vadd.f32 %v1805, %v2093
  %v2095 = vpop.f32.mrb[0].mxu0
  %2096 = vmatprep.mubr.bf16.mxu0 0
  %2097 = vmatmul.mubr.bf16.gmra.mrb[0].mxu0 %v1097
  %v2098 = vpop.f32.mrb[0].mxu0
  %v2099 = vadd.f32 %v1810, %v2098
  %v2100 = vpop.f32.mrb[0].mxu0
  %v2101 = vpop.f32.mrb[0].mxu0
  %v2102 = vadd.f32 %v1813, %v2101
  %v2103 = vpop.f32.mrb[0].mxu0
  %2104 = vmatprep.mubr.bf16.mxu0 0
  %2105 = vmatmul.mubr.bf16.gmra.mrb[0].mxu0 %v1100
  %v2106 = vpop.f32.mrb[0].mxu0
  %v2107 = vadd.f32 %v1818, %v2106
  %v2108 = vpop.f32.mrb[0].mxu0
  %v2109 = vpop.f32.mrb[0].mxu0
  %v2110 = vadd.f32 %v1821, %v2109
  %v2111 = vpop.f32.mrb[0].mxu0
  %2112 = vmatprep.mubr.bf16.mxu0 0
  %2113 = vmatmul.mubr.bf16.gmra.mrb[0].mxu0 %v1103
  %v2114 = vpop.f32.mrb[0].mxu0
  %v2115 = vadd.f32 %v1826, %v2114
  %v2116 = vpop.f32.mrb[0].mxu0
  %v2117 = vpop.f32.mrb[0].mxu0
  %v2118 = vadd.f32 %v1829, %v2117
  %v2119 = vpop.f32.mrb[0].mxu0
  %2120 = vmatprep.mubr.bf16.mxu0 0
  %2121 = vmatmul.mubr.bf16.gmra.mrb[0].mxu0 %v1106
  %v2122 = vpop.f32.mrb[0].mxu0
  %v2123 = vadd.f32 %v1834, %v2122
  %v2124 = vpop.f32.mrb[0].mxu0
  %v2125 = vpop.f32.mrb[0].mxu0
  %v2126 = vadd.f32 %v1837, %v2125
  %v2127 = vpop.f32.mrb[0].mxu0
  %2128 = vmatprep.mubr.bf16.mxu0 0
  %2129 = vmatmul.mubr.bf16.gmra.mrb[0].mxu0 %v1109
  %v2130 = vpop.f32.mrb[0].mxu0
  %v2131 = vadd.f32 %v1842, %v2130
  %v2132 = vpop.f32.mrb[0].mxu0
  %v2133 = vpop.f32.mrb[0].mxu0
  %v2134 = vadd.f32 %v1845, %v2133
  %v2135 = vpop.f32.mrb[0].mxu0
  %2136 = vmatprep.mubr.bf16.mxu0 0
  %2137 = vmatmul.mubr.bf16.gmra.mrb[0].mxu0 %v1112
  %v2138 = vpop.f32.mrb[0].mxu0
  %v2139 = vadd.f32 %v1850, %v2138
  %v2140 = vpop.f32.mrb[0].mxu0
  %v2141 = vpop.f32.mrb[0].mxu0
  %v2142 = vadd.f32 %v1853, %v2141
  %v2143 = vpop.f32.mrb[0].mxu0
  %2144 = vmatprep.mubr.bf16.mxu0 0
  %2145 = vmatmul.mubr.bf16.gmra.mrb[0].mxu0 %v1115
  %v2146 = vpop.f32.mrb[0].mxu0
  %v2147 = vadd.f32 %v1858, %v2146
  %v2148 = vpop.f32.mrb[0].mxu0
  %v2149 = vpop.f32.mrb[0].mxu0
  %v2150 = vadd.f32 %v1861, %v2149
  %v2151 = vpop.f32.mrb[0].mxu0
  %2152 = vmatprep.mubr.bf16.mxu0 0
  %2153 = vmatmul.mubr.bf16.gmra.mrb[0].mxu0 %v1118
  %v2154 = vpop.f32.mrb[0].mxu0
  %v2155 = vadd.f32 %v1866, %v2154
  %v2156 = vpop.f32.mrb[0].mxu0
  %v2157 = vpop.f32.mrb[0].mxu0
  %v2158 = vadd.f32 %v1869, %v2157
  %v2159 = vpop.f32.mrb[0].mxu0
  %2160 = vmatprep.mubr.bf16.mxu0 0
  %2161 = vmatmul.mubr.bf16.gmra.mrb[0].mxu0 %v1121
  %v2162 = vpop.f32.mrb[0].mxu0
  %v2163 = vadd.f32 %v1874, %v2162
  %v2164 = vpop.f32.mrb[0].mxu0
  %v2165 = vpop.f32.mrb[0].mxu0
  %v2166 = vadd.f32 %v1877, %v2165
  %v2167 = vpop.f32.mrb[0].mxu0
  %2168 = vmatprep.mubr.bf16.mxu0 0
  %2169 = vmatmul.mubr.bf16.gmra.mrb[0].mxu0 %v1124
  %v2170 = vpop.f32.mrb[0].mxu0
  %v2171 = vadd.f32 %v1882, %v2170
  %v2172 = vpop.f32.mrb[0].mxu0
  %v2173 = vpop.f32.mrb[0].mxu0
  %v2174 = vadd.f32 %v1885, %v2173
  %v2175 = vpop.f32.mrb[0].mxu0
  %2176 = vmatprep.mubr.bf16.mxu0 0
  %2177 = vmatmul.mubr.bf16.gmra.mrb[0].mxu0 %v1127
  %v2178 = vpop.f32.mrb[0].mxu0
  %v2179 = vadd.f32 %v1890, %v2178
  %v2180 = vpop.f32.mrb[0].mxu0
  %v2181 = vpop.f32.mrb[0].mxu0
  %v2182 = vadd.f32 %v1893, %v2181
  %v2183 = vpop.f32.mrb[0].mxu0
  %2184 = vmatprep.mubr.bf16.mxu0 0
  %2185 = vmatmul.mubr.bf16.gmra.mrb[0].mxu0 %v1130
  %v2186 = vpop.f32.mrb[0].mxu0
  %v2187 = vadd.f32 %v1898, %v2186
  %v2188 = vpop.f32.mrb[0].mxu0
  %v2189 = vpop.f32.mrb[0].mxu0
  %v2190 = vadd.f32 %v1901, %v2189
  %v2191 = vpop.f32.mrb[0].mxu0
  %2192 = vmatprep.mubr.bf16.mxu0 0
  %2193 = vmatmul.mubr.bf16.gmra.mrb[0].mxu0 %v1133
  %v2194 = vpop.f32.mrb[0].mxu0
  %v2195 = vadd.f32 %v1906, %v2194
  %v2196 = vpop.f32.mrb[0].mxu0
  %v2197 = vpop.f32.mrb[0].mxu0
  %v2198 = vadd.f32 %v1909, %v2197
  %v2199 = vpop.f32.mrb[0].mxu0
  %2200 = vmatprep.mubr.bf16.mxu0 0
  %2201 = vmatmul.mubr.bf16.gmra.mrb[0].mxu0 %v1136
  %v2202 = vpop.f32.mrb[0].mxu0
  %v2203 = vadd.f32 %v1914, %v2202
  %v2204 = vpop.f32.mrb[0].mxu0
  %v2205 = vpop.f32.mrb[0].mxu0
  %v2206 = vadd.f32 %v1917, %v2205
  %v2207 = vpop.f32.mrb[0].mxu0
  %2208 = vmatprep.mubr.bf16.mxu0 0
  %2209 = vmatmul.mubr.bf16.gmra.mrb[0].mxu0 %v1139
  %v2210 = vpop.f32.mrb[0].mxu0
  %v2211 = vadd.f32 %v1922, %v2210
  %v2212 = vpop.f32.mrb[0].mxu0
  %v2213 = vpop.f32.mrb[0].mxu0
  %v2214 = vadd.f32 %v1925, %v2213
  %v2215 = vpop.f32.mrb[0].mxu0
  %2216 = vmatprep.mubr.bf16.mxu0 0
  %2217 = vmatmul.mubr.bf16.gmra.mrb[0].mxu0 %v1142
  %v2218 = vpop.f32.mrb[0].mxu0
  %v2219 = vadd.f32 %v1930, %v2218
  %v2220 = vpop.f32.mrb[0].mxu0
  %v2221 = vpop.f32.mrb[0].mxu0
  %v2222 = vadd.f32 %v1933, %v2221
  %v2223 = vpop.f32.mrb[0].mxu0
  %2224 = vmatprep.mubr.bf16.mxu0 0
  %2225 = vmatmul.mubr.bf16.gmra.mrb[0].mxu0 %v1145
  %v2226 = vpop.f32.mrb[0].mxu0
  %v2227 = vadd.f32 %v1938, %v2226
  %v2228 = vpop.f32.mrb[0].mxu0
  %v2229 = vpop.f32.mrb[0].mxu0
  %v2230 = vadd.f32 %v1941, %v2229
  %v2231 = vpop.f32.mrb[0].mxu0
  %2232 = vmatprep.mubr.bf16.mxu0 0
  %2233 = vmatmul.mubr.bf16.gmra.mrb[0].mxu0 %v1148
  %v2234 = vpop.f32.mrb[0].mxu0
  %v2235 = vadd.f32 %v1946, %v2234
  %v2236 = vpop.f32.mrb[0].mxu0
  %v2237 = vpop.f32.mrb[0].mxu0
  %v2238 = vadd.f32 %v1949, %v2237
  %v2239 = vpop.f32.mrb[0].mxu0
  %2240 = vmatprep.mubr.bf16.mxu0 0
  %2241 = vmatmul.mubr.bf16.gmra.mrb[0].mxu0 %v1151
  %v2242 = vpop.f32.mrb[0].mxu0
  %v2243 = vadd.f32 %v1954, %v2242
  %v2244 = vpop.f32.mrb[0].mxu0
  %v2245 = vpop.f32.mrb[0].mxu0
  %v2246 = vadd.f32 %v1957, %v2245
  %v2247 = vpop.f32.mrb[0].mxu0
  %2248 = vmatprep.mubr.bf16.mxu0 0
  %2249 = vmatmul.mubr.bf16.gmra.mrb[0].mxu0 %v1154
  %v2250 = vpop.f32.mrb[0].mxu0
  %v2251 = vadd.f32 %v1962, %v2250
  %v2252 = vpop.f32.mrb[0].mxu0
  %v2253 = vpop.f32.mrb[0].mxu0
  %v2254 = vadd.f32 %v1965, %v2253
  %v2255 = vpop.f32.mrb[0].mxu0
  %2256 = vmatprep.mubr.bf16.mxu0 0
  %2257 = vmatmul.mubr.bf16.gmra.mrb[0].mxu0 %v1157
  %v2258 = vpop.f32.mrb[0].mxu0
  %v2259 = vadd.f32 %v1970, %v2258
  %v2260 = vpop.f32.mrb[0].mxu0
  %v2261 = vpop.f32.mrb[0].mxu0
  %v2262 = vadd.f32 %v1973, %v2261
  %v2263 = vpop.f32.mrb[0].mxu0
  %2264 = vmatprep.mubr.bf16.mxu0 0
  %2265 = vmatmul.mubr.bf16.gmra.mrb[0].mxu0 %v1160
  %v2266 = vpop.f32.mrb[0].mxu0
  %v2267 = vadd.f32 %v1978, %v2266
  %v2268 = vpop.f32.mrb[0].mxu0
  %v2269 = vpop.f32.mrb[0].mxu0
  %v2270 = vadd.f32 %v1981, %v2269
  %v2271 = vpop.f32.mrb[0].mxu0
  %2272 = vmatprep.mubr.bf16.mxu0 0
  %2273 = vmatmul.mubr.bf16.gmra.mrb[0].mxu0 %v1163
  %v2274 = vpop.f32.mrb[0].mxu0
  %v2275 = vadd.f32 %v1986, %v2274
  %v2276 = vpop.f32.mrb[0].mxu0
  %v2277 = vpop.f32.mrb[0].mxu0
  %v2278 = vadd.f32 %v1989, %v2277
  %v2279 = vpop.f32.mrb[0].mxu0
  %2280 = vmatprep.mubr.bf16.mxu0 0
  %2281 = vmatmul.mubr.bf16.gmra.mrb[0].mxu0 %v1166
  %v2282 = vpop.f32.mrb[0].mxu0
  %v2283 = vadd.f32 %v1994, %v2282
  %v2284 = vpop.f32.mrb[0].mxu0
  %v2285 = vpop.f32.mrb[0].mxu0
  %v2286 = vadd.f32 %v1997, %v2285
  %v2287 = vpop.f32.mrb[0].mxu0
  %2288 = vmatprep.mubr.bf16.mxu0 0
  %2289 = vmatmul.mubr.bf16.gmra.mrb[0].mxu0 %v1169
  %v2290 = vpop.f32.mrb[0].mxu0
  %v2291 = vadd.f32 %v2002, %v2290
  %v2292 = vpop.f32.mrb[0].mxu0
  %v2293 = vpop.f32.mrb[0].mxu0
  %v2294 = vadd.f32 %v2005, %v2293
  %v2295 = vpop.f32.mrb[0].mxu0
  %2296 = vmatprep.mubr.bf16.mxu0 0
  %2297 = vmatmul.mubr.bf16.gmra.mrb[0].mxu0 %v1172
  %v2298 = vpop.f32.mrb[0].mxu0
  %v2299 = vadd.f32 %v2010, %v2298
  %v2300 = vpop.f32.mrb[0].mxu0
  %v2301 = vpop.f32.mrb[0].mxu0
  %v2302 = vadd.f32 %v2013, %v2301
  %v2303 = vpop.f32.mrb[0].mxu0
  %2304 = vmatprep.mubr.bf16.mxu0 0
  %2305 = vmatmul.mubr.bf16.gmra.mrb[0].mxu0 %v1175
  %v2306 = vpop.f32.mrb[0].mxu0
  %v2307 = vadd.f32 %v2018, %v2306
  %v2308 = vpop.f32.mrb[0].mxu0
  %v2309 = vpop.f32.mrb[0].mxu0
  %v2310 = vadd.f32 %v2021, %v2309
  %v2311 = vpop.f32.mrb[0].mxu0
  %2312 = vmatprep.mubr.bf16.mxu0 0
  %2313 = vmatmul.mubr.bf16.gmra.mrb[0].mxu0 %v1178
  %v2314 = vpop.f32.mrb[0].mxu0
  %v2315 = vadd.f32 %v2026, %v2314
  %v2316 = vpop.f32.mrb[0].mxu0
  %v2317 = vpop.f32.mrb[0].mxu0
  %v2318 = vadd.f32 %v2029, %v2317
  %v2319 = vpop.f32.mrb[0].mxu0
  %2320 = vmatprep.mubr.bf16.mxu0 0
  %2321 = vmatmul.mubr.bf16.gmra.mrb[0].mxu0 %v1181
  %v2322 = vpop.f32.mrb[0].mxu0
  %v2323 = vadd.f32 %v2034, %v2322
  %v2324 = vpop.f32.mrb[0].mxu0
  %v2325 = vpop.f32.mrb[0].mxu0
  %v2326 = vadd.f32 %v2037, %v2325
  %v2327 = vpop.f32.mrb[0].mxu0
  %2328 = vmatprep.mubr.bf16.mxu0 0
  %2329 = vmatmul.mubr.bf16.gmra.mrb[0].mxu0 %v1184
  %v2330 = vpop.f32.mrb[0].mxu0
  %v2331 = vadd.f32 %v2042, %v2330
  %v2332 = vpop.f32.mrb[0].mxu0
  %v2333 = vpop.f32.mrb[0].mxu0
  %v2334 = vadd.f32 %v2045, %v2333
  %v2335 = vpop.f32.mrb[0].mxu0
  %2336 = vmatprep.mubr.bf16.mxu0 0
  %2337 = vmatmul.mubr.bf16.gmra.mrb[0].mxu0 %v1187
  %v2338 = vpop.f32.mrb[0].mxu0
  %v2339 = vadd.f32 %v2050, %v2338
  %v2340 = vpop.f32.mrb[0].mxu0
  %v2341 = vpop.f32.mrb[0].mxu0
  %v2342 = vadd.f32 %v2053, %v2341
  %v2343 = vpop.f32.mrb[0].mxu0
  %2344 = vdwg.mxu0
  %v2345 = vmax.f32 %v2091, 0.0
  %v2346 = vmax.f32 %v2094, 0.0
  %v2347 = vmax.f32 %v2099, 0.0
  %v2348 = vmax.f32 %v2102, 0.0
  %v2349 = vmax.f32 %v2107, 0.0
  %v2350 = vmax.f32 %v2110, 0.0
  %v2351 = vmax.f32 %v2115, 0.0
  %v2352 = vmax.f32 %v2118, 0.0
  %v2353 = vmax.f32 %v2123, 0.0
  %v2354 = vmax.f32 %v2126, 0.0
  %v2355 = vmax.f32 %v2131, 0.0
  %v2356 = vmax.f32 %v2134, 0.0
  %v2357 = vmax.f32 %v2139, 0.0
  %v2358 = vmax.f32 %v2142, 0.0
  %v2359 = vmax.f32 %v2147, 0.0
  %v2360 = vmax.f32 %v2150, 0.0
  %v2361 = vmax.f32 %v2155, 0.0
  %v2362 = vmax.f32 %v2158, 0.0
  %v2363 = vmax.f32 %v2163, 0.0
  %v2364 = vmax.f32 %v2166, 0.0
  %v2365 = vmax.f32 %v2171, 0.0
  %v2366 = vmax.f32 %v2174, 0.0
  %v2367 = vmax.f32 %v2179, 0.0
  %v2368 = vmax.f32 %v2182, 0.0
  %v2369 = vmax.f32 %v2187, 0.0
  %v2370 = vmax.f32 %v2190, 0.0
  %v2371 = vmax.f32 %v2195, 0.0
  %v2372 = vmax.f32 %v2198, 0.0
  %v2373 = vmax.f32 %v2203, 0.0
  %v2374 = vmax.f32 %v2206, 0.0
  %v2375 = vmax.f32 %v2211, 0.0
  %v2376 = vmax.f32 %v2214, 0.0
  %v2377 = vmax.f32 %v2219, 0.0
  %v2378 = vmax.f32 %v2222, 0.0
  %v2379 = vmax.f32 %v2227, 0.0
  %v2380 = vmax.f32 %v2230, 0.0
  %v2381 = vmax.f32 %v2235, 0.0
  %v2382 = vmax.f32 %v2238, 0.0
  %v2383 = vmax.f32 %v2243, 0.0
  %v2384 = vmax.f32 %v2246, 0.0
  %v2385 = vmax.f32 %v2251, 0.0
  %v2386 = vmax.f32 %v2254, 0.0
  %v2387 = vmax.f32 %v2259, 0.0
  %v2388 = vmax.f32 %v2262, 0.0
  %v2389 = vmax.f32 %v2267, 0.0
  %v2390 = vmax.f32 %v2270, 0.0
  %v2391 = vmax.f32 %v2275, 0.0
  %v2392 = vmax.f32 %v2278, 0.0
  %v2393 = vmax.f32 %v2283, 0.0
  %v2394 = vmax.f32 %v2286, 0.0
  %v2395 = vmax.f32 %v2291, 0.0
  %v2396 = vmax.f32 %v2294, 0.0
  %v2397 = vmax.f32 %v2299, 0.0
  %v2398 = vmax.f32 %v2302, 0.0
  %v2399 = vmax.f32 %v2307, 0.0
  %v2400 = vmax.f32 %v2310, 0.0
  %v2401 = vmax.f32 %v2315, 0.0
  %v2402 = vmax.f32 %v2318, 0.0
  %v2403 = vmax.f32 %v2323, 0.0
  %v2404 = vmax.f32 %v2326, 0.0
  %v2405 = vmax.f32 %v2331, 0.0
  %v2406 = vmax.f32 %v2334, 0.0
  %v2407 = vmax.f32 %v2339, 0.0
  %v2408 = vmax.f32 %v2342, 0.0
  %v2409 = vpack.c.bf16 %v2346, %v2345
  %v2410 = vpack.c.bf16 %v2348, %v2347
  %v2411 = vpack.c.bf16 %v2350, %v2349
  %v2412 = vpack.c.bf16 %v2352, %v2351
  %v2413 = vpack.c.bf16 %v2354, %v2353
  %v2414 = vpack.c.bf16 %v2356, %v2355
  %v2415 = vpack.c.bf16 %v2358, %v2357
  %v2416 = vpack.c.bf16 %v2360, %v2359
  %v2417 = vpack.c.bf16 %v2362, %v2361
  %v2418 = vpack.c.bf16 %v2364, %v2363
  %v2419 = vpack.c.bf16 %v2366, %v2365
  %v2420 = vpack.c.bf16 %v2368, %v2367
  %v2421 = vpack.c.bf16 %v2370, %v2369
  %v2422 = vpack.c.bf16 %v2372, %v2371
  %v2423 = vpack.c.bf16 %v2374, %v2373
  %v2424 = vpack.c.bf16 %v2376, %v2375
  %v2425 = vpack.c.bf16 %v2378, %v2377
  %v2426 = vpack.c.bf16 %v2380, %v2379
  %v2427 = vpack.c.bf16 %v2382, %v2381
  %v2428 = vpack.c.bf16 %v2384, %v2383
  %v2429 = vpack.c.bf16 %v2386, %v2385
  %v2430 = vpack.c.bf16 %v2388, %v2387
  %v2431 = vpack.c.bf16 %v2390, %v2389
  %v2432 = vpack.c.bf16 %v2392, %v2391
  %v2433 = vpack.c.bf16 %v2394, %v2393
  %v2434 = vpack.c.bf16 %v2396, %v2395
  %v2435 = vpack.c.bf16 %v2398, %v2397
  %v2436 = vpack.c.bf16 %v2400, %v2399
  %v2437 = vpack.c.bf16 %v2402, %v2401
  %v2438 = vpack.c.bf16 %v2404, %v2403
  %v2439 = vpack.c.bf16 %v2406, %v2405
  %v2440 = vpack.c.bf16 %v2408, %v2407
  %v2441 = vld [vmem:[%s3] sm:$0xf]
  %v2442 = vld [vmem:[%s3 + $0x4] sm:$0xf]
  %v2443 = vld [vmem:[%s3 + $0x8] sm:$0xf]
  %v2444 = vld [vmem:[%s3 + $0xc] sm:$0xf]
  %v2445 = vld [vmem:[%s3 + $0x10] sm:$0xf]
  %v2446 = vld [vmem:[%s3 + $0x14] sm:$0xf]
  %v2447 = vld [vmem:[%s3 + $0x18] sm:$0xf]
  %v2448 = vld [vmem:[%s3 + $0x1c] sm:$0xf]
  %v2449 = vld [vmem:[%s3 + $0x20] sm:$0xf]
  %v2450 = vld [vmem:[%s3 + $0x24] sm:$0xf]
  %v2451 = vld [vmem:[%s3 + $0x28] sm:$0xf]
  %v2452 = vld [vmem:[%s3 + $0x2c] sm:$0xf]
  %v2453 = vld [vmem:[%s3 + $0x30] sm:$0xf]
  %v2454 = vld [vmem:[%s3 + $0x34] sm:$0xf]
  %v2455 = vld [vmem:[%s3 + $0x38] sm:$0xf]
  %v2456 = vld [vmem:[%s3 + $0x3c] sm:$0xf]
  %v2457 = vld [vmem:[%s4] sm:$0x1]
  %v2459 = vlaneseq
  %v2460 = vshrl.u32 %v2459, 7
  %v2461 = vsub.s32 0, %v2460
  %v2462 = vrot.slane %v2457, %v2461
  %v2480 = vunpack.c.l.b16 %v2441
  %v2481 = vunpack.c.l.b16 %v2442
  %v2482 = vunpack.c.l.b16 %v2443
  %v2483 = vunpack.c.l.b16 %v2444
  %v2484 = vunpack.c.l.b16 %v2445
  %v2485 = vunpack.c.l.b16 %v2446
  %v2486 = vunpack.c.l.b16 %v2447
  %v2487 = vunpack.c.l.b16 %v2448
  %v2488 = vunpack.c.l.b16 %v2449
  %v2489 = vunpack.c.l.b16 %v2450
  %v2490 = vunpack.c.l.b16 %v2451
  %v2491 = vunpack.c.l.b16 %v2452
  %v2492 = vunpack.c.l.b16 %v2453
  %v2493 = vunpack.c.l.b16 %v2454
  %v2494 = vunpack.c.l.b16 %v2455
  %v2495 = vunpack.c.l.b16 %v2456
  %v2496 = vpack.c.b16 %v2481, %v2480
  %v2497 = vpack.c.b16 %v2483, %v2482
  %v2498 = vpack.c.b16 %v2485, %v2484
  %v2499 = vpack.c.b16 %v2487, %v2486
  %v2500 = vpack.c.b16 %v2489, %v2488
  %v2501 = vpack.c.b16 %v2491, %v2490
  %v2502 = vpack.c.b16 %v2493, %v2492
  %v2503 = vpack.c.b16 %v2495, %v2494
  %2512 = vmatprep.subr.bf16.mxu0 0
  %2513 = vmatpush1.bf16.msra.mxu0 %v2496
  %2514 = vmatprep.subr.bf16.mxu0 0
  %2515 = vmatpush1.bf16.msra.mxu0 %v2497
  %2516 = vmatprep.subr.bf16.mxu0 0
  %2517 = vmatpush1.bf16.msra.mxu0 %v2498
  %2518 = vmatprep.subr.bf16.mxu0 0
  %2519 = vmatpush1.bf16.msra.mxu0 %v2499
  %2520 = vmatprep.subr.bf16.mxu0 0
  %2521 = vmatpush1.bf16.msra.mxu0 %v2500
  %2522 = vmatprep.subr.bf16.mxu0 0
  %2523 = vmatpush1.bf16.msra.mxu0 %v2501
  %2524 = vmatprep.subr.bf16.mxu0 0
  %2525 = vmatpush1.bf16.msra.mxu0 %v2502
  %2526 = vmatprep.subr.bf16.mxu0 0
  %2527 = vmatpush1.bf16.msra.mxu0 %v2503
  %2528 = vmatprep.subr.bf16.mxu0 0
  %2529 = vmatpush1.bf16.msra.mxu0 0
  %2530 = vmatprep.subr.bf16.mxu0 0
  %2531 = vmatpush1.bf16.msra.mxu0 0
  %2532 = vmatprep.subr.bf16.mxu0 0
  %2533 = vmatpush1.bf16.msra.mxu0 0
  %2534 = vmatprep.subr.bf16.mxu0 0
  %2535 = vmatpush1.bf16.msra.mxu0 0
  %2536 = vmatprep.subr.bf16.mxu0 0
  %2537 = vmatpush1.bf16.msra.mxu0 0
  %2538 = vmatprep.subr.bf16.mxu0 0
  %2539 = vmatpush1.bf16.msra.mxu0 0
  %2540 = vmatprep.subr.bf16.mxu0 0
  %2541 = vmatpush1.bf16.msra.mxu0 0
  %2542 = vmatprep.subr.bf16.mxu0 0
  %2543 = vmatpush1.bf16.msra.mxu0 0
  %2544 = vmatprep.mubr.bf16.mxu0 0
  %2545 = vmatmul.mubr.bf16.gmra.mrb[0].mxu0 %v2409
  %v2546 = vpop.f32.mrb[0].mxu0
  %v2547 = vadd.f32 %v2462, %v2546
  %v2548 = vpop.f32.mrb[0].mxu0
  %v2549 = vpop.f32.mrb[0].mxu0
  %v2550 = vadd.f32 %v2462, %v2549
  %v2551 = vpop.f32.mrb[0].mxu0
  %2552 = vmatprep.mubr.bf16.mxu0 0
  %2553 = vmatmul.mubr.bf16.gmra.mrb[0].mxu0 %v2410
  %v2554 = vpop.f32.mrb[0].mxu0
  %v2555 = vadd.f32 %v2462, %v2554
  %v2556 = vpop.f32.mrb[0].mxu0
  %v2557 = vpop.f32.mrb[0].mxu0
  %v2558 = vadd.f32 %v2462, %v2557
  %v2559 = vpop.f32.mrb[0].mxu0
  %2560 = vmatprep.mubr.bf16.mxu0 0
  %2561 = vmatmul.mubr.bf16.gmra.mrb[0].mxu0 %v2411
  %v2562 = vpop.f32.mrb[0].mxu0
  %v2563 = vadd.f32 %v2462, %v2562
  %v2564 = vpop.f32.mrb[0].mxu0
  %v2565 = vpop.f32.mrb[0].mxu0
  %v2566 = vadd.f32 %v2462, %v2565
  %v2567 = vpop.f32.mrb[0].mxu0
  %2568 = vmatprep.mubr.bf16.mxu0 0
  %2569 = vmatmul.mubr.bf16.gmra.mrb[0].mxu0 %v2412
  %v2570 = vpop.f32.mrb[0].mxu0
  %v2571 = vadd.f32 %v2462, %v2570
  %v2572 = vpop.f32.mrb[0].mxu0
  %v2573 = vpop.f32.mrb[0].mxu0
  %v2574 = vadd.f32 %v2462, %v2573
  %v2575 = vpop.f32.mrb[0].mxu0
  %2576 = vmatprep.mubr.bf16.mxu0 0
  %2577 = vmatmul.mubr.bf16.gmra.mrb[0].mxu0 %v2413
  %v2578 = vpop.f32.mrb[0].mxu0
  %v2579 = vadd.f32 %v2462, %v2578
  %v2580 = vpop.f32.mrb[0].mxu0
  %v2581 = vpop.f32.mrb[0].mxu0
  %v2582 = vadd.f32 %v2462, %v2581
  %v2583 = vpop.f32.mrb[0].mxu0
  %2584 = vmatprep.mubr.bf16.mxu0 0
  %2585 = vmatmul.mubr.bf16.gmra.mrb[0].mxu0 %v2414
  %v2586 = vpop.f32.mrb[0].mxu0
  %v2587 = vadd.f32 %v2462, %v2586
  %v2588 = vpop.f32.mrb[0].mxu0
  %v2589 = vpop.f32.mrb[0].mxu0
  %v2590 = vadd.f32 %v2462, %v2589
  %v2591 = vpop.f32.mrb[0].mxu0
  %2592 = vmatprep.mubr.bf16.mxu0 0
  %2593 = vmatmul.mubr.bf16.gmra.mrb[0].mxu0 %v2415
  %v2594 = vpop.f32.mrb[0].mxu0
  %v2595 = vadd.f32 %v2462, %v2594
  %v2596 = vpop.f32.mrb[0].mxu0
  %v2597 = vpop.f32.mrb[0].mxu0
  %v2598 = vadd.f32 %v2462, %v2597
  %v2599 = vpop.f32.mrb[0].mxu0
  %2600 = vmatprep.mubr.bf16.mxu0 0
  %2601 = vmatmul.mubr.bf16.gmra.mrb[0].mxu0 %v2416
  %v2602 = vpop.f32.mrb[0].mxu0
  %v2603 = vadd.f32 %v2462, %v2602
  %v2604 = vpop.f32.mrb[0].mxu0
  %v2605 = vpop.f32.mrb[0].mxu0
  %v2606 = vadd.f32 %v2462, %v2605
  %v2607 = vpop.f32.mrb[0].mxu0
  %2608 = vmatprep.mubr.bf16.mxu0 0
  %2609 = vmatmul.mubr.bf16.gmra.mrb[0].mxu0 %v2417
  %v2610 = vpop.f32.mrb[0].mxu0
  %v2611 = vadd.f32 %v2462, %v2610
  %v2612 = vpop.f32.mrb[0].mxu0
  %v2613 = vpop.f32.mrb[0].mxu0
  %v2614 = vadd.f32 %v2462, %v2613
  %v2615 = vpop.f32.mrb[0].mxu0
  %2616 = vmatprep.mubr.bf16.mxu0 0
  %2617 = vmatmul.mubr.bf16.gmra.mrb[0].mxu0 %v2418
  %v2618 = vpop.f32.mrb[0].mxu0
  %v2619 = vadd.f32 %v2462, %v2618
  %v2620 = vpop.f32.mrb[0].mxu0
  %v2621 = vpop.f32.mrb[0].mxu0
  %v2622 = vadd.f32 %v2462, %v2621
  %v2623 = vpop.f32.mrb[0].mxu0
  %2624 = vmatprep.mubr.bf16.mxu0 0
  %2625 = vmatmul.mubr.bf16.gmra.mrb[0].mxu0 %v2419
  %v2626 = vpop.f32.mrb[0].mxu0
  %v2627 = vadd.f32 %v2462, %v2626
  %v2628 = vpop.f32.mrb[0].mxu0
  %v2629 = vpop.f32.mrb[0].mxu0
  %v2630 = vadd.f32 %v2462, %v2629
  %v2631 = vpop.f32.mrb[0].mxu0
  %2632 = vmatprep.mubr.bf16.mxu0 0
  %2633 = vmatmul.mubr.bf16.gmra.mrb[0].mxu0 %v2420
  %v2634 = vpop.f32.mrb[0].mxu0
  %v2635 = vadd.f32 %v2462, %v2634
  %v2636 = vpop.f32.mrb[0].mxu0
  %v2637 = vpop.f32.mrb[0].mxu0
  %v2638 = vadd.f32 %v2462, %v2637
  %v2639 = vpop.f32.mrb[0].mxu0
  %2640 = vmatprep.mubr.bf16.mxu0 0
  %2641 = vmatmul.mubr.bf16.gmra.mrb[0].mxu0 %v2421
  %v2642 = vpop.f32.mrb[0].mxu0
  %v2643 = vadd.f32 %v2462, %v2642
  %v2644 = vpop.f32.mrb[0].mxu0
  %v2645 = vpop.f32.mrb[0].mxu0
  %v2646 = vadd.f32 %v2462, %v2645
  %v2647 = vpop.f32.mrb[0].mxu0
  %2648 = vmatprep.mubr.bf16.mxu0 0
  %2649 = vmatmul.mubr.bf16.gmra.mrb[0].mxu0 %v2422
  %v2650 = vpop.f32.mrb[0].mxu0
  %v2651 = vadd.f32 %v2462, %v2650
  %v2652 = vpop.f32.mrb[0].mxu0
  %v2653 = vpop.f32.mrb[0].mxu0
  %v2654 = vadd.f32 %v2462, %v2653
  %v2655 = vpop.f32.mrb[0].mxu0
  %2656 = vmatprep.mubr.bf16.mxu0 0
  %2657 = vmatmul.mubr.bf16.gmra.mrb[0].mxu0 %v2423
  %v2658 = vpop.f32.mrb[0].mxu0
  %v2659 = vadd.f32 %v2462, %v2658
  %v2660 = vpop.f32.mrb[0].mxu0
  %v2661 = vpop.f32.mrb[0].mxu0
  %v2662 = vadd.f32 %v2462, %v2661
  %v2663 = vpop.f32.mrb[0].mxu0
  %2664 = vmatprep.mubr.bf16.mxu0 0
  %2665 = vmatmul.mubr.bf16.gmra.mrb[0].mxu0 %v2424
  %v2666 = vpop.f32.mrb[0].mxu0
  %v2667 = vadd.f32 %v2462, %v2666
  %v2668 = vpop.f32.mrb[0].mxu0
  %v2669 = vpop.f32.mrb[0].mxu0
  %v2670 = vadd.f32 %v2462, %v2669
  %v2671 = vpop.f32.mrb[0].mxu0
  %2672 = vmatprep.mubr.bf16.mxu0 0
  %2673 = vmatmul.mubr.bf16.gmra.mrb[0].mxu0 %v2425
  %v2674 = vpop.f32.mrb[0].mxu0
  %v2675 = vadd.f32 %v2462, %v2674
  %v2676 = vpop.f32.mrb[0].mxu0
  %v2677 = vpop.f32.mrb[0].mxu0
  %v2678 = vadd.f32 %v2462, %v2677
  %v2679 = vpop.f32.mrb[0].mxu0
  %2680 = vmatprep.mubr.bf16.mxu0 0
  %2681 = vmatmul.mubr.bf16.gmra.mrb[0].mxu0 %v2426
  %v2682 = vpop.f32.mrb[0].mxu0
  %v2683 = vadd.f32 %v2462, %v2682
  %v2684 = vpop.f32.mrb[0].mxu0
  %v2685 = vpop.f32.mrb[0].mxu0
  %v2686 = vadd.f32 %v2462, %v2685
  %v2687 = vpop.f32.mrb[0].mxu0
  %2688 = vmatprep.mubr.bf16.mxu0 0
  %2689 = vmatmul.mubr.bf16.gmra.mrb[0].mxu0 %v2427
  %v2690 = vpop.f32.mrb[0].mxu0
  %v2691 = vadd.f32 %v2462, %v2690
  %v2692 = vpop.f32.mrb[0].mxu0
  %v2693 = vpop.f32.mrb[0].mxu0
  %v2694 = vadd.f32 %v2462, %v2693
  %v2695 = vpop.f32.mrb[0].mxu0
  %2696 = vmatprep.mubr.bf16.mxu0 0
  %2697 = vmatmul.mubr.bf16.gmra.mrb[0].mxu0 %v2428
  %v2698 = vpop.f32.mrb[0].mxu0
  %v2699 = vadd.f32 %v2462, %v2698
  %v2700 = vpop.f32.mrb[0].mxu0
  %v2701 = vpop.f32.mrb[0].mxu0
  %v2702 = vadd.f32 %v2462, %v2701
  %v2703 = vpop.f32.mrb[0].mxu0
  %2704 = vmatprep.mubr.bf16.mxu0 0
  %2705 = vmatmul.mubr.bf16.gmra.mrb[0].mxu0 %v2429
  %v2706 = vpop.f32.mrb[0].mxu0
  %v2707 = vadd.f32 %v2462, %v2706
  %v2708 = vpop.f32.mrb[0].mxu0
  %v2709 = vpop.f32.mrb[0].mxu0
  %v2710 = vadd.f32 %v2462, %v2709
  %v2711 = vpop.f32.mrb[0].mxu0
  %2712 = vmatprep.mubr.bf16.mxu0 0
  %2713 = vmatmul.mubr.bf16.gmra.mrb[0].mxu0 %v2430
  %v2714 = vpop.f32.mrb[0].mxu0
  %v2715 = vadd.f32 %v2462, %v2714
  %v2716 = vpop.f32.mrb[0].mxu0
  %v2717 = vpop.f32.mrb[0].mxu0
  %v2718 = vadd.f32 %v2462, %v2717
  %v2719 = vpop.f32.mrb[0].mxu0
  %2720 = vmatprep.mubr.bf16.mxu0 0
  %2721 = vmatmul.mubr.bf16.gmra.mrb[0].mxu0 %v2431
  %v2722 = vpop.f32.mrb[0].mxu0
  %v2723 = vadd.f32 %v2462, %v2722
  %v2724 = vpop.f32.mrb[0].mxu0
  %v2725 = vpop.f32.mrb[0].mxu0
  %v2726 = vadd.f32 %v2462, %v2725
  %v2727 = vpop.f32.mrb[0].mxu0
  %2728 = vmatprep.mubr.bf16.mxu0 0
  %2729 = vmatmul.mubr.bf16.gmra.mrb[0].mxu0 %v2432
  %v2730 = vpop.f32.mrb[0].mxu0
  %v2731 = vadd.f32 %v2462, %v2730
  %v2732 = vpop.f32.mrb[0].mxu0
  %v2733 = vpop.f32.mrb[0].mxu0
  %v2734 = vadd.f32 %v2462, %v2733
  %v2735 = vpop.f32.mrb[0].mxu0
  %2736 = vmatprep.mubr.bf16.mxu0 0
  %2737 = vmatmul.mubr.bf16.gmra.mrb[0].mxu0 %v2433
  %v2738 = vpop.f32.mrb[0].mxu0
  %v2739 = vadd.f32 %v2462, %v2738
  %v2740 = vpop.f32.mrb[0].mxu0
  %v2741 = vpop.f32.mrb[0].mxu0
  %v2742 = vadd.f32 %v2462, %v2741
  %v2743 = vpop.f32.mrb[0].mxu0
  %2744 = vmatprep.mubr.bf16.mxu0 0
  %2745 = vmatmul.mubr.bf16.gmra.mrb[0].mxu0 %v2434
  %v2746 = vpop.f32.mrb[0].mxu0
  %v2747 = vadd.f32 %v2462, %v2746
  %v2748 = vpop.f32.mrb[0].mxu0
  %v2749 = vpop.f32.mrb[0].mxu0
  %v2750 = vadd.f32 %v2462, %v2749
  %v2751 = vpop.f32.mrb[0].mxu0
  %2752 = vmatprep.mubr.bf16.mxu0 0
  %2753 = vmatmul.mubr.bf16.gmra.mrb[0].mxu0 %v2435
  %v2754 = vpop.f32.mrb[0].mxu0
  %v2755 = vadd.f32 %v2462, %v2754
  %v2756 = vpop.f32.mrb[0].mxu0
  %v2757 = vpop.f32.mrb[0].mxu0
  %v2758 = vadd.f32 %v2462, %v2757
  %v2759 = vpop.f32.mrb[0].mxu0
  %2760 = vmatprep.mubr.bf16.mxu0 0
  %2761 = vmatmul.mubr.bf16.gmra.mrb[0].mxu0 %v2436
  %v2762 = vpop.f32.mrb[0].mxu0
  %v2763 = vadd.f32 %v2462, %v2762
  %v2764 = vpop.f32.mrb[0].mxu0
  %v2765 = vpop.f32.mrb[0].mxu0
  %v2766 = vadd.f32 %v2462, %v2765
  %v2767 = vpop.f32.mrb[0].mxu0
  %2768 = vmatprep.mubr.bf16.mxu0 0
  %2769 = vmatmul.mubr.bf16.gmra.mrb[0].mxu0 %v2437
  %v2770 = vpop.f32.mrb[0].mxu0
  %v2771 = vadd.f32 %v2462, %v2770
  %v2772 = vpop.f32.mrb[0].mxu0
  %v2773 = vpop.f32.mrb[0].mxu0
  %v2774 = vadd.f32 %v2462, %v2773
  %v2775 = vpop.f32.mrb[0].mxu0
  %2776 = vmatprep.mubr.bf16.mxu0 0
  %2777 = vmatmul.mubr.bf16.gmra.mrb[0].mxu0 %v2438
  %v2778 = vpop.f32.mrb[0].mxu0
  %v2779 = vadd.f32 %v2462, %v2778
  %v2780 = vpop.f32.mrb[0].mxu0
  %v2781 = vpop.f32.mrb[0].mxu0
  %v2782 = vadd.f32 %v2462, %v2781
  %v2783 = vpop.f32.mrb[0].mxu0
  %2784 = vmatprep.mubr.bf16.mxu0 0
  %2785 = vmatmul.mubr.bf16.gmra.mrb[0].mxu0 %v2439
  %v2786 = vpop.f32.mrb[0].mxu0
  %v2787 = vadd.f32 %v2462, %v2786
  %v2788 = vpop.f32.mrb[0].mxu0
  %v2789 = vpop.f32.mrb[0].mxu0
  %v2790 = vadd.f32 %v2462, %v2789
  %v2791 = vpop.f32.mrb[0].mxu0
  %2792 = vmatprep.mubr.bf16.mxu0 0
  %2793 = vmatmul.mubr.bf16.gmra.mrb[0].mxu0 %v2440
  %v2794 = vpop.f32.mrb[0].mxu0
  %v2795 = vadd.f32 %v2462, %v2794
  %v2796 = vpop.f32.mrb[0].mxu0
  %v2797 = vpop.f32.mrb[0].mxu0
  %v2798 = vadd.f32 %v2462, %v2797
  %v2799 = vpop.f32.mrb[0].mxu0
  %2800 = vdwg.mxu0
  %v2801 = vsel %vm1092, %v2547, -inf
  %2802 = vmax.xlane.f32.xlu0 %v2801
  %v2803 = vpop.xlane.xlu0 %2802
  %v2804 = vsel %vm1092, %v2550, -inf
  %2805 = vmax.xlane.f32.xlu0 %v2804
  %v2806 = vpop.xlane.xlu0 %2805
  %v2807 = vsel %vm1092, %v2555, -inf
  %2808 = vmax.xlane.f32.xlu0 %v2807
  %v2809 = vpop.xlane.xlu0 %2808
  %v2810 = vsel %vm1092, %v2558, -inf
  %2811 = vmax.xlane.f32.xlu0 %v2810
  %v2812 = vpop.xlane.xlu0 %2811
  %v2813 = vsel %vm1092, %v2563, -inf
  %2814 = vmax.xlane.f32.xlu0 %v2813
  %v2815 = vpop.xlane.xlu0 %2814
  %v2816 = vsel %vm1092, %v2566, -inf
  %2817 = vmax.xlane.f32.xlu0 %v2816
  %v2818 = vpop.xlane.xlu0 %2817
  %v2819 = vsel %vm1092, %v2571, -inf
  %2820 = vmax.xlane.f32.xlu0 %v2819
  %v2821 = vpop.xlane.xlu0 %2820
  %v2822 = vsel %vm1092, %v2574, -inf
  %2823 = vmax.xlane.f32.xlu0 %v2822
  %v2824 = vpop.xlane.xlu0 %2823
  %v2825 = vsel %vm1092, %v2579, -inf
  %2826 = vmax.xlane.f32.xlu0 %v2825
  %v2827 = vpop.xlane.xlu0 %2826
  %v2828 = vsel %vm1092, %v2582, -inf
  %2829 = vmax.xlane.f32.xlu0 %v2828
  %v2830 = vpop.xlane.xlu0 %2829
  %v2831 = vsel %vm1092, %v2587, -inf
  %2832 = vmax.xlane.f32.xlu0 %v2831
  %v2833 = vpop.xlane.xlu0 %2832
  %v2834 = vsel %vm1092, %v2590, -inf
  %2835 = vmax.xlane.f32.xlu0 %v2834
  %v2836 = vpop.xlane.xlu0 %2835
  %v2837 = vsel %vm1092, %v2595, -inf
  %2838 = vmax.xlane.f32.xlu0 %v2837
  %v2839 = vpop.xlane.xlu0 %2838
  %v2840 = vsel %vm1092, %v2598, -inf
  %2841 = vmax.xlane.f32.xlu0 %v2840
  %v2842 = vpop.xlane.xlu0 %2841
  %v2843 = vsel %vm1092, %v2603, -inf
  %2844 = vmax.xlane.f32.xlu0 %v2843
  %v2845 = vpop.xlane.xlu0 %2844
  %v2846 = vsel %vm1092, %v2606, -inf
  %2847 = vmax.xlane.f32.xlu0 %v2846
  %v2848 = vpop.xlane.xlu0 %2847
  %v2849 = vsel %vm1092, %v2611, -inf
  %2850 = vmax.xlane.f32.xlu0 %v2849
  %v2851 = vpop.xlane.xlu0 %2850
  %v2852 = vsel %vm1092, %v2614, -inf
  %2853 = vmax.xlane.f32.xlu0 %v2852
  %v2854 = vpop.xlane.xlu0 %2853
  %v2855 = vsel %vm1092, %v2619, -inf
  %2856 = vmax.xlane.f32.xlu0 %v2855
  %v2857 = vpop.xlane.xlu0 %2856
  %v2858 = vsel %vm1092, %v2622, -inf
  %2859 = vmax.xlane.f32.xlu0 %v2858
  %v2860 = vpop.xlane.xlu0 %2859
  %v2861 = vsel %vm1092, %v2627, -inf
  %2862 = vmax.xlane.f32.xlu0 %v2861
  %v2863 = vpop.xlane.xlu0 %2862
  %v2864 = vsel %vm1092, %v2630, -inf
  %2865 = vmax.xlane.f32.xlu0 %v2864
  %v2866 = vpop.xlane.xlu0 %2865
  %v2867 = vsel %vm1092, %v2635, -inf
  %2868 = vmax.xlane.f32.xlu0 %v2867
  %v2869 = vpop.xlane.xlu0 %2868
  %v2870 = vsel %vm1092, %v2638, -inf
  %2871 = vmax.xlane.f32.xlu0 %v2870
  %v2872 = vpop.xlane.xlu0 %2871
  %v2873 = vsel %vm1092, %v2643, -inf
  %2874 = vmax.xlane.f32.xlu0 %v2873
  %v2875 = vpop.xlane.xlu0 %2874
  %v2876 = vsel %vm1092, %v2646, -inf
  %2877 = vmax.xlane.f32.xlu0 %v2876
  %v2878 = vpop.xlane.xlu0 %2877
  %v2879 = vsel %vm1092, %v2651, -inf
  %2880 = vmax.xlane.f32.xlu0 %v2879
  %v2881 = vpop.xlane.xlu0 %2880
  %v2882 = vsel %vm1092, %v2654, -inf
  %2883 = vmax.xlane.f32.xlu0 %v2882
  %v2884 = vpop.xlane.xlu0 %2883
  %v2885 = vsel %vm1092, %v2659, -inf
  %2886 = vmax.xlane.f32.xlu0 %v2885
  %v2887 = vpop.xlane.xlu0 %2886
  %v2888 = vsel %vm1092, %v2662, -inf
  %2889 = vmax.xlane.f32.xlu0 %v2888
  %v2890 = vpop.xlane.xlu0 %2889
  %v2891 = vsel %vm1092, %v2667, -inf
  %2892 = vmax.xlane.f32.xlu0 %v2891
  %v2893 = vpop.xlane.xlu0 %2892
  %v2894 = vsel %vm1092, %v2670, -inf
  %2895 = vmax.xlane.f32.xlu0 %v2894
  %v2896 = vpop.xlane.xlu0 %2895
  %v2897 = vsel %vm1092, %v2675, -inf
  %2898 = vmax.xlane.f32.xlu0 %v2897
  %v2899 = vpop.xlane.xlu0 %2898
  %v2900 = vsel %vm1092, %v2678, -inf
  %2901 = vmax.xlane.f32.xlu0 %v2900
  %v2902 = vpop.xlane.xlu0 %2901
  %v2903 = vsel %vm1092, %v2683, -inf
  %2904 = vmax.xlane.f32.xlu0 %v2903
  %v2905 = vpop.xlane.xlu0 %2904
  %v2906 = vsel %vm1092, %v2686, -inf
  %2907 = vmax.xlane.f32.xlu0 %v2906
  %v2908 = vpop.xlane.xlu0 %2907
  %v2909 = vsel %vm1092, %v2691, -inf
  %2910 = vmax.xlane.f32.xlu0 %v2909
  %v2911 = vpop.xlane.xlu0 %2910
  %v2912 = vsel %vm1092, %v2694, -inf
  %2913 = vmax.xlane.f32.xlu0 %v2912
  %v2914 = vpop.xlane.xlu0 %2913
  %v2915 = vsel %vm1092, %v2699, -inf
  %2916 = vmax.xlane.f32.xlu0 %v2915
  %v2917 = vpop.xlane.xlu0 %2916
  %v2918 = vsel %vm1092, %v2702, -inf
  %2919 = vmax.xlane.f32.xlu0 %v2918
  %v2920 = vpop.xlane.xlu0 %2919
  %v2921 = vsel %vm1092, %v2707, -inf
  %2922 = vmax.xlane.f32.xlu0 %v2921
  %v2923 = vpop.xlane.xlu0 %2922
  %v2924 = vsel %vm1092, %v2710, -inf
  %2925 = vmax.xlane.f32.xlu0 %v2924
  %v2926 = vpop.xlane.xlu0 %2925
  %v2927 = vsel %vm1092, %v2715, -inf
  %2928 = vmax.xlane.f32.xlu0 %v2927
  %v2929 = vpop.xlane.xlu0 %2928
  %v2930 = vsel %vm1092, %v2718, -inf
  %2931 = vmax.xlane.f32.xlu0 %v2930
  %v2932 = vpop.xlane.xlu0 %2931
  %v2933 = vsel %vm1092, %v2723, -inf
  %2934 = vmax.xlane.f32.xlu0 %v2933
  %v2935 = vpop.xlane.xlu0 %2934
  %v2936 = vsel %vm1092, %v2726, -inf
  %2937 = vmax.xlane.f32.xlu0 %v2936
  %v2938 = vpop.xlane.xlu0 %2937
  %v2939 = vsel %vm1092, %v2731, -inf
  %2940 = vmax.xlane.f32.xlu0 %v2939
  %v2941 = vpop.xlane.xlu0 %2940
  %v2942 = vsel %vm1092, %v2734, -inf
  %2943 = vmax.xlane.f32.xlu0 %v2942
  %v2944 = vpop.xlane.xlu0 %2943
  %v2945 = vsel %vm1092, %v2739, -inf
  %2946 = vmax.xlane.f32.xlu0 %v2945
  %v2947 = vpop.xlane.xlu0 %2946
  %v2948 = vsel %vm1092, %v2742, -inf
  %2949 = vmax.xlane.f32.xlu0 %v2948
  %v2950 = vpop.xlane.xlu0 %2949
  %v2951 = vsel %vm1092, %v2747, -inf
  %2952 = vmax.xlane.f32.xlu0 %v2951
  %v2953 = vpop.xlane.xlu0 %2952
  %v2954 = vsel %vm1092, %v2750, -inf
  %2955 = vmax.xlane.f32.xlu0 %v2954
  %v2956 = vpop.xlane.xlu0 %2955
  %v2957 = vsel %vm1092, %v2755, -inf
  %2958 = vmax.xlane.f32.xlu0 %v2957
  %v2959 = vpop.xlane.xlu0 %2958
  %v2960 = vsel %vm1092, %v2758, -inf
  %2961 = vmax.xlane.f32.xlu0 %v2960
  %v2962 = vpop.xlane.xlu0 %2961
  %v2963 = vsel %vm1092, %v2763, -inf
  %2964 = vmax.xlane.f32.xlu0 %v2963
  %v2965 = vpop.xlane.xlu0 %2964
  %v2966 = vsel %vm1092, %v2766, -inf
  %2967 = vmax.xlane.f32.xlu0 %v2966
  %v2968 = vpop.xlane.xlu0 %2967
  %v2969 = vsel %vm1092, %v2771, -inf
  %2970 = vmax.xlane.f32.xlu0 %v2969
  %v2971 = vpop.xlane.xlu0 %2970
  %v2972 = vsel %vm1092, %v2774, -inf
  %2973 = vmax.xlane.f32.xlu0 %v2972
  %v2974 = vpop.xlane.xlu0 %2973
  %v2975 = vsel %vm1092, %v2779, -inf
  %2976 = vmax.xlane.f32.xlu0 %v2975
  %v2977 = vpop.xlane.xlu0 %2976
  %v2978 = vsel %vm1092, %v2782, -inf
  %2979 = vmax.xlane.f32.xlu0 %v2978
  %v2980 = vpop.xlane.xlu0 %2979
  %v2981 = vsel %vm1092, %v2787, -inf
  %2982 = vmax.xlane.f32.xlu0 %v2981
  %v2983 = vpop.xlane.xlu0 %2982
  %v2984 = vsel %vm1092, %v2790, -inf
  %2985 = vmax.xlane.f32.xlu0 %v2984
  %v2986 = vpop.xlane.xlu0 %2985
  %v2987 = vsel %vm1092, %v2795, -inf
  %2988 = vmax.xlane.f32.xlu0 %v2987
  %v2989 = vpop.xlane.xlu0 %2988
  %v2990 = vsel %vm1092, %v2798, -inf
  %2991 = vmax.xlane.f32.xlu0 %v2990
  %v2992 = vpop.xlane.xlu0 %2991
  %v2993 = vsub.f32 %v2547, %v2803
  %v2994 = vsub.f32 %v2550, %v2806
  %v2995 = vsub.f32 %v2555, %v2809
  %v2996 = vsub.f32 %v2558, %v2812
  %v2997 = vsub.f32 %v2563, %v2815
  %v2998 = vsub.f32 %v2566, %v2818
  %v2999 = vsub.f32 %v2571, %v2821
  %v3000 = vsub.f32 %v2574, %v2824
  %v3001 = vsub.f32 %v2579, %v2827
  %v3002 = vsub.f32 %v2582, %v2830
  %v3003 = vsub.f32 %v2587, %v2833
  %v3004 = vsub.f32 %v2590, %v2836
  %v3005 = vsub.f32 %v2595, %v2839
  %v3006 = vsub.f32 %v2598, %v2842
  %v3007 = vsub.f32 %v2603, %v2845
  %v3008 = vsub.f32 %v2606, %v2848
  %v3009 = vsub.f32 %v2611, %v2851
  %v3010 = vsub.f32 %v2614, %v2854
  %v3011 = vsub.f32 %v2619, %v2857
  %v3012 = vsub.f32 %v2622, %v2860
  %v3013 = vsub.f32 %v2627, %v2863
  %v3014 = vsub.f32 %v2630, %v2866
  %v3015 = vsub.f32 %v2635, %v2869
  %v3016 = vsub.f32 %v2638, %v2872
  %v3017 = vsub.f32 %v2643, %v2875
  %v3018 = vsub.f32 %v2646, %v2878
  %v3019 = vsub.f32 %v2651, %v2881
  %v3020 = vsub.f32 %v2654, %v2884
  %v3021 = vsub.f32 %v2659, %v2887
  %v3022 = vsub.f32 %v2662, %v2890
  %v3023 = vsub.f32 %v2667, %v2893
  %v3024 = vsub.f32 %v2670, %v2896
  %v3025 = vsub.f32 %v2675, %v2899
  %v3026 = vsub.f32 %v2678, %v2902
  %v3027 = vsub.f32 %v2683, %v2905
  %v3028 = vsub.f32 %v2686, %v2908
  %v3029 = vsub.f32 %v2691, %v2911
  %v3030 = vsub.f32 %v2694, %v2914
  %v3031 = vsub.f32 %v2699, %v2917
  %v3032 = vsub.f32 %v2702, %v2920
  %v3033 = vsub.f32 %v2707, %v2923
  %v3034 = vsub.f32 %v2710, %v2926
  %v3035 = vsub.f32 %v2715, %v2929
  %v3036 = vsub.f32 %v2718, %v2932
  %v3037 = vsub.f32 %v2723, %v2935
  %v3038 = vsub.f32 %v2726, %v2938
  %v3039 = vsub.f32 %v2731, %v2941
  %v3040 = vsub.f32 %v2734, %v2944
  %v3041 = vsub.f32 %v2739, %v2947
  %v3042 = vsub.f32 %v2742, %v2950
  %v3043 = vsub.f32 %v2747, %v2953
  %v3044 = vsub.f32 %v2750, %v2956
  %v3045 = vsub.f32 %v2755, %v2959
  %v3046 = vsub.f32 %v2758, %v2962
  %v3047 = vsub.f32 %v2763, %v2965
  %v3048 = vsub.f32 %v2766, %v2968
  %v3049 = vsub.f32 %v2771, %v2971
  %v3050 = vsub.f32 %v2774, %v2974
  %v3051 = vsub.f32 %v2779, %v2977
  %v3052 = vsub.f32 %v2782, %v2980
  %v3053 = vsub.f32 %v2787, %v2983
  %v3054 = vsub.f32 %v2790, %v2986
  %v3055 = vsub.f32 %v2795, %v2989
  %v3056 = vsub.f32 %v2798, %v2992
  %v3057 = vmul.f32 %v2993, 1.442695
  %v3058 = vpow.pop %v3057
  %v3059 = vmul.f32 %v2994, 1.442695
  %v3060 = vpow.pop %v3059
  %v3061 = vmul.f32 %v2995, 1.442695
  %v3062 = vpow.pop %v3061
  %v3063 = vmul.f32 %v2996, 1.442695
  %v3064 = vpow.pop %v3063
  %v3065 = vmul.f32 %v2997, 1.442695
  %v3066 = vpow.pop %v3065
  %v3067 = vmul.f32 %v2998, 1.442695
  %v3068 = vpow.pop %v3067
  %v3069 = vmul.f32 %v2999, 1.442695
  %v3070 = vpow.pop %v3069
  %v3071 = vmul.f32 %v3000, 1.442695
  %v3072 = vpow.pop %v3071
  %v3073 = vmul.f32 %v3001, 1.442695
  %v3074 = vpow.pop %v3073
  %v3075 = vmul.f32 %v3002, 1.442695
  %v3076 = vpow.pop %v3075
  %v3077 = vmul.f32 %v3003, 1.442695
  %v3078 = vpow.pop %v3077
  %v3079 = vmul.f32 %v3004, 1.442695
  %v3080 = vpow.pop %v3079
  %v3081 = vmul.f32 %v3005, 1.442695
  %v3082 = vpow.pop %v3081
  %v3083 = vmul.f32 %v3006, 1.442695
  %v3084 = vpow.pop %v3083
  %v3085 = vmul.f32 %v3007, 1.442695
  %v3086 = vpow.pop %v3085
  %v3087 = vmul.f32 %v3008, 1.442695
  %v3088 = vpow.pop %v3087
  %v3089 = vmul.f32 %v3009, 1.442695
  %v3090 = vpow.pop %v3089
  %v3091 = vmul.f32 %v3010, 1.442695
  %v3092 = vpow.pop %v3091
  %v3093 = vmul.f32 %v3011, 1.442695
  %v3094 = vpow.pop %v3093
  %v3095 = vmul.f32 %v3012, 1.442695
  %v3096 = vpow.pop %v3095
  %v3097 = vmul.f32 %v3013, 1.442695
  %v3098 = vpow.pop %v3097
  %v3099 = vmul.f32 %v3014, 1.442695
  %v3100 = vpow.pop %v3099
  %v3101 = vmul.f32 %v3015, 1.442695
  %v3102 = vpow.pop %v3101
  %v3103 = vmul.f32 %v3016, 1.442695
  %v3104 = vpow.pop %v3103
  %v3105 = vmul.f32 %v3017, 1.442695
  %v3106 = vpow.pop %v3105
  %v3107 = vmul.f32 %v3018, 1.442695
  %v3108 = vpow.pop %v3107
  %v3109 = vmul.f32 %v3019, 1.442695
  %v3110 = vpow.pop %v3109
  %v3111 = vmul.f32 %v3020, 1.442695
  %v3112 = vpow.pop %v3111
  %v3113 = vmul.f32 %v3021, 1.442695
  %v3114 = vpow.pop %v3113
  %v3115 = vmul.f32 %v3022, 1.442695
  %v3116 = vpow.pop %v3115
  %v3117 = vmul.f32 %v3023, 1.442695
  %v3118 = vpow.pop %v3117
  %v3119 = vmul.f32 %v3024, 1.442695
  %v3120 = vpow.pop %v3119
  %v3121 = vmul.f32 %v3025, 1.442695
  %v3122 = vpow.pop %v3121
  %v3123 = vmul.f32 %v3026, 1.442695
  %v3124 = vpow.pop %v3123
  %v3125 = vmul.f32 %v3027, 1.442695
  %v3126 = vpow.pop %v3125
  %v3127 = vmul.f32 %v3028, 1.442695
  %v3128 = vpow.pop %v3127
  %v3129 = vmul.f32 %v3029, 1.442695
  %v3130 = vpow.pop %v3129
  %v3131 = vmul.f32 %v3030, 1.442695
  %v3132 = vpow.pop %v3131
  %v3133 = vmul.f32 %v3031, 1.442695
  %v3134 = vpow.pop %v3133
  %v3135 = vmul.f32 %v3032, 1.442695
  %v3136 = vpow.pop %v3135
  %v3137 = vmul.f32 %v3033, 1.442695
  %v3138 = vpow.pop %v3137
  %v3139 = vmul.f32 %v3034, 1.442695
  %v3140 = vpow.pop %v3139
  %v3141 = vmul.f32 %v3035, 1.442695
  %v3142 = vpow.pop %v3141
  %v3143 = vmul.f32 %v3036, 1.442695
  %v3144 = vpow.pop %v3143
  %v3145 = vmul.f32 %v3037, 1.442695
  %v3146 = vpow.pop %v3145
  %v3147 = vmul.f32 %v3038, 1.442695
  %v3148 = vpow.pop %v3147
  %v3149 = vmul.f32 %v3039, 1.442695
  %v3150 = vpow.pop %v3149
  %v3151 = vmul.f32 %v3040, 1.442695
  %v3152 = vpow.pop %v3151
  %v3153 = vmul.f32 %v3041, 1.442695
  %v3154 = vpow.pop %v3153
  %v3155 = vmul.f32 %v3042, 1.442695
  %v3156 = vpow.pop %v3155
  %v3157 = vmul.f32 %v3043, 1.442695
  %v3158 = vpow.pop %v3157
  %v3159 = vmul.f32 %v3044, 1.442695
  %v3160 = vpow.pop %v3159
  %v3161 = vmul.f32 %v3045, 1.442695
  %v3162 = vpow.pop %v3161
  %v3163 = vmul.f32 %v3046, 1.442695
  %v3164 = vpow.pop %v3163
  %v3165 = vmul.f32 %v3047, 1.442695
  %v3166 = vpow.pop %v3165
  %v3167 = vmul.f32 %v3048, 1.442695
  %v3168 = vpow.pop %v3167
  %v3169 = vmul.f32 %v3049, 1.442695
  %v3170 = vpow.pop %v3169
  %v3171 = vmul.f32 %v3050, 1.442695
  %v3172 = vpow.pop %v3171
  %v3173 = vmul.f32 %v3051, 1.442695
  %v3174 = vpow.pop %v3173
  %v3175 = vmul.f32 %v3052, 1.442695
  %v3176 = vpow.pop %v3175
  %v3177 = vmul.f32 %v3053, 1.442695
  %v3178 = vpow.pop %v3177
  %v3179 = vmul.f32 %v3054, 1.442695
  %v3180 = vpow.pop %v3179
  %v3181 = vmul.f32 %v3055, 1.442695
  %v3182 = vpow.pop %v3181
  %v3183 = vmul.f32 %v3056, 1.442695
  %v3184 = vpow.pop %v3183
  %v3185 = vsel %vm1092, %v3058, 0.0
  %3186 = vadd.xlane.f32.xlu0 %v3185
  %v3187 = vpop.xlane.xlu0 %3186
  %v3188 = vsel %vm1092, %v3060, 0.0
  %3189 = vadd.xlane.f32.xlu0 %v3188
  %v3190 = vpop.xlane.xlu0 %3189
  %v3191 = vsel %vm1092, %v3062, 0.0
  %3192 = vadd.xlane.f32.xlu0 %v3191
  %v3193 = vpop.xlane.xlu0 %3192
  %v3194 = vsel %vm1092, %v3064, 0.0
  %3195 = vadd.xlane.f32.xlu0 %v3194
  %v3196 = vpop.xlane.xlu0 %3195
  %v3197 = vsel %vm1092, %v3066, 0.0
  %3198 = vadd.xlane.f32.xlu0 %v3197
  %v3199 = vpop.xlane.xlu0 %3198
  %v3200 = vsel %vm1092, %v3068, 0.0
  %3201 = vadd.xlane.f32.xlu0 %v3200
  %v3202 = vpop.xlane.xlu0 %3201
  %v3203 = vsel %vm1092, %v3070, 0.0
  %3204 = vadd.xlane.f32.xlu0 %v3203
  %v3205 = vpop.xlane.xlu0 %3204
  %v3206 = vsel %vm1092, %v3072, 0.0
  %3207 = vadd.xlane.f32.xlu0 %v3206
  %v3208 = vpop.xlane.xlu0 %3207
  %v3209 = vsel %vm1092, %v3074, 0.0
  %3210 = vadd.xlane.f32.xlu0 %v3209
  %v3211 = vpop.xlane.xlu0 %3210
  %v3212 = vsel %vm1092, %v3076, 0.0
  %3213 = vadd.xlane.f32.xlu0 %v3212
  %v3214 = vpop.xlane.xlu0 %3213
  %v3215 = vsel %vm1092, %v3078, 0.0
  %3216 = vadd.xlane.f32.xlu0 %v3215
  %v3217 = vpop.xlane.xlu0 %3216
  %v3218 = vsel %vm1092, %v3080, 0.0
  %3219 = vadd.xlane.f32.xlu0 %v3218
  %v3220 = vpop.xlane.xlu0 %3219
  %v3221 = vsel %vm1092, %v3082, 0.0
  %3222 = vadd.xlane.f32.xlu0 %v3221
  %v3223 = vpop.xlane.xlu0 %3222
  %v3224 = vsel %vm1092, %v3084, 0.0
  %3225 = vadd.xlane.f32.xlu0 %v3224
  %v3226 = vpop.xlane.xlu0 %3225
  %v3227 = vsel %vm1092, %v3086, 0.0
  %3228 = vadd.xlane.f32.xlu0 %v3227
  %v3229 = vpop.xlane.xlu0 %3228
  %v3230 = vsel %vm1092, %v3088, 0.0
  %3231 = vadd.xlane.f32.xlu0 %v3230
  %v3232 = vpop.xlane.xlu0 %3231
  %v3233 = vsel %vm1092, %v3090, 0.0
  %3234 = vadd.xlane.f32.xlu0 %v3233
  %v3235 = vpop.xlane.xlu0 %3234
  %v3236 = vsel %vm1092, %v3092, 0.0
  %3237 = vadd.xlane.f32.xlu0 %v3236
  %v3238 = vpop.xlane.xlu0 %3237
  %v3239 = vsel %vm1092, %v3094, 0.0
  %3240 = vadd.xlane.f32.xlu0 %v3239
  %v3241 = vpop.xlane.xlu0 %3240
  %v3242 = vsel %vm1092, %v3096, 0.0
  %3243 = vadd.xlane.f32.xlu0 %v3242
  %v3244 = vpop.xlane.xlu0 %3243
  %v3245 = vsel %vm1092, %v3098, 0.0
  %3246 = vadd.xlane.f32.xlu0 %v3245
  %v3247 = vpop.xlane.xlu0 %3246
  %v3248 = vsel %vm1092, %v3100, 0.0
  %3249 = vadd.xlane.f32.xlu0 %v3248
  %v3250 = vpop.xlane.xlu0 %3249
  %v3251 = vsel %vm1092, %v3102, 0.0
  %3252 = vadd.xlane.f32.xlu0 %v3251
  %v3253 = vpop.xlane.xlu0 %3252
  %v3254 = vsel %vm1092, %v3104, 0.0
  %3255 = vadd.xlane.f32.xlu0 %v3254
  %v3256 = vpop.xlane.xlu0 %3255
  %v3257 = vsel %vm1092, %v3106, 0.0
  %3258 = vadd.xlane.f32.xlu0 %v3257
  %v3259 = vpop.xlane.xlu0 %3258
  %v3260 = vsel %vm1092, %v3108, 0.0
  %3261 = vadd.xlane.f32.xlu0 %v3260
  %v3262 = vpop.xlane.xlu0 %3261
  %v3263 = vsel %vm1092, %v3110, 0.0
  %3264 = vadd.xlane.f32.xlu0 %v3263
  %v3265 = vpop.xlane.xlu0 %3264
  %v3266 = vsel %vm1092, %v3112, 0.0
  %3267 = vadd.xlane.f32.xlu0 %v3266
  %v3268 = vpop.xlane.xlu0 %3267
  %v3269 = vsel %vm1092, %v3114, 0.0
  %3270 = vadd.xlane.f32.xlu0 %v3269
  %v3271 = vpop.xlane.xlu0 %3270
  %v3272 = vsel %vm1092, %v3116, 0.0
  %3273 = vadd.xlane.f32.xlu0 %v3272
  %v3274 = vpop.xlane.xlu0 %3273
  %v3275 = vsel %vm1092, %v3118, 0.0
  %3276 = vadd.xlane.f32.xlu0 %v3275
  %v3277 = vpop.xlane.xlu0 %3276
  %v3278 = vsel %vm1092, %v3120, 0.0
  %3279 = vadd.xlane.f32.xlu0 %v3278
  %v3280 = vpop.xlane.xlu0 %3279
  %v3281 = vsel %vm1092, %v3122, 0.0
  %3282 = vadd.xlane.f32.xlu0 %v3281
  %v3283 = vpop.xlane.xlu0 %3282
  %v3284 = vsel %vm1092, %v3124, 0.0
  %3285 = vadd.xlane.f32.xlu0 %v3284
  %v3286 = vpop.xlane.xlu0 %3285
  %v3287 = vsel %vm1092, %v3126, 0.0
  %3288 = vadd.xlane.f32.xlu0 %v3287
  %v3289 = vpop.xlane.xlu0 %3288
  %v3290 = vsel %vm1092, %v3128, 0.0
  %3291 = vadd.xlane.f32.xlu0 %v3290
  %v3292 = vpop.xlane.xlu0 %3291
  %v3293 = vsel %vm1092, %v3130, 0.0
  %3294 = vadd.xlane.f32.xlu0 %v3293
  %v3295 = vpop.xlane.xlu0 %3294
  %v3296 = vsel %vm1092, %v3132, 0.0
  %3297 = vadd.xlane.f32.xlu0 %v3296
  %v3298 = vpop.xlane.xlu0 %3297
  %v3299 = vsel %vm1092, %v3134, 0.0
  %3300 = vadd.xlane.f32.xlu0 %v3299
  %v3301 = vpop.xlane.xlu0 %3300
  %v3302 = vsel %vm1092, %v3136, 0.0
  %3303 = vadd.xlane.f32.xlu0 %v3302
  %v3304 = vpop.xlane.xlu0 %3303
  %v3305 = vsel %vm1092, %v3138, 0.0
  %3306 = vadd.xlane.f32.xlu0 %v3305
  %v3307 = vpop.xlane.xlu0 %3306
  %v3308 = vsel %vm1092, %v3140, 0.0
  %3309 = vadd.xlane.f32.xlu0 %v3308
  %v3310 = vpop.xlane.xlu0 %3309
  %v3311 = vsel %vm1092, %v3142, 0.0
  %3312 = vadd.xlane.f32.xlu0 %v3311
  %v3313 = vpop.xlane.xlu0 %3312
  %v3314 = vsel %vm1092, %v3144, 0.0
  %3315 = vadd.xlane.f32.xlu0 %v3314
  %v3316 = vpop.xlane.xlu0 %3315
  %v3317 = vsel %vm1092, %v3146, 0.0
  %3318 = vadd.xlane.f32.xlu0 %v3317
  %v3319 = vpop.xlane.xlu0 %3318
  %v3320 = vsel %vm1092, %v3148, 0.0
  %3321 = vadd.xlane.f32.xlu0 %v3320
  %v3322 = vpop.xlane.xlu0 %3321
  %v3323 = vsel %vm1092, %v3150, 0.0
  %3324 = vadd.xlane.f32.xlu0 %v3323
  %v3325 = vpop.xlane.xlu0 %3324
  %v3326 = vsel %vm1092, %v3152, 0.0
  %3327 = vadd.xlane.f32.xlu0 %v3326
  %v3328 = vpop.xlane.xlu0 %3327
  %v3329 = vsel %vm1092, %v3154, 0.0
  %3330 = vadd.xlane.f32.xlu0 %v3329
  %v3331 = vpop.xlane.xlu0 %3330
  %v3332 = vsel %vm1092, %v3156, 0.0
  %3333 = vadd.xlane.f32.xlu0 %v3332
  %v3334 = vpop.xlane.xlu0 %3333
  %v3335 = vsel %vm1092, %v3158, 0.0
  %3336 = vadd.xlane.f32.xlu0 %v3335
  %v3337 = vpop.xlane.xlu0 %3336
  %v3338 = vsel %vm1092, %v3160, 0.0
  %3339 = vadd.xlane.f32.xlu0 %v3338
  %v3340 = vpop.xlane.xlu0 %3339
  %v3341 = vsel %vm1092, %v3162, 0.0
  %3342 = vadd.xlane.f32.xlu0 %v3341
  %v3343 = vpop.xlane.xlu0 %3342
  %v3344 = vsel %vm1092, %v3164, 0.0
  %3345 = vadd.xlane.f32.xlu0 %v3344
  %v3346 = vpop.xlane.xlu0 %3345
  %v3347 = vsel %vm1092, %v3166, 0.0
  %3348 = vadd.xlane.f32.xlu0 %v3347
  %v3349 = vpop.xlane.xlu0 %3348
  %v3350 = vsel %vm1092, %v3168, 0.0
  %3351 = vadd.xlane.f32.xlu0 %v3350
  %v3352 = vpop.xlane.xlu0 %3351
  %v3353 = vsel %vm1092, %v3170, 0.0
  %3354 = vadd.xlane.f32.xlu0 %v3353
  %v3355 = vpop.xlane.xlu0 %3354
  %v3356 = vsel %vm1092, %v3172, 0.0
  %3357 = vadd.xlane.f32.xlu0 %v3356
  %v3358 = vpop.xlane.xlu0 %3357
  %v3359 = vsel %vm1092, %v3174, 0.0
  %3360 = vadd.xlane.f32.xlu0 %v3359
  %v3361 = vpop.xlane.xlu0 %3360
  %v3362 = vsel %vm1092, %v3176, 0.0
  %3363 = vadd.xlane.f32.xlu0 %v3362
  %v3364 = vpop.xlane.xlu0 %3363
  %v3365 = vsel %vm1092, %v3178, 0.0
  %3366 = vadd.xlane.f32.xlu0 %v3365
  %v3367 = vpop.xlane.xlu0 %3366
  %v3368 = vsel %vm1092, %v3180, 0.0
  %3369 = vadd.xlane.f32.xlu0 %v3368
  %v3370 = vpop.xlane.xlu0 %3369
  %v3371 = vsel %vm1092, %v3182, 0.0
  %3372 = vadd.xlane.f32.xlu0 %v3371
  %v3373 = vpop.xlane.xlu0 %3372
  %v3374 = vsel %vm1092, %v3184, 0.0
  %3375 = vadd.xlane.f32.xlu0 %v3374
  %v3376 = vpop.xlane.xlu0 %3375
  %v3377 = vrcp.pop %v3187
  %v3378 = vrcp.pop %v3190
  %v3379 = vrcp.pop %v3193
  %v3380 = vrcp.pop %v3196
  %v3381 = vrcp.pop %v3199
  %v3382 = vrcp.pop %v3202
  %v3383 = vrcp.pop %v3205
  %v3384 = vrcp.pop %v3208
  %v3385 = vrcp.pop %v3211
  %v3386 = vrcp.pop %v3214
  %v3387 = vrcp.pop %v3217
  %v3388 = vrcp.pop %v3220
  %v3389 = vrcp.pop %v3223
  %v3390 = vrcp.pop %v3226
  %v3391 = vrcp.pop %v3229
  %v3392 = vrcp.pop %v3232
  %v3393 = vrcp.pop %v3235
  %v3394 = vrcp.pop %v3238
  %v3395 = vrcp.pop %v3241
  %v3396 = vrcp.pop %v3244
  %v3397 = vrcp.pop %v3247
  %v3398 = vrcp.pop %v3250
  %v3399 = vrcp.pop %v3253
  %v3400 = vrcp.pop %v3256
  %v3401 = vrcp.pop %v3259
  %v3402 = vrcp.pop %v3262
  %v3403 = vrcp.pop %v3265
  %v3404 = vrcp.pop %v3268
  %v3405 = vrcp.pop %v3271
  %v3406 = vrcp.pop %v3274
  %v3407 = vrcp.pop %v3277
  %v3408 = vrcp.pop %v3280
  %v3409 = vrcp.pop %v3283
  %v3410 = vrcp.pop %v3286
  %v3411 = vrcp.pop %v3289
  %v3412 = vrcp.pop %v3292
  %v3413 = vrcp.pop %v3295
  %v3414 = vrcp.pop %v3298
  %v3415 = vrcp.pop %v3301
  %v3416 = vrcp.pop %v3304
  %v3417 = vrcp.pop %v3307
  %v3418 = vrcp.pop %v3310
  %v3419 = vrcp.pop %v3313
  %v3420 = vrcp.pop %v3316
  %v3421 = vrcp.pop %v3319
  %v3422 = vrcp.pop %v3322
  %v3423 = vrcp.pop %v3325
  %v3424 = vrcp.pop %v3328
  %v3425 = vrcp.pop %v3331
  %v3426 = vrcp.pop %v3334
  %v3427 = vrcp.pop %v3337
  %v3428 = vrcp.pop %v3340
  %v3429 = vrcp.pop %v3343
  %v3430 = vrcp.pop %v3346
  %v3431 = vrcp.pop %v3349
  %v3432 = vrcp.pop %v3352
  %v3433 = vrcp.pop %v3355
  %v3434 = vrcp.pop %v3358
  %v3435 = vrcp.pop %v3361
  %v3436 = vrcp.pop %v3364
  %v3437 = vrcp.pop %v3367
  %v3438 = vrcp.pop %v3370
  %v3439 = vrcp.pop %v3373
  %v3440 = vrcp.pop %v3376
  %v3441 = vmul.f32 %v3058, %v3377
  %v3442 = vmul.f32 %v3060, %v3378
  %v3443 = vmul.f32 %v3062, %v3379
  %v3444 = vmul.f32 %v3064, %v3380
  %v3445 = vmul.f32 %v3066, %v3381
  %v3446 = vmul.f32 %v3068, %v3382
  %v3447 = vmul.f32 %v3070, %v3383
  %v3448 = vmul.f32 %v3072, %v3384
  %v3449 = vmul.f32 %v3074, %v3385
  %v3450 = vmul.f32 %v3076, %v3386
  %v3451 = vmul.f32 %v3078, %v3387
  %v3452 = vmul.f32 %v3080, %v3388
  %v3453 = vmul.f32 %v3082, %v3389
  %v3454 = vmul.f32 %v3084, %v3390
  %v3455 = vmul.f32 %v3086, %v3391
  %v3456 = vmul.f32 %v3088, %v3392
  %v3457 = vmul.f32 %v3090, %v3393
  %v3458 = vmul.f32 %v3092, %v3394
  %v3459 = vmul.f32 %v3094, %v3395
  %v3460 = vmul.f32 %v3096, %v3396
  %v3461 = vmul.f32 %v3098, %v3397
  %v3462 = vmul.f32 %v3100, %v3398
  %v3463 = vmul.f32 %v3102, %v3399
  %v3464 = vmul.f32 %v3104, %v3400
  %v3465 = vmul.f32 %v3106, %v3401
  %v3466 = vmul.f32 %v3108, %v3402
  %v3467 = vmul.f32 %v3110, %v3403
  %v3468 = vmul.f32 %v3112, %v3404
  %v3469 = vmul.f32 %v3114, %v3405
  %v3470 = vmul.f32 %v3116, %v3406
  %v3471 = vmul.f32 %v3118, %v3407
  %v3472 = vmul.f32 %v3120, %v3408
  %v3473 = vmul.f32 %v3122, %v3409
  %v3474 = vmul.f32 %v3124, %v3410
  %v3475 = vmul.f32 %v3126, %v3411
  %v3476 = vmul.f32 %v3128, %v3412
  %v3477 = vmul.f32 %v3130, %v3413
  %v3478 = vmul.f32 %v3132, %v3414
  %v3479 = vmul.f32 %v3134, %v3415
  %v3480 = vmul.f32 %v3136, %v3416
  %v3481 = vmul.f32 %v3138, %v3417
  %v3482 = vmul.f32 %v3140, %v3418
  %v3483 = vmul.f32 %v3142, %v3419
  %v3484 = vmul.f32 %v3144, %v3420
  %v3485 = vmul.f32 %v3146, %v3421
  %v3486 = vmul.f32 %v3148, %v3422
  %v3487 = vmul.f32 %v3150, %v3423
  %v3488 = vmul.f32 %v3152, %v3424
  %v3489 = vmul.f32 %v3154, %v3425
  %v3490 = vmul.f32 %v3156, %v3426
  %v3491 = vmul.f32 %v3158, %v3427
  %v3492 = vmul.f32 %v3160, %v3428
  %v3493 = vmul.f32 %v3162, %v3429
  %v3494 = vmul.f32 %v3164, %v3430
  %v3495 = vmul.f32 %v3166, %v3431
  %v3496 = vmul.f32 %v3168, %v3432
  %v3497 = vmul.f32 %v3170, %v3433
  %v3498 = vmul.f32 %v3172, %v3434
  %v3499 = vmul.f32 %v3174, %v3435
  %v3500 = vmul.f32 %v3176, %v3436
  %v3501 = vmul.f32 %v3178, %v3437
  %v3502 = vmul.f32 %v3180, %v3438
  %v3503 = vmul.f32 %v3182, %v3439
  %v3504 = vmul.f32 %v3184, %v3440
  %3505 = vst.msk [vmem:[%s5] sm:$0xff] %vm1092, %v3441
  %3506 = vst.msk [vmem:[%s5 + $0x8] sm:$0xff] %vm1092, %v3442
  %3507 = vst.msk [vmem:[%s5 + $0x10] sm:$0xff] %vm1092, %v3443
  %3508 = vst.msk [vmem:[%s5 + $0x18] sm:$0xff] %vm1092, %v3444
  %3509 = vst.msk [vmem:[%s5 + $0x20] sm:$0xff] %vm1092, %v3445
  %3510 = vst.msk [vmem:[%s5 + $0x28] sm:$0xff] %vm1092, %v3446
  %3511 = vst.msk [vmem:[%s5 + $0x30] sm:$0xff] %vm1092, %v3447
  %3512 = vst.msk [vmem:[%s5 + $0x38] sm:$0xff] %vm1092, %v3448
  %3513 = vst.msk [vmem:[%s5 + $0x40] sm:$0xff] %vm1092, %v3449
  %3514 = vst.msk [vmem:[%s5 + $0x48] sm:$0xff] %vm1092, %v3450
  %3515 = vst.msk [vmem:[%s5 + $0x50] sm:$0xff] %vm1092, %v3451
  %3516 = vst.msk [vmem:[%s5 + $0x58] sm:$0xff] %vm1092, %v3452
  %3517 = vst.msk [vmem:[%s5 + $0x60] sm:$0xff] %vm1092, %v3453
  %3518 = vst.msk [vmem:[%s5 + $0x68] sm:$0xff] %vm1092, %v3454
  %3519 = vst.msk [vmem:[%s5 + $0x70] sm:$0xff] %vm1092, %v3455
  %3520 = vst.msk [vmem:[%s5 + $0x78] sm:$0xff] %vm1092, %v3456
  %3521 = vst.msk [vmem:[%s5 + $0x80] sm:$0xff] %vm1092, %v3457
  %3522 = vst.msk [vmem:[%s5 + $0x88] sm:$0xff] %vm1092, %v3458
  %3523 = vst.msk [vmem:[%s5 + $0x90] sm:$0xff] %vm1092, %v3459
  %3524 = vst.msk [vmem:[%s5 + $0x98] sm:$0xff] %vm1092, %v3460
  %3525 = vst.msk [vmem:[%s5 + $0xa0] sm:$0xff] %vm1092, %v3461
  %3526 = vst.msk [vmem:[%s5 + $0xa8] sm:$0xff] %vm1092, %v3462
  %3527 = vst.msk [vmem:[%s5 + $0xb0] sm:$0xff] %vm1092, %v3463
  %3528 = vst.msk [vmem:[%s5 + $0xb8] sm:$0xff] %vm1092, %v3464
  %3529 = vst.msk [vmem:[%s5 + $0xc0] sm:$0xff] %vm1092, %v3465
  %3530 = vst.msk [vmem:[%s5 + $0xc8] sm:$0xff] %vm1092, %v3466
  %3531 = vst.msk [vmem:[%s5 + $0xd0] sm:$0xff] %vm1092, %v3467
  %3532 = vst.msk [vmem:[%s5 + $0xd8] sm:$0xff] %vm1092, %v3468
  %3533 = vst.msk [vmem:[%s5 + $0xe0] sm:$0xff] %vm1092, %v3469
  %3534 = vst.msk [vmem:[%s5 + $0xe8] sm:$0xff] %vm1092, %v3470
  %3535 = vst.msk [vmem:[%s5 + $0xf0] sm:$0xff] %vm1092, %v3471
  %3536 = vst.msk [vmem:[%s5 + $0xf8] sm:$0xff] %vm1092, %v3472
  %3537 = vst.msk [vmem:[%s5 + $0x100] sm:$0xff] %vm1092, %v3473
  %3538 = vst.msk [vmem:[%s5 + $0x108] sm:$0xff] %vm1092, %v3474
  %3539 = vst.msk [vmem:[%s5 + $0x110] sm:$0xff] %vm1092, %v3475
  %3540 = vst.msk [vmem:[%s5 + $0x118] sm:$0xff] %vm1092, %v3476
  %3541 = vst.msk [vmem:[%s5 + $0x120] sm:$0xff] %vm1092, %v3477
  %3542 = vst.msk [vmem:[%s5 + $0x128] sm:$0xff] %vm1092, %v3478
  %3543 = vst.msk [vmem:[%s5 + $0x130] sm:$0xff] %vm1092, %v3479
  %3544 = vst.msk [vmem:[%s5 + $0x138] sm:$0xff] %vm1092, %v3480
  %3545 = vst.msk [vmem:[%s5 + $0x140] sm:$0xff] %vm1092, %v3481
  %3546 = vst.msk [vmem:[%s5 + $0x148] sm:$0xff] %vm1092, %v3482
  %3547 = vst.msk [vmem:[%s5 + $0x150] sm:$0xff] %vm1092, %v3483
  %3548 = vst.msk [vmem:[%s5 + $0x158] sm:$0xff] %vm1092, %v3484
  %3549 = vst.msk [vmem:[%s5 + $0x160] sm:$0xff] %vm1092, %v3485
  %3550 = vst.msk [vmem:[%s5 + $0x168] sm:$0xff] %vm1092, %v3486
  %3551 = vst.msk [vmem:[%s5 + $0x170] sm:$0xff] %vm1092, %v3487
  %3552 = vst.msk [vmem:[%s5 + $0x178] sm:$0xff] %vm1092, %v3488
  %3553 = vst.msk [vmem:[%s5 + $0x180] sm:$0xff] %vm1092, %v3489
  %3554 = vst.msk [vmem:[%s5 + $0x188] sm:$0xff] %vm1092, %v3490
  %3555 = vst.msk [vmem:[%s5 + $0x190] sm:$0xff] %vm1092, %v3491
  %3556 = vst.msk [vmem:[%s5 + $0x198] sm:$0xff] %vm1092, %v3492
  %3557 = vst.msk [vmem:[%s5 + $0x1a0] sm:$0xff] %vm1092, %v3493
  %3558 = vst.msk [vmem:[%s5 + $0x1a8] sm:$0xff] %vm1092, %v3494
  %3559 = vst.msk [vmem:[%s5 + $0x1b0] sm:$0xff] %vm1092, %v3495
  %3560 = vst.msk [vmem:[%s5 + $0x1b8] sm:$0xff] %vm1092, %v3496
  %3561 = vst.msk [vmem:[%s5 + $0x1c0] sm:$0xff] %vm1092, %v3497
  %3562 = vst.msk [vmem:[%s5 + $0x1c8] sm:$0xff] %vm1092, %v3498
  %3563 = vst.msk [vmem:[%s5 + $0x1d0] sm:$0xff] %vm1092, %v3499
  %3564 = vst.msk [vmem:[%s5 + $0x1d8] sm:$0xff] %vm1092, %v3500
  %3565 = vst.msk [vmem:[%s5 + $0x1e0] sm:$0xff] %vm1092, %v3501
  %3566 = vst.msk [vmem:[%s5 + $0x1e8] sm:$0xff] %vm1092, %v3502
  %3567 = vst.msk [vmem:[%s5 + $0x1f0] sm:$0xff] %vm1092, %v3503
  %3568 = vst.msk [vmem:[%s5 + $0x1f8] sm:$0xff] %vm1092, %v3504
  // Predicated region
  $region22: #{tpu_custom_call.1} parent=0 // pred_check
    _
  $region23: #{tpu_custom_call.1} parent=0 // pred_check_branch
    %3570 = sbr.rel (0) target = $region25
  $region24: #{tpu_custom_call.1} parent=0 // pred_region
    _
  $region25: #{tpu_custom_call.1} parent=0 // pred_fallthru
    _
  // Predicated region
  $region26: #{tpu_custom_call.1} parent=0 // pred_check
    _
  $region27: #{tpu_custom_call.1} parent=0 // pred_check_branch
    %3572 = sbr.rel (0) target = $region29
  $region28: #{tpu_custom_call.1} parent=0 // pred_region
    _
  $region29: #{tpu_custom_call.1} parent=0 // pred_fallthru
    _

</llo_original>
